<compile_context>
chip_gen: v7x
topology: tpu7x:2x2x1
jax: 0.10.0
libtpu: 0.0.40
codegen_flags: <defaults>
</compile_context>

<pallas_src>
import functools

import jax
import jax.numpy as jnp
from jax.experimental import pallas as pl
from jax.experimental.pallas import tpu as pltpu

_EPS = 1e-5   # torch.nn.GroupNorm default eps
_PAD = 2      # staging-buffer offset: enough padding for the k=5 (pad=2) convs


def _down_resnet_kernel(
    x_ref, temb_ref, g_ref, gt_ref,
    wt_ref, bt_ref,
    wci_ref, bci_ref, gci_ref, bgci_ref,
    wco_ref, bco_ref, gco_ref, bgco_ref,
    wd_ref, bd_ref,
    out_states_ref, out_down_ref,
    hpa_ref, hpb_ref, hd_ref,
    *, num_resnets, inv_n_per_group,
):
    h = x_ref[0]                          # [L, C] f32
    L, C = h.shape
    Lo = out_down_ref.shape[1]
    G = g_ref[...]                        # [C, NG] f32 (channel -> group one-hot)
    GT = gt_ref[...]                      # [NG, C] f32

    # Zero ONLY the pad rows the convs read (leading _PAD rows and the two trailing
    # rows touched by the k=5 window), every grid step.  All other in-kernel writes
    # stay confined to rows [_PAD, _PAD + L), so these rows keep supplying the conv
    # zero-padding.  (Cannot be gated on program_id == 0: with a "parallel" batch axis
    # each TensorCore has its own scratch and only one core ever sees program_id 0.)
    zpad_bf = jnp.zeros((_PAD, C), jnp.bfloat16)
    for buf in (hpa_ref, hpb_ref):
        buf[pl.ds(0, _PAD), :] = zpad_bf
        buf[pl.ds(_PAD + L, _PAD), :] = zpad_bf
    hd_ref[pl.ds(0, _PAD), :] = jnp.zeros((_PAD, C), jnp.float32)   # only row 1 is read

    def mish(v):
        # x * tanh(softplus(x)) == x * (t^2 + 2t) / (t^2 + 2t + 2),  t = exp(x)
        # (clamp matches torch's softplus threshold=20; ratio ~= 1 there anyway).
        t = jnp.exp(jnp.minimum(v, 20.0))
        num = t * (t + 2.0)
        return v * num * pl.reciprocal(num + 2.0, approx=True)

    def stage(buf, v):
        # Stage an activation once, in bf16 (MXU input dtype): halves staging traffic
        # and removes the wide im2col cast.
        buf[pl.ds(_PAD, L), :] = v.astype(jnp.bfloat16)

    def conv5(buf, w_bf16, bias):
        # Conv1d(k=5, pad=2): ONE bf16 MXU matmul with f32 accumulation over an
        # [L, 5*C] im2col operand built from 5 shifted contiguous window reads of the
        # padded bf16 staging buffer.
        cols = jnp.concatenate([buf[pl.ds(k, L), :] for k in range(5)], axis=-1)
        return jnp.dot(cols, w_bf16, preferred_element_type=jnp.float32) + bias

    def group_norm(y, gamma, beta):
        # Batched stats: [sum; sumsq] -> one [2,C]x[C,NG] dot + one [2,NG]x[NG,C] dot.
        # Kept in f32; one-pass variance clamped at 0 before rsqrt.
        s = jnp.concatenate(
            [jnp.sum(y, axis=0, keepdims=True),
             jnp.sum(y * y, axis=0, keepdims=True)], axis=0)               # [2, C]
        gstats = jnp.dot(s, G, preferred_element_type=jnp.float32) * inv_n_per_group
        cstats = jnp.dot(gstats, GT, preferred_element_type=jnp.float32)   # [2, C]
        mean = cstats[0:1, :]
        var = jnp.maximum(cstats[1:2, :] - mean * mean, 0.0)
        scale = jax.lax.rsqrt(var + _EPS) * gamma
        return y * scale + (beta - mean * scale)

    # time_emb_act (Mish) + all per-resnet time projections fused into one matmul.
    t_act = mish(temb_ref[0])                                              # [1, TEMB]
    te_all = jnp.dot(t_act.astype(jnp.bfloat16), wt_ref[...],
                     preferred_element_type=jnp.float32)                   # [1, R*C]

    # ResidualTemporalBlock1D x num_resnets (identity residual since in_ch == out_ch).
    # Activations stay resident in the padded ping-pong buffers: h in hpa, y in hpb.
    stage(hpa_ref, h)
    for r in range(num_resnets):
        te = te_all[:, r * C:(r + 1) * C] + bt_ref[r]                      # [1, C]
        y = mish(group_norm(conv5(hpa_ref, wci_ref[r], bci_ref[r]),
                            gci_ref[r], bgci_ref[r])) + te
        stage(hpb_ref, y)
        z = conv5(hpb_ref, wco_ref[r], bco_ref[r])
        h = mish(group_norm(z, gco_ref[r], bgco_ref[r])) + h
        if r + 1 < num_resnets:
            stage(hpa_ref, h)                      # next resnet's conv_in input

    out_states_ref[0] = h.astype(out_states_ref.dtype)    # output_states[0]

    # Downsample1D: Conv1d(k=3, stride=2, pad=1), computed only at the Lo output rows.
    # h sits at offset _PAD=2 in the f32 staging buffer, so with pad=1 the three taps
    # for output row j are hd[2j+1], hd[2j+2], hd[2j+3]  ->  stride-2 sublane reads
    # (kept on a 32-bit buffer; the contiguous conv reads above are bf16).
    hd_ref[pl.ds(_PAD, L), :] = h
    cols = jnp.concatenate(
        [hd_ref[pl.ds(1 + k, Lo, stride=2), :] for k in range(3)], axis=-1)  # [Lo, 3C]
    down = jnp.dot(cols.astype(jnp.bfloat16), wd_ref[...],
                   preferred_element_type=jnp.float32) + bd_ref[...]
    out_down_ref[0] = down.astype(out_down_ref.dtype)


def down_resnet_block_1d(x_ncl, temb, params, *, num_groups=8):
    """x_ncl: [B, C, L] (PyTorch NCL), temb: [B, TEMB]. Returns (down_ncl, (states_ncl,))."""
    B, C, L = x_ncl.shape
    TEMB = temb.shape[1]
    R = params["wt"].shape[0]
    NG = num_groups
    assert C % NG == 0, "channels must be divisible by num_groups"
    assert L % 2 == 0, "length must be even for the stride-2 downsample"
    Lo = L // 2                                   # Conv1d(k=3, stride=2, pad=1)
    LP = ((L + 2 * _PAD + 7) // 8) * 8            # sublane-aligned padded staging buffer

    x = jnp.transpose(x_ncl, (0, 2, 1)).astype(jnp.float32)          # [B, L, C]
    temb3 = temb.astype(jnp.float32)[:, None, :]                     # [B, 1, TEMB]

    # channel -> group one-hot and its transpose (GroupNorm stats via f32 matmuls)
    G = (jnp.arange(C)[:, None] // (C // NG) == jnp.arange(NG)[None, :]).astype(jnp.float32)
    GT = jnp.transpose(G)

    # bf16 MXU operand packing (accumulation stays f32 in-kernel):
    #   conv weights  [R, K, Cin, Cout] -> [R, K*Cin, Cout]  (im2col layout)
    #   time-emb proj [R, TEMB, C]      -> [TEMB, R*C]       (all resnets in one dot)
    wci = params["wci"].reshape(R, 5 * C, C).astype(jnp.bfloat16)
    wco = params["wco"].reshape(R, 5 * C, C).astype(jnp.bfloat16)
    wd = params["wd"].reshape(3 * C, C).astype(jnp.bfloat16)
    wt = jnp.transpose(params["wt"], (1, 0, 2)).reshape(TEMB, R * C).astype(jnp.bfloat16)

    kernel = functools.partial(
        _down_resnet_kernel,
        num_resnets=R,
        inv_n_per_group=1.0 / float(L * (C // NG)),
    )

    # Constant operands: whole-array resident in VMEM, single-buffered (no per-step
    # pipeline double-buffering).  Only x / temb / outputs are pipelined over the grid.
    const_spec = pl.BlockSpec(memory_space=pltpu.MemorySpace.VMEM)
    const_arrays = (G, GT, wt, params["bt"], wci, params["bci"], params["gci"],
                    params["bgci"], wco, params["bco"], params["gco"], params["bgco"],
                    wd, params["bd"])

    # Explicit VMEM budget: double-buffered pipelined blocks + resident constants +
    # scratch, with 2x headroom, clamped to v7x's 64 MiB physical VMEM.
    act_bytes = 2 * (L * C * 4 + TEMB * 4 + L * C * 4 + Lo * C * 4)
    const_bytes = sum(int(a.size) * a.dtype.itemsize for a in const_arrays)
    scratch_bytes = LP * C * (2 + 2 + 4)
    vmem_limit = int(min(64 * 1024 * 1024,
                         max(32 * 1024 * 1024,
                             2 * (act_bytes + const_bytes + scratch_bytes))))

    # NOTE: at real diffusers sizes (large L / C), tile L with a 2-row halo on an extra
    # grid axis (two-pass GroupNorm), and for C < 128 pack batch elements along lanes.
    states, down = pl.pallas_call(
        kernel,
        out_shape=(
            jax.ShapeDtypeStruct((B, L, C), jnp.float32),
            jax.ShapeDtypeStruct((B, Lo, C), jnp.float32),
        ),
        grid_spec=pltpu.PrefetchScalarGridSpec(
            num_scalar_prefetch=0,
            grid=(B,),
            in_specs=[
                pl.BlockSpec((1, L, C), lambda b: (b, 0, 0)),          # x        (pipelined)
                pl.BlockSpec((1, 1, TEMB), lambda b: (b, 0, 0)),       # temb     (pipelined)
                const_spec,                                            # G
                const_spec,                                            # G^T
                const_spec,                                            # time-emb weight (packed, bf16)
                const_spec,                                            # time-emb bias
                const_spec,                                            # conv_in weight (packed, bf16)
                const_spec,                                            # conv_in bias
                const_spec,                                            # conv_in GN gamma
                const_spec,                                            # conv_in GN beta
                const_spec,                                            # conv_out weight (packed, bf16)
                const_spec,                                            # conv_out bias
                const_spec,                                            # conv_out GN gamma
                const_spec,                                            # conv_out GN beta
                const_spec,                                            # downsample weight (packed, bf16)
                const_spec,                                            # downsample bias
            ],
            out_specs=[
                pl.BlockSpec((1, L, C), lambda b: (b, 0, 0)),
                pl.BlockSpec((1, Lo, C), lambda b: (b, 0, 0)),
            ],
            scratch_shapes=[
                pltpu.VMEM((LP, C), jnp.bfloat16),   # hpa: padded h staging (conv_in reads)
                pltpu.VMEM((LP, C), jnp.bfloat16),   # hpb: padded y staging (conv_out reads)
                pltpu.VMEM((LP, C), jnp.float32),    # hd : f32 staging for strided downsample reads
            ],
        ),
        # Parallel batch axis -> shards across v7x's two TensorCores; no-op on v5e/v6e
        # (there, folding B into one grid step would amortize per-step overhead instead).
        compiler_params=pltpu.CompilerParams(
            dimension_semantics=("parallel",),
            vmem_limit_bytes=vmem_limit,
        ),
    )(
        x, temb3, G, GT,
        wt, params["bt"],
        wci, params["bci"], params["gci"], params["bgci"],
        wco, params["bco"], params["gco"], params["bgco"],
        wd, params["bd"],
    )

    down_ncl = jnp.transpose(down, (0, 2, 1))
    states_ncl = jnp.transpose(states, (0, 2, 1))
    return down_ncl, (states_ncl,)


def _ref_forward(x_ncl, temb, params, *, num_groups=8):
    """Pure-jnp f32 reference mirroring the PyTorch module semantics."""
    x = jnp.transpose(x_ncl, (0, 2, 1)).astype(jnp.float32)   # [B, L, C]
    B, L, C = x.shape
    R = params["wt"].shape[0]

    def conv(h, w, b, pad):
        K = w.shape[0]
        hp = jnp.pad(h, ((0, 0), (pad, pad), (0, 0)))
        acc = jnp.zeros((B, L, w.shape[-1]), jnp.float32) + b.reshape(1, 1, -1)
        for k in range(K):
            acc = acc + jnp.einsum("blc,cd->bld", hp[:, k:k + L, :], w[k])
        return acc

    def gnorm(y, gamma, beta):
        yg = y.reshape(B, L, num_groups, C // num_groups)
        mean = yg.mean(axis=(1, 3), keepdims=True)
        var = ((yg - mean) ** 2).mean(axis=(1, 3), keepdims=True)
        yn = ((yg - mean) / jnp.sqrt(var + _EPS)).reshape(B, L, C)
        return yn * gamma.reshape(1, 1, -1) + beta.reshape(1, 1, -1)

    def mish(v):
        return v * jnp.tanh(jax.nn.softplus(v))

    h = x
    t_act = mish(temb.astype(jnp.float32))
    for r in range(R):
        te = t_act @ params["wt"][r] + params["bt"][r, 0]
        y = mish(gnorm(conv(h, params["wci"][r], params["bci"][r, 0], 2),
                       params["gci"][r, 0], params["bgci"][r, 0]))
        y = y + te[:, None, :]
        z = mish(gnorm(conv(y, params["wco"][r], params["bco"][r, 0], 2),
                       params["gco"][r, 0], params["bgco"][r, 0]))
        h = z + h
    states = h
    down = conv(h, params["wd"], params["bd"][0], 1)[:, ::2, :]
    return jnp.transpose(down, (0, 2, 1)), (jnp.transpose(states, (0, 2, 1)),)


def _init_params(key, C, TEMB, num_resnets):
    ks = jax.random.split(key, 16)
    n = lambda k, shape, s: (s * jax.random.normal(k, shape)).astype(jnp.float32)
    R = num_resnets
    return {
        "wt": n(ks[0], (R, TEMB, C), 0.2),
        "bt": n(ks[1], (R, 1, C), 0.1),
        "wci": n(ks[2], (R, 5, C, C), 0.2),   # [R, K, Cin, Cout] (torch weight transposed)
        "bci": n(ks[3], (R, 1, C), 0.1),
        "gci": 1.0 + n(ks[4], (R, 1, C), 0.05),
        "bgci": n(ks[5], (R, 1, C), 0.05),
        "wco": n(ks[6], (R, 5, C, C), 0.2),
        "bco": n(ks[7], (R, 1, C), 0.1),
        "gco": 1.0 + n(ks[8], (R, 1, C), 0.05),
        "bgco": n(ks[9], (R, 1, C), 0.05),
        "wd": n(ks[10], (3, C, C), 0.2),
        "bd": n(ks[11], (1, C), 0.1),
    }


if __name__ == "__main__":
    # DownResnetBlock1D(in_channels=16, out_channels=None -> 16, num_layers=1 -> 2 resnets,
    #                   temb_channels=32, non_linearity=None, add_downsample=True)
    B, C, L, TEMB = 2, 16, 16, 32
    NUM_RESNETS = 2  # num_layers=1 -> [resnet0] + 1 extra

    key = jax.random.PRNGKey(0)
    kx, kt, kp = jax.random.split(key, 3)
    x = jax.random.normal(kx, (B, C, L), dtype=jnp.float32)      # PyTorch NCL layout
    temb = jax.random.normal(kt, (B, TEMB), dtype=jnp.float32)
    params = _init_params(kp, C, TEMB, NUM_RESNETS)

    down, (states,) = down_resnet_block_1d(x, temb, params)
    jax.block_until_ready(down)
    jax.block_until_ready(states)

    down_ref, (states_ref,) = _ref_forward(x, temb, params)
    assert down.shape == (B, C, L // 2) and states.shape == (B, C, L)
    # bf16 MXU operands (f32 accumulation) + approximate reciprocal in Mish:
    # compare against the pure-f32 reference at a bf16-level tolerance.
    assert jnp.allclose(down, down_ref, atol=2e-2, rtol=2e-2)
    assert jnp.allclose(states, states_ref, atol=2e-2, rtol=2e-2)

    print("KERNEL_OK")
</pallas_src>

<mosaic_0001>
module attributes {stable_mosaic.version = 11 : i64} {
  func.func @_down_resnet_kernel(%arg0: i32, %arg1: memref<1x16x16xf32, #tpu.memory_space<vmem>>, %arg2: memref<1x1x32xf32, #tpu.memory_space<vmem>>, %arg3: memref<16x8xf32, #tpu.memory_space<vmem>>, %arg4: memref<8x16xf32, #tpu.memory_space<vmem>>, %arg5: memref<32x32xbf16, #tpu.memory_space<vmem>>, %arg6: memref<2x1x16xf32, #tpu.memory_space<vmem>>, %arg7: memref<2x80x16xbf16, #tpu.memory_space<vmem>>, %arg8: memref<2x1x16xf32, #tpu.memory_space<vmem>>, %arg9: memref<2x1x16xf32, #tpu.memory_space<vmem>>, %arg10: memref<2x1x16xf32, #tpu.memory_space<vmem>>, %arg11: memref<2x80x16xbf16, #tpu.memory_space<vmem>>, %arg12: memref<2x1x16xf32, #tpu.memory_space<vmem>>, %arg13: memref<2x1x16xf32, #tpu.memory_space<vmem>>, %arg14: memref<2x1x16xf32, #tpu.memory_space<vmem>>, %arg15: memref<48x16xbf16, #tpu.memory_space<vmem>>, %arg16: memref<1x16xf32, #tpu.memory_space<vmem>>, %arg17: memref<1x16x16xf32, #tpu.memory_space<vmem>>, %arg18: memref<1x8x16xf32, #tpu.memory_space<vmem>>, %arg19: memref<24x16xbf16, #tpu.memory_space<vmem>>, %arg20: memref<24x16xbf16, #tpu.memory_space<vmem>>, %arg21: memref<24x16xf32, #tpu.memory_space<vmem>>) attributes {dimension_semantics = [#tpu.dimension_semantics<parallel>], iteration_bounds = array<i64: 2>, scalar_prefetch = 0 : i64, scratch_operands = 3 : i64, tpu.core_type = #tpu.core_type<tc>, window_params = [{transform_indices = @transform_0, window_bounds = array<i64: 1, 16, 16>}, {transform_indices = @transform_1, window_bounds = array<i64: 1, 1, 32>}, {pipeline_mode = #tpu.pipeline_mode<synchronous>, transform_indices = @transform_2, window_bounds = array<i64: 16, 8>}, {pipeline_mode = #tpu.pipeline_mode<synchronous>, transform_indices = @transform_3, window_bounds = array<i64: 8, 16>}, {pipeline_mode = #tpu.pipeline_mode<synchronous>, transform_indices = @transform_4, window_bounds = array<i64: 32, 32>}, {pipeline_mode = #tpu.pipeline_mode<synchronous>, transform_indices = @transform_5, window_bounds = array<i64: 2, 1, 16>}, {pipeline_mode = #tpu.pipeline_mode<synchronous>, transform_indices = @transform_6, window_bounds = array<i64: 2, 80, 16>}, {pipeline_mode = #tpu.pipeline_mode<synchronous>, transform_indices = @transform_7, window_bounds = array<i64: 2, 1, 16>}, {pipeline_mode = #tpu.pipeline_mode<synchronous>, transform_indices = @transform_8, window_bounds = array<i64: 2, 1, 16>}, {pipeline_mode = #tpu.pipeline_mode<synchronous>, transform_indices = @transform_9, window_bounds = array<i64: 2, 1, 16>}, {pipeline_mode = #tpu.pipeline_mode<synchronous>, transform_indices = @transform_10, window_bounds = array<i64: 2, 80, 16>}, {pipeline_mode = #tpu.pipeline_mode<synchronous>, transform_indices = @transform_11, window_bounds = array<i64: 2, 1, 16>}, {pipeline_mode = #tpu.pipeline_mode<synchronous>, transform_indices = @transform_12, window_bounds = array<i64: 2, 1, 16>}, {pipeline_mode = #tpu.pipeline_mode<synchronous>, transform_indices = @transform_13, window_bounds = array<i64: 2, 1, 16>}, {pipeline_mode = #tpu.pipeline_mode<synchronous>, transform_indices = @transform_14, window_bounds = array<i64: 48, 16>}, {pipeline_mode = #tpu.pipeline_mode<synchronous>, transform_indices = @transform_15, window_bounds = array<i64: 1, 16>}, {transform_indices = @transform_16, window_bounds = array<i64: 1, 16, 16>}, {transform_indices = @transform_17, window_bounds = array<i64: 1, 8, 16>}]} {
    %c0 = arith.constant 0 : index
    %c0_0 = arith.constant 0 : index
    %c0_1 = arith.constant 0 : index
    %0 = vector.load %arg1[%c0, %c0_0, %c0_1] : memref<1x16x16xf32, #tpu.memory_space<vmem>>, vector<1x16x16xf32>
    %1 = vector.shape_cast %0 : vector<1x16x16xf32> to vector<16x16xf32>
    %c0_2 = arith.constant 0 : index
    %c0_3 = arith.constant 0 : index
    %2 = vector.load %arg3[%c0_2, %c0_3] : memref<16x8xf32, #tpu.memory_space<vmem>>, vector<16x8xf32>
    %c0_4 = arith.constant 0 : index
    %c0_5 = arith.constant 0 : index
    %3 = vector.load %arg4[%c0_4, %c0_5] : memref<8x16xf32, #tpu.memory_space<vmem>>, vector<8x16xf32>
    %cst = arith.constant 0.000000e+00 : bf16
    %4 = vector.broadcast %cst : bf16 to vector<2x16xbf16>
    %c0_6 = arith.constant 0 : index
    %c0_7 = arith.constant 0 : index
    %5 = vector.load %arg19[%c0_6, %c0_7] : memref<24x16xbf16, #tpu.memory_space<vmem>>, vector<2x16xbf16>
    tpu.vector_store %arg19[%c0_6, %c0_7], %4 {strides = array<i32>} : memref<24x16xbf16, #tpu.memory_space<vmem>>, vector<2x16xbf16>,
    %c18 = arith.constant 18 : index
    %c0_8 = arith.constant 0 : index
    %6 = vector.load %arg19[%c18, %c0_8] : memref<24x16xbf16, #tpu.memory_space<vmem>>, vector<2x16xbf16>
    tpu.vector_store %arg19[%c18, %c0_8], %4 {strides = array<i32>} : memref<24x16xbf16, #tpu.memory_space<vmem>>, vector<2x16xbf16>,
    %c0_9 = arith.constant 0 : index
    %c0_10 = arith.constant 0 : index
    %7 = vector.load %arg20[%c0_9, %c0_10] : memref<24x16xbf16, #tpu.memory_space<vmem>>, vector<2x16xbf16>
    tpu.vector_store %arg20[%c0_9, %c0_10], %4 {strides = array<i32>} : memref<24x16xbf16, #tpu.memory_space<vmem>>, vector<2x16xbf16>,
    %c18_11 = arith.constant 18 : index
    %c0_12 = arith.constant 0 : index
    %8 = vector.load %arg20[%c18_11, %c0_12] : memref<24x16xbf16, #tpu.memory_space<vmem>>, vector<2x16xbf16>
    tpu.vector_store %arg20[%c18_11, %c0_12], %4 {strides = array<i32>} : memref<24x16xbf16, #tpu.memory_space<vmem>>, vector<2x16xbf16>,
    %cst_13 = arith.constant 0.000000e+00 : f32
    %9 = vector.broadcast %cst_13 : f32 to vector<2x16xf32>
    %c0_14 = arith.constant 0 : index
    %c0_15 = arith.constant 0 : index
    %10 = vector.load %arg21[%c0_14, %c0_15] : memref<24x16xf32, #tpu.memory_space<vmem>>, vector<2x16xf32>
    tpu.vector_store %arg21[%c0_14, %c0_15], %9 {strides = array<i32>} : memref<24x16xf32, #tpu.memory_space<vmem>>, vector<2x16xf32>,
    %c0_16 = arith.constant 0 : index
    %c0_17 = arith.constant 0 : index
    %c0_18 = arith.constant 0 : index
    %11 = vector.load %arg2[%c0_16, %c0_17, %c0_18] : memref<1x1x32xf32, #tpu.memory_space<vmem>>, vector<1x1x32xf32>
    %12 = vector.shape_cast %11 : vector<1x1x32xf32> to vector<1x32xf32>
    %cst_19 = arith.constant 2.000000e+01 : f32
    %13 = vector.broadcast %cst_19 : f32 to vector<1x32xf32>
    %14 = arith.minimumf %12, %13 : vector<1x32xf32>
    %15 = math.exp %14 : vector<1x32xf32>
    %cst_20 = arith.constant 2.000000e+00 : f32
    %16 = vector.broadcast %cst_20 : f32 to vector<1x32xf32>
    %17 = arith.addf %15, %16 : vector<1x32xf32>
    %18 = arith.mulf %15, %17 : vector<1x32xf32>
    %19 = arith.mulf %12, %18 : vector<1x32xf32>
    %cst_21 = arith.constant 2.000000e+00 : f32
    %20 = vector.broadcast %cst_21 : f32 to vector<1x32xf32>
    %21 = arith.addf %18, %20 : vector<1x32xf32>
    %22 = tpu.reciprocal %21 {approx = true} : vector<1x32xf32> -> vector<1x32xf32>
    %23 = arith.mulf %19, %22 : vector<1x32xf32>
    %24 = arith.truncf %23 : vector<1x32xf32> to vector<1x32xbf16>
    %c0_22 = arith.constant 0 : index
    %c0_23 = arith.constant 0 : index
    %25 = vector.load %arg5[%c0_22, %c0_23] : memref<32x32xbf16, #tpu.memory_space<vmem>>, vector<32x32xbf16>
    %cst_24 = arith.constant dense<0.000000e+00> : vector<1x32xf32>
    %26 = tpu.matmul %24, %25, %cst_24 {dimension_numbers = #tpu.dot_dimension_numbers<[1], [0], [0], [1], [0, 0, 1, 1], [], []>} : vector<1x32xbf16>, vector<32x32xbf16>, vector<1x32xf32> -> vector<1x32xf32>
    %27 = arith.truncf %1 : vector<16x16xf32> to vector<16x16xbf16>
    %c2 = arith.constant 2 : index
    %c0_25 = arith.constant 0 : index
    %28 = vector.load %arg19[%c2, %c0_25] : memref<24x16xbf16, #tpu.memory_space<vmem>>, vector<16x16xbf16>
    tpu.vector_store %arg19[%c2, %c0_25], %27 {strides = array<i32>} : memref<24x16xbf16, #tpu.memory_space<vmem>>, vector<16x16xbf16>,
    %29 = vector.extract_strided_slice %26 {offsets = [0, 0], sizes = [1, 16], strides = [1, 1]} : vector<1x32xf32> to vector<1x16xf32>
    %c0_26 = arith.constant 0 : index
    %c0_27 = arith.constant 0 : index
    %c0_28 = arith.constant 0 : index
    %30 = vector.load %arg6[%c0_26, %c0_27, %c0_28] : memref<2x1x16xf32, #tpu.memory_space<vmem>>, vector<1x1x16xf32>
    %31 = vector.shape_cast %30 : vector<1x1x16xf32> to vector<1x16xf32>
    %32 = arith.addf %29, %31 : vector<1x16xf32>
    %c0_29 = arith.constant 0 : index
    %c0_30 = arith.constant 0 : index
    %c0_31 = arith.constant 0 : index
    %33 = vector.load %arg7[%c0_29, %c0_30, %c0_31] : memref<2x80x16xbf16, #tpu.memory_space<vmem>>, vector<1x80x16xbf16>
    %34 = vector.shape_cast %33 : vector<1x80x16xbf16> to vector<80x16xbf16>
    %c0_32 = arith.constant 0 : index
    %c0_33 = arith.constant 0 : index
    %c0_34 = arith.constant 0 : index
    %35 = vector.load %arg8[%c0_32, %c0_33, %c0_34] : memref<2x1x16xf32, #tpu.memory_space<vmem>>, vector<1x1x16xf32>
    %36 = vector.shape_cast %35 : vector<1x1x16xf32> to vector<1x16xf32>
    %c0_35 = arith.constant 0 : index
    %c0_36 = arith.constant 0 : index
    %37 = vector.load %arg19[%c0_35, %c0_36] : memref<24x16xbf16, #tpu.memory_space<vmem>>, vector<16x16xbf16>
    %c1 = arith.constant 1 : index
    %c0_37 = arith.constant 0 : index
    %38 = vector.load %arg19[%c1, %c0_37] : memref<24x16xbf16, #tpu.memory_space<vmem>>, vector<16x16xbf16>
    %c2_38 = arith.constant 2 : index
    %c0_39 = arith.constant 0 : index
    %39 = vector.load %arg19[%c2_38, %c0_39] : memref<24x16xbf16, #tpu.memory_space<vmem>>, vector<16x16xbf16>
    %c3 = arith.constant 3 : index
    %c0_40 = arith.constant 0 : index
    %40 = vector.load %arg19[%c3, %c0_40] : memref<24x16xbf16, #tpu.memory_space<vmem>>, vector<16x16xbf16>
    %c4 = arith.constant 4 : index
    %c0_41 = arith.constant 0 : index
    %41 = vector.load %arg19[%c4, %c0_41] : memref<24x16xbf16, #tpu.memory_space<vmem>>, vector<16x16xbf16>
    %42 = tpu.concatenate %37, %38, %39, %40, %41 in 1 : vector<16x16xbf16>, vector<16x16xbf16>, vector<16x16xbf16>, vector<16x16xbf16>, vector<16x16xbf16> -> vector<16x80xbf16>
    %cst_42 = arith.constant dense<0.000000e+00> : vector<16x16xf32>
    %43 = tpu.matmul %42, %34, %cst_42 {dimension_numbers = #tpu.dot_dimension_numbers<[1], [0], [0], [1], [0, 0, 1, 1], [], []>} : vector<16x80xbf16>, vector<80x16xbf16>, vector<16x16xf32> -> vector<16x16xf32>
    %44 = vector.broadcast %36 : vector<1x16xf32> to vector<16x16xf32>
    %45 = arith.addf %43, %44 : vector<16x16xf32>
    %c0_43 = arith.constant 0 : index
    %c0_44 = arith.constant 0 : index
    %c0_45 = arith.constant 0 : index
    %46 = vector.load %arg9[%c0_43, %c0_44, %c0_45] : memref<2x1x16xf32, #tpu.memory_space<vmem>>, vector<1x1x16xf32>
    %47 = vector.shape_cast %46 : vector<1x1x16xf32> to vector<1x16xf32>
    %c0_46 = arith.constant 0 : index
    %c0_47 = arith.constant 0 : index
    %c0_48 = arith.constant 0 : index
    %48 = vector.load %arg10[%c0_46, %c0_47, %c0_48] : memref<2x1x16xf32, #tpu.memory_space<vmem>>, vector<1x1x16xf32>
    %49 = vector.shape_cast %48 : vector<1x1x16xf32> to vector<1x16xf32>
    %cst_49 = arith.constant dense<0.000000e+00> : vector<16xf32>
    %50 = vector.multi_reduction <add>, %45, %cst_49 [0] : vector<16x16xf32> to vector<16xf32>
    %51 = vector.shape_cast %50 : vector<16xf32> to vector<1x16xf32>
    %52 = arith.mulf %45, %45 : vector<16x16xf32>
    %cst_50 = arith.constant dense<0.000000e+00> : vector<16xf32>
    %53 = vector.multi_reduction <add>, %52, %cst_50 [0] : vector<16x16xf32> to vector<16xf32>
    %54 = vector.shape_cast %53 : vector<16xf32> to vector<1x16xf32>
    %55 = tpu.concatenate %51, %54 in 0 : vector<1x16xf32>, vector<1x16xf32> -> vector<2x16xf32>
    %cst_51 = arith.constant dense<0.000000e+00> : vector<2x8xf32>
    %56 = tpu.matmul %55, %2, %cst_51 {dimension_numbers = #tpu.dot_dimension_numbers<[1], [0], [0], [1], [0, 0, 1, 1], [], []>} : vector<2x16xf32>, vector<16x8xf32>, vector<2x8xf32> -> vector<2x8xf32>
    %cst_52 = arith.constant 3.125000e-02 : f32
    %57 = vector.broadcast %cst_52 : f32 to vector<2x8xf32>
    %58 = arith.mulf %56, %57 : vector<2x8xf32>
    %cst_53 = arith.constant dense<0.000000e+00> : vector<2x16xf32>
    %59 = tpu.matmul %58, %3, %cst_53 {dimension_numbers = #tpu.dot_dimension_numbers<[1], [0], [0], [1], [0, 0, 1, 1], [], []>} : vector<2x8xf32>, vector<8x16xf32>, vector<2x16xf32> -> vector<2x16xf32>
    %60 = vector.extract_strided_slice %59 {offsets = [0, 0], sizes = [1, 16], strides = [1, 1]} : vector<2x16xf32> to vector<1x16xf32>
    %61 = vector.extract_strided_slice %59 {offsets = [1, 0], sizes = [1, 16], strides = [1, 1]} : vector<2x16xf32> to vector<1x16xf32>
    %62 = arith.mulf %60, %60 : vector<1x16xf32>
    %63 = arith.subf %61, %62 : vector<1x16xf32>
    %cst_54 = arith.constant 0.000000e+00 : f32
    %64 = vector.broadcast %cst_54 : f32 to vector<1x16xf32>
    %65 = arith.maximumf %63, %64 : vector<1x16xf32>
    %cst_55 = arith.constant 9.99999974E-6 : f32
    %66 = vector.broadcast %cst_55 : f32 to vector<1x16xf32>
    %67 = arith.addf %65, %66 : vector<1x16xf32>
    %68 = math.rsqrt %67 : vector<1x16xf32>
    %69 = arith.mulf %68, %47 : vector<1x16xf32>
    %70 = vector.broadcast %69 : vector<1x16xf32> to vector<16x16xf32>
    %71 = arith.mulf %45, %70 : vector<16x16xf32>
    %72 = arith.mulf %60, %69 : vector<1x16xf32>
    %73 = arith.subf %49, %72 : vector<1x16xf32>
    %74 = vector.broadcast %73 : vector<1x16xf32> to vector<16x16xf32>
    %75 = arith.addf %71, %74 : vector<16x16xf32>
    %cst_56 = arith.constant 2.000000e+01 : f32
    %76 = vector.broadcast %cst_56 : f32 to vector<16x16xf32>
    %77 = arith.minimumf %75, %76 : vector<16x16xf32>
    %78 = math.exp %77 : vector<16x16xf32>
    %cst_57 = arith.constant 2.000000e+00 : f32
    %79 = vector.broadcast %cst_57 : f32 to vector<16x16xf32>
    %80 = arith.addf %78, %79 : vector<16x16xf32>
    %81 = arith.mulf %78, %80 : vector<16x16xf32>
    %82 = arith.mulf %75, %81 : vector<16x16xf32>
    %cst_58 = arith.constant 2.000000e+00 : f32
    %83 = vector.broadcast %cst_58 : f32 to vector<16x16xf32>
    %84 = arith.addf %81, %83 : vector<16x16xf32>
    %85 = tpu.reciprocal %84 {approx = true} : vector<16x16xf32> -> vector<16x16xf32>
    %86 = arith.mulf %82, %85 : vector<16x16xf32>
    %87 = vector.broadcast %32 : vector<1x16xf32> to vector<16x16xf32>
    %88 = arith.addf %86, %87 : vector<16x16xf32>
    %89 = arith.truncf %88 : vector<16x16xf32> to vector<16x16xbf16>
    %c2_59 = arith.constant 2 : index
    %c0_60 = arith.constant 0 : index
    %90 = vector.load %arg20[%c2_59, %c0_60] : memref<24x16xbf16, #tpu.memory_space<vmem>>, vector<16x16xbf16>
    tpu.vector_store %arg20[%c2_59, %c0_60], %89 {strides = array<i32>} : memref<24x16xbf16, #tpu.memory_space<vmem>>, vector<16x16xbf16>,
    %c0_61 = arith.constant 0 : index
    %c0_62 = arith.constant 0 : index
    %c0_63 = arith.constant 0 : index
    %91 = vector.load %arg11[%c0_61, %c0_62, %c0_63] : memref<2x80x16xbf16, #tpu.memory_space<vmem>>, vector<1x80x16xbf16>
    %92 = vector.shape_cast %91 : vector<1x80x16xbf16> to vector<80x16xbf16>
    %c0_64 = arith.constant 0 : index
    %c0_65 = arith.constant 0 : index
    %c0_66 = arith.constant 0 : index
    %93 = vector.load %arg12[%c0_64, %c0_65, %c0_66] : memref<2x1x16xf32, #tpu.memory_space<vmem>>, vector<1x1x16xf32>
    %94 = vector.shape_cast %93 : vector<1x1x16xf32> to vector<1x16xf32>
    %c0_67 = arith.constant 0 : index
    %c0_68 = arith.constant 0 : index
    %95 = vector.load %arg20[%c0_67, %c0_68] : memref<24x16xbf16, #tpu.memory_space<vmem>>, vector<16x16xbf16>
    %c1_69 = arith.constant 1 : index
    %c0_70 = arith.constant 0 : index
    %96 = vector.load %arg20[%c1_69, %c0_70] : memref<24x16xbf16, #tpu.memory_space<vmem>>, vector<16x16xbf16>
    %c2_71 = arith.constant 2 : index
    %c0_72 = arith.constant 0 : index
    %97 = vector.load %arg20[%c2_71, %c0_72] : memref<24x16xbf16, #tpu.memory_space<vmem>>, vector<16x16xbf16>
    %c3_73 = arith.constant 3 : index
    %c0_74 = arith.constant 0 : index
    %98 = vector.load %arg20[%c3_73, %c0_74] : memref<24x16xbf16, #tpu.memory_space<vmem>>, vector<16x16xbf16>
    %c4_75 = arith.constant 4 : index
    %c0_76 = arith.constant 0 : index
    %99 = vector.load %arg20[%c4_75, %c0_76] : memref<24x16xbf16, #tpu.memory_space<vmem>>, vector<16x16xbf16>
    %100 = tpu.concatenate %95, %96, %97, %98, %99 in 1 : vector<16x16xbf16>, vector<16x16xbf16>, vector<16x16xbf16>, vector<16x16xbf16>, vector<16x16xbf16> -> vector<16x80xbf16>
    %cst_77 = arith.constant dense<0.000000e+00> : vector<16x16xf32>
    %101 = tpu.matmul %100, %92, %cst_77 {dimension_numbers = #tpu.dot_dimension_numbers<[1], [0], [0], [1], [0, 0, 1, 1], [], []>} : vector<16x80xbf16>, vector<80x16xbf16>, vector<16x16xf32> -> vector<16x16xf32>
    %102 = vector.broadcast %94 : vector<1x16xf32> to vector<16x16xf32>
    %103 = arith.addf %101, %102 : vector<16x16xf32>
    %c0_78 = arith.constant 0 : index
    %c0_79 = arith.constant 0 : index
    %c0_80 = arith.constant 0 : index
    %104 = vector.load %arg13[%c0_78, %c0_79, %c0_80] : memref<2x1x16xf32, #tpu.memory_space<vmem>>, vector<1x1x16xf32>
    %105 = vector.shape_cast %104 : vector<1x1x16xf32> to vector<1x16xf32>
    %c0_81 = arith.constant 0 : index
    %c0_82 = arith.constant 0 : index
    %c0_83 = arith.constant 0 : index
    %106 = vector.load %arg14[%c0_81, %c0_82, %c0_83] : memref<2x1x16xf32, #tpu.memory_space<vmem>>, vector<1x1x16xf32>
    %107 = vector.shape_cast %106 : vector<1x1x16xf32> to vector<1x16xf32>
    %cst_84 = arith.constant dense<0.000000e+00> : vector<16xf32>
    %108 = vector.multi_reduction <add>, %103, %cst_84 [0] : vector<16x16xf32> to vector<16xf32>
    %109 = vector.shape_cast %108 : vector<16xf32> to vector<1x16xf32>
    %110 = arith.mulf %103, %103 : vector<16x16xf32>
    %cst_85 = arith.constant dense<0.000000e+00> : vector<16xf32>
    %111 = vector.multi_reduction <add>, %110, %cst_85 [0] : vector<16x16xf32> to vector<16xf32>
    %112 = vector.shape_cast %111 : vector<16xf32> to vector<1x16xf32>
    %113 = tpu.concatenate %109, %112 in 0 : vector<1x16xf32>, vector<1x16xf32> -> vector<2x16xf32>
    %cst_86 = arith.constant dense<0.000000e+00> : vector<2x8xf32>
    %114 = tpu.matmul %113, %2, %cst_86 {dimension_numbers = #tpu.dot_dimension_numbers<[1], [0], [0], [1], [0, 0, 1, 1], [], []>} : vector<2x16xf32>, vector<16x8xf32>, vector<2x8xf32> -> vector<2x8xf32>
    %cst_87 = arith.constant 3.125000e-02 : f32
    %115 = vector.broadcast %cst_87 : f32 to vector<2x8xf32>
    %116 = arith.mulf %114, %115 : vector<2x8xf32>
    %cst_88 = arith.constant dense<0.000000e+00> : vector<2x16xf32>
    %117 = tpu.matmul %116, %3, %cst_88 {dimension_numbers = #tpu.dot_dimension_numbers<[1], [0], [0], [1], [0, 0, 1, 1], [], []>} : vector<2x8xf32>, vector<8x16xf32>, vector<2x16xf32> -> vector<2x16xf32>
    %118 = vector.extract_strided_slice %117 {offsets = [0, 0], sizes = [1, 16], strides = [1, 1]} : vector<2x16xf32> to vector<1x16xf32>
    %119 = vector.extract_strided_slice %117 {offsets = [1, 0], sizes = [1, 16], strides = [1, 1]} : vector<2x16xf32> to vector<1x16xf32>
    %120 = arith.mulf %118, %118 : vector<1x16xf32>
    %121 = arith.subf %119, %120 : vector<1x16xf32>
    %cst_89 = arith.constant 0.000000e+00 : f32
    %122 = vector.broadcast %cst_89 : f32 to vector<1x16xf32>
    %123 = arith.maximumf %121, %122 : vector<1x16xf32>
    %cst_90 = arith.constant 9.99999974E-6 : f32
    %124 = vector.broadcast %cst_90 : f32 to vector<1x16xf32>
    %125 = arith.addf %123, %124 : vector<1x16xf32>
    %126 = math.rsqrt %125 : vector<1x16xf32>
    %127 = arith.mulf %126, %105 : vector<1x16xf32>
    %128 = vector.broadcast %127 : vector<1x16xf32> to vector<16x16xf32>
    %129 = arith.mulf %103, %128 : vector<16x16xf32>
    %130 = arith.mulf %118, %127 : vector<1x16xf32>
    %131 = arith.subf %107, %130 : vector<1x16xf32>
    %132 = vector.broadcast %131 : vector<1x16xf32> to vector<16x16xf32>
    %133 = arith.addf %129, %132 : vector<16x16xf32>
    %cst_91 = arith.constant 2.000000e+01 : f32
    %134 = vector.broadcast %cst_91 : f32 to vector<16x16xf32>
    %135 = arith.minimumf %133, %134 : vector<16x16xf32>
    %136 = math.exp %135 : vector<16x16xf32>
    %cst_92 = arith.constant 2.000000e+00 : f32
    %137 = vector.broadcast %cst_92 : f32 to vector<16x16xf32>
    %138 = arith.addf %136, %137 : vector<16x16xf32>
    %139 = arith.mulf %136, %138 : vector<16x16xf32>
    %140 = arith.mulf %133, %139 : vector<16x16xf32>
    %cst_93 = arith.constant 2.000000e+00 : f32
    %141 = vector.broadcast %cst_93 : f32 to vector<16x16xf32>
    %142 = arith.addf %139, %141 : vector<16x16xf32>
    %143 = tpu.reciprocal %142 {approx = true} : vector<16x16xf32> -> vector<16x16xf32>
    %144 = arith.mulf %140, %143 : vector<16x16xf32>
    %145 = arith.addf %144, %1 : vector<16x16xf32>
    %146 = arith.truncf %145 : vector<16x16xf32> to vector<16x16xbf16>
    %c2_94 = arith.constant 2 : index
    %c0_95 = arith.constant 0 : index
    %147 = vector.load %arg19[%c2_94, %c0_95] : memref<24x16xbf16, #tpu.memory_space<vmem>>, vector<16x16xbf16>
    tpu.vector_store %arg19[%c2_94, %c0_95], %146 {strides = array<i32>} : memref<24x16xbf16, #tpu.memory_space<vmem>>, vector<16x16xbf16>,
    %148 = vector.extract_strided_slice %26 {offsets = [0, 16], sizes = [1, 16], strides = [1, 1]} : vector<1x32xf32> to vector<1x16xf32>
    %c1_96 = arith.constant 1 : index
    %c0_97 = arith.constant 0 : index
    %c0_98 = arith.constant 0 : index
    %149 = vector.load %arg6[%c1_96, %c0_97, %c0_98] : memref<2x1x16xf32, #tpu.memory_space<vmem>>, vector<1x1x16xf32>
    %150 = vector.shape_cast %149 : vector<1x1x16xf32> to vector<1x16xf32>
    %151 = arith.addf %148, %150 : vector<1x16xf32>
    %c1_99 = arith.constant 1 : index
    %c0_100 = arith.constant 0 : index
    %c0_101 = arith.constant 0 : index
    %152 = vector.load %arg7[%c1_99, %c0_100, %c0_101] : memref<2x80x16xbf16, #tpu.memory_space<vmem>>, vector<1x80x16xbf16>
    %153 = vector.shape_cast %152 : vector<1x80x16xbf16> to vector<80x16xbf16>
    %c1_102 = arith.constant 1 : index
    %c0_103 = arith.constant 0 : index
    %c0_104 = arith.constant 0 : index
    %154 = vector.load %arg8[%c1_102, %c0_103, %c0_104] : memref<2x1x16xf32, #tpu.memory_space<vmem>>, vector<1x1x16xf32>
    %155 = vector.shape_cast %154 : vector<1x1x16xf32> to vector<1x16xf32>
    %c0_105 = arith.constant 0 : index
    %c0_106 = arith.constant 0 : index
    %156 = vector.load %arg19[%c0_105, %c0_106] : memref<24x16xbf16, #tpu.memory_space<vmem>>, vector<16x16xbf16>
    %c1_107 = arith.constant 1 : index
    %c0_108 = arith.constant 0 : index
    %157 = vector.load %arg19[%c1_107, %c0_108] : memref<24x16xbf16, #tpu.memory_space<vmem>>, vector<16x16xbf16>
    %c2_109 = arith.constant 2 : index
    %c0_110 = arith.constant 0 : index
    %158 = vector.load %arg19[%c2_109, %c0_110] : memref<24x16xbf16, #tpu.memory_space<vmem>>, vector<16x16xbf16>
    %c3_111 = arith.constant 3 : index
    %c0_112 = arith.constant 0 : index
    %159 = vector.load %arg19[%c3_111, %c0_112] : memref<24x16xbf16, #tpu.memory_space<vmem>>, vector<16x16xbf16>
    %c4_113 = arith.constant 4 : index
    %c0_114 = arith.constant 0 : index
    %160 = vector.load %arg19[%c4_113, %c0_114] : memref<24x16xbf16, #tpu.memory_space<vmem>>, vector<16x16xbf16>
    %161 = tpu.concatenate %156, %157, %158, %159, %160 in 1 : vector<16x16xbf16>, vector<16x16xbf16>, vector<16x16xbf16>, vector<16x16xbf16>, vector<16x16xbf16> -> vector<16x80xbf16>
    %cst_115 = arith.constant dense<0.000000e+00> : vector<16x16xf32>
    %162 = tpu.matmul %161, %153, %cst_115 {dimension_numbers = #tpu.dot_dimension_numbers<[1], [0], [0], [1], [0, 0, 1, 1], [], []>} : vector<16x80xbf16>, vector<80x16xbf16>, vector<16x16xf32> -> vector<16x16xf32>
    %163 = vector.broadcast %155 : vector<1x16xf32> to vector<16x16xf32>
    %164 = arith.addf %162, %163 : vector<16x16xf32>
    %c1_116 = arith.constant 1 : index
    %c0_117 = arith.constant 0 : index
    %c0_118 = arith.constant 0 : index
    %165 = vector.load %arg9[%c1_116, %c0_117, %c0_118] : memref<2x1x16xf32, #tpu.memory_space<vmem>>, vector<1x1x16xf32>
    %166 = vector.shape_cast %165 : vector<1x1x16xf32> to vector<1x16xf32>
    %c1_119 = arith.constant 1 : index
    %c0_120 = arith.constant 0 : index
    %c0_121 = arith.constant 0 : index
    %167 = vector.load %arg10[%c1_119, %c0_120, %c0_121] : memref<2x1x16xf32, #tpu.memory_space<vmem>>, vector<1x1x16xf32>
    %168 = vector.shape_cast %167 : vector<1x1x16xf32> to vector<1x16xf32>
    %cst_122 = arith.constant dense<0.000000e+00> : vector<16xf32>
    %169 = vector.multi_reduction <add>, %164, %cst_122 [0] : vector<16x16xf32> to vector<16xf32>
    %170 = vector.shape_cast %169 : vector<16xf32> to vector<1x16xf32>
    %171 = arith.mulf %164, %164 : vector<16x16xf32>
    %cst_123 = arith.constant dense<0.000000e+00> : vector<16xf32>
    %172 = vector.multi_reduction <add>, %171, %cst_123 [0] : vector<16x16xf32> to vector<16xf32>
    %173 = vector.shape_cast %172 : vector<16xf32> to vector<1x16xf32>
    %174 = tpu.concatenate %170, %173 in 0 : vector<1x16xf32>, vector<1x16xf32> -> vector<2x16xf32>
    %cst_124 = arith.constant dense<0.000000e+00> : vector<2x8xf32>
    %175 = tpu.matmul %174, %2, %cst_124 {dimension_numbers = #tpu.dot_dimension_numbers<[1], [0], [0], [1], [0, 0, 1, 1], [], []>} : vector<2x16xf32>, vector<16x8xf32>, vector<2x8xf32> -> vector<2x8xf32>
    %cst_125 = arith.constant 3.125000e-02 : f32
    %176 = vector.broadcast %cst_125 : f32 to vector<2x8xf32>
    %177 = arith.mulf %175, %176 : vector<2x8xf32>
    %cst_126 = arith.constant dense<0.000000e+00> : vector<2x16xf32>
    %178 = tpu.matmul %177, %3, %cst_126 {dimension_numbers = #tpu.dot_dimension_numbers<[1], [0], [0], [1], [0, 0, 1, 1], [], []>} : vector<2x8xf32>, vector<8x16xf32>, vector<2x16xf32> -> vector<2x16xf32>
    %179 = vector.extract_strided_slice %178 {offsets = [0, 0], sizes = [1, 16], strides = [1, 1]} : vector<2x16xf32> to vector<1x16xf32>
    %180 = vector.extract_strided_slice %178 {offsets = [1, 0], sizes = [1, 16], strides = [1, 1]} : vector<2x16xf32> to vector<1x16xf32>
    %181 = arith.mulf %179, %179 : vector<1x16xf32>
    %182 = arith.subf %180, %181 : vector<1x16xf32>
    %cst_127 = arith.constant 0.000000e+00 : f32
    %183 = vector.broadcast %cst_127 : f32 to vector<1x16xf32>
    %184 = arith.maximumf %182, %183 : vector<1x16xf32>
    %cst_128 = arith.constant 9.99999974E-6 : f32
    %185 = vector.broadcast %cst_128 : f32 to vector<1x16xf32>
    %186 = arith.addf %184, %185 : vector<1x16xf32>
    %187 = math.rsqrt %186 : vector<1x16xf32>
    %188 = arith.mulf %187, %166 : vector<1x16xf32>
    %189 = vector.broadcast %188 : vector<1x16xf32> to vector<16x16xf32>
    %190 = arith.mulf %164, %189 : vector<16x16xf32>
    %191 = arith.mulf %179, %188 : vector<1x16xf32>
    %192 = arith.subf %168, %191 : vector<1x16xf32>
    %193 = vector.broadcast %192 : vector<1x16xf32> to vector<16x16xf32>
    %194 = arith.addf %190, %193 : vector<16x16xf32>
    %cst_129 = arith.constant 2.000000e+01 : f32
    %195 = vector.broadcast %cst_129 : f32 to vector<16x16xf32>
    %196 = arith.minimumf %194, %195 : vector<16x16xf32>
    %197 = math.exp %196 : vector<16x16xf32>
    %cst_130 = arith.constant 2.000000e+00 : f32
    %198 = vector.broadcast %cst_130 : f32 to vector<16x16xf32>
    %199 = arith.addf %197, %198 : vector<16x16xf32>
    %200 = arith.mulf %197, %199 : vector<16x16xf32>
    %201 = arith.mulf %194, %200 : vector<16x16xf32>
    %cst_131 = arith.constant 2.000000e+00 : f32
    %202 = vector.broadcast %cst_131 : f32 to vector<16x16xf32>
    %203 = arith.addf %200, %202 : vector<16x16xf32>
    %204 = tpu.reciprocal %203 {approx = true} : vector<16x16xf32> -> vector<16x16xf32>
    %205 = arith.mulf %201, %204 : vector<16x16xf32>
    %206 = vector.broadcast %151 : vector<1x16xf32> to vector<16x16xf32>
    %207 = arith.addf %205, %206 : vector<16x16xf32>
    %208 = arith.truncf %207 : vector<16x16xf32> to vector<16x16xbf16>
    %c2_132 = arith.constant 2 : index
    %c0_133 = arith.constant 0 : index
    %209 = vector.load %arg20[%c2_132, %c0_133] : memref<24x16xbf16, #tpu.memory_space<vmem>>, vector<16x16xbf16>
    tpu.vector_store %arg20[%c2_132, %c0_133], %208 {strides = array<i32>} : memref<24x16xbf16, #tpu.memory_space<vmem>>, vector<16x16xbf16>,
    %c1_134 = arith.constant 1 : index
    %c0_135 = arith.constant 0 : index
    %c0_136 = arith.constant 0 : index
    %210 = vector.load %arg11[%c1_134, %c0_135, %c0_136] : memref<2x80x16xbf16, #tpu.memory_space<vmem>>, vector<1x80x16xbf16>
    %211 = vector.shape_cast %210 : vector<1x80x16xbf16> to vector<80x16xbf16>
    %c1_137 = arith.constant 1 : index
    %c0_138 = arith.constant 0 : index
    %c0_139 = arith.constant 0 : index
    %212 = vector.load %arg12[%c1_137, %c0_138, %c0_139] : memref<2x1x16xf32, #tpu.memory_space<vmem>>, vector<1x1x16xf32>
    %213 = vector.shape_cast %212 : vector<1x1x16xf32> to vector<1x16xf32>
    %c0_140 = arith.constant 0 : index
    %c0_141 = arith.constant 0 : index
    %214 = vector.load %arg20[%c0_140, %c0_141] : memref<24x16xbf16, #tpu.memory_space<vmem>>, vector<16x16xbf16>
    %c1_142 = arith.constant 1 : index
    %c0_143 = arith.constant 0 : index
    %215 = vector.load %arg20[%c1_142, %c0_143] : memref<24x16xbf16, #tpu.memory_space<vmem>>, vector<16x16xbf16>
    %c2_144 = arith.constant 2 : index
    %c0_145 = arith.constant 0 : index
    %216 = vector.load %arg20[%c2_144, %c0_145] : memref<24x16xbf16, #tpu.memory_space<vmem>>, vector<16x16xbf16>
    %c3_146 = arith.constant 3 : index
    %c0_147 = arith.constant 0 : index
    %217 = vector.load %arg20[%c3_146, %c0_147] : memref<24x16xbf16, #tpu.memory_space<vmem>>, vector<16x16xbf16>
    %c4_148 = arith.constant 4 : index
    %c0_149 = arith.constant 0 : index
    %218 = vector.load %arg20[%c4_148, %c0_149] : memref<24x16xbf16, #tpu.memory_space<vmem>>, vector<16x16xbf16>
    %219 = tpu.concatenate %214, %215, %216, %217, %218 in 1 : vector<16x16xbf16>, vector<16x16xbf16>, vector<16x16xbf16>, vector<16x16xbf16>, vector<16x16xbf16> -> vector<16x80xbf16>
    %cst_150 = arith.constant dense<0.000000e+00> : vector<16x16xf32>
    %220 = tpu.matmul %219, %211, %cst_150 {dimension_numbers = #tpu.dot_dimension_numbers<[1], [0], [0], [1], [0, 0, 1, 1], [], []>} : vector<16x80xbf16>, vector<80x16xbf16>, vector<16x16xf32> -> vector<16x16xf32>
    %221 = vector.broadcast %213 : vector<1x16xf32> to vector<16x16xf32>
    %222 = arith.addf %220, %221 : vector<16x16xf32>
    %c1_151 = arith.constant 1 : index
    %c0_152 = arith.constant 0 : index
    %c0_153 = arith.constant 0 : index
    %223 = vector.load %arg13[%c1_151, %c0_152, %c0_153] : memref<2x1x16xf32, #tpu.memory_space<vmem>>, vector<1x1x16xf32>
    %224 = vector.shape_cast %223 : vector<1x1x16xf32> to vector<1x16xf32>
    %c1_154 = arith.constant 1 : index
    %c0_155 = arith.constant 0 : index
    %c0_156 = arith.constant 0 : index
    %225 = vector.load %arg14[%c1_154, %c0_155, %c0_156] : memref<2x1x16xf32, #tpu.memory_space<vmem>>, vector<1x1x16xf32>
    %226 = vector.shape_cast %225 : vector<1x1x16xf32> to vector<1x16xf32>
    %cst_157 = arith.constant dense<0.000000e+00> : vector<16xf32>
    %227 = vector.multi_reduction <add>, %222, %cst_157 [0] : vector<16x16xf32> to vector<16xf32>
    %228 = vector.shape_cast %227 : vector<16xf32> to vector<1x16xf32>
    %229 = arith.mulf %222, %222 : vector<16x16xf32>
    %cst_158 = arith.constant dense<0.000000e+00> : vector<16xf32>
    %230 = vector.multi_reduction <add>, %229, %cst_158 [0] : vector<16x16xf32> to vector<16xf32>
    %231 = vector.shape_cast %230 : vector<16xf32> to vector<1x16xf32>
    %232 = tpu.concatenate %228, %231 in 0 : vector<1x16xf32>, vector<1x16xf32> -> vector<2x16xf32>
    %cst_159 = arith.constant dense<0.000000e+00> : vector<2x8xf32>
    %233 = tpu.matmul %232, %2, %cst_159 {dimension_numbers = #tpu.dot_dimension_numbers<[1], [0], [0], [1], [0, 0, 1, 1], [], []>} : vector<2x16xf32>, vector<16x8xf32>, vector<2x8xf32> -> vector<2x8xf32>
    %cst_160 = arith.constant 3.125000e-02 : f32
    %234 = vector.broadcast %cst_160 : f32 to vector<2x8xf32>
    %235 = arith.mulf %233, %234 : vector<2x8xf32>
    %cst_161 = arith.constant dense<0.000000e+00> : vector<2x16xf32>
    %236 = tpu.matmul %235, %3, %cst_161 {dimension_numbers = #tpu.dot_dimension_numbers<[1], [0], [0], [1], [0, 0, 1, 1], [], []>} : vector<2x8xf32>, vector<8x16xf32>, vector<2x16xf32> -> vector<2x16xf32>
    %237 = vector.extract_strided_slice %236 {offsets = [0, 0], sizes = [1, 16], strides = [1, 1]} : vector<2x16xf32> to vector<1x16xf32>
    %238 = vector.extract_strided_slice %236 {offsets = [1, 0], sizes = [1, 16], strides = [1, 1]} : vector<2x16xf32> to vector<1x16xf32>
    %239 = arith.mulf %237, %237 : vector<1x16xf32>
    %240 = arith.subf %238, %239 : vector<1x16xf32>
    %cst_162 = arith.constant 0.000000e+00 : f32
    %241 = vector.broadcast %cst_162 : f32 to vector<1x16xf32>
    %242 = arith.maximumf %240, %241 : vector<1x16xf32>
    %cst_163 = arith.constant 9.99999974E-6 : f32
    %243 = vector.broadcast %cst_163 : f32 to vector<1x16xf32>
    %244 = arith.addf %242, %243 : vector<1x16xf32>
    %245 = math.rsqrt %244 : vector<1x16xf32>
    %246 = arith.mulf %245, %224 : vector<1x16xf32>
    %247 = vector.broadcast %246 : vector<1x16xf32> to vector<16x16xf32>
    %248 = arith.mulf %222, %247 : vector<16x16xf32>
    %249 = arith.mulf %237, %246 : vector<1x16xf32>
    %250 = arith.subf %226, %249 : vector<1x16xf32>
    %251 = vector.broadcast %250 : vector<1x16xf32> to vector<16x16xf32>
    %252 = arith.addf %248, %251 : vector<16x16xf32>
    %cst_164 = arith.constant 2.000000e+01 : f32
    %253 = vector.broadcast %cst_164 : f32 to vector<16x16xf32>
    %254 = arith.minimumf %252, %253 : vector<16x16xf32>
    %255 = math.exp %254 : vector<16x16xf32>
    %cst_165 = arith.constant 2.000000e+00 : f32
    %256 = vector.broadcast %cst_165 : f32 to vector<16x16xf32>
    %257 = arith.addf %255, %256 : vector<16x16xf32>
    %258 = arith.mulf %255, %257 : vector<16x16xf32>
    %259 = arith.mulf %252, %258 : vector<16x16xf32>
    %cst_166 = arith.constant 2.000000e+00 : f32
    %260 = vector.broadcast %cst_166 : f32 to vector<16x16xf32>
    %261 = arith.addf %258, %260 : vector<16x16xf32>
    %262 = tpu.reciprocal %261 {approx = true} : vector<16x16xf32> -> vector<16x16xf32>
    %263 = arith.mulf %259, %262 : vector<16x16xf32>
    %264 = arith.addf %263, %145 : vector<16x16xf32>
    %c0_167 = arith.constant 0 : index
    %c0_168 = arith.constant 0 : index
    %c0_169 = arith.constant 0 : index
    %265 = vector.load %arg17[%c0_167, %c0_168, %c0_169] : memref<1x16x16xf32, #tpu.memory_space<vmem>>, vector<1x16x16xf32>
    %266 = vector.shape_cast %265 : vector<1x16x16xf32> to vector<16x16xf32>
    %267 = vector.shape_cast %264 : vector<16x16xf32> to vector<1x16x16xf32>
    tpu.vector_store %arg17[%c0_167, %c0_168, %c0_169], %267 {strides = array<i32>} : memref<1x16x16xf32, #tpu.memory_space<vmem>>, vector<1x16x16xf32>,
    %c2_170 = arith.constant 2 : index
    %c0_171 = arith.constant 0 : index
    %268 = vector.load %arg21[%c2_170, %c0_171] : memref<24x16xf32, #tpu.memory_space<vmem>>, vector<16x16xf32>
    tpu.vector_store %arg21[%c2_170, %c0_171], %264 {strides = array<i32>} : memref<24x16xf32, #tpu.memory_space<vmem>>, vector<16x16xf32>,
    %c1_172 = arith.constant 1 : index
    %c0_173 = arith.constant 0 : index
    %269 = tpu.strided_load %arg21[%c1_172, %c0_173] {strides = array<i32: 2, 1>} : memref<24x16xf32, #tpu.memory_space<vmem>>, vector<8x16xf32>
    %c2_174 = arith.constant 2 : index
    %c0_175 = arith.constant 0 : index
    %270 = tpu.strided_load %arg21[%c2_174, %c0_175] {strides = array<i32: 2, 1>} : memref<24x16xf32, #tpu.memory_space<vmem>>, vector<8x16xf32>
    %c3_176 = arith.constant 3 : index
    %c0_177 = arith.constant 0 : index
    %271 = tpu.strided_load %arg21[%c3_176, %c0_177] {strides = array<i32: 2, 1>} : memref<24x16xf32, #tpu.memory_space<vmem>>, vector<8x16xf32>
    %272 = tpu.concatenate %269, %270, %271 in 1 : vector<8x16xf32>, vector<8x16xf32>, vector<8x16xf32> -> vector<8x48xf32>
    %273 = arith.truncf %272 : vector<8x48xf32> to vector<8x48xbf16>
    %c0_178 = arith.constant 0 : index
    %c0_179 = arith.constant 0 : index
    %274 = vector.load %arg15[%c0_178, %c0_179] : memref<48x16xbf16, #tpu.memory_space<vmem>>, vector<48x16xbf16>
    %cst_180 = arith.constant dense<0.000000e+00> : vector<8x16xf32>
    %275 = tpu.matmul %273, %274, %cst_180 {dimension_numbers = #tpu.dot_dimension_numbers<[1], [0], [0], [1], [0, 0, 1, 1], [], []>} : vector<8x48xbf16>, vector<48x16xbf16>, vector<8x16xf32> -> vector<8x16xf32>
    %c0_181 = arith.constant 0 : index
    %c0_182 = arith.constant 0 : index
    %276 = vector.load %arg16[%c0_181, %c0_182] : memref<1x16xf32, #tpu.memory_space<vmem>>, vector<1x16xf32>
    %277 = vector.broadcast %276 : vector<1x16xf32> to vector<8x16xf32>
    %278 = arith.addf %275, %277 : vector<8x16xf32>
    %c0_183 = arith.constant 0 : index
    %c0_184 = arith.constant 0 : index
    %c0_185 = arith.constant 0 : index
    %279 = vector.load %arg18[%c0_183, %c0_184, %c0_185] : memref<1x8x16xf32, #tpu.memory_space<vmem>>, vector<1x8x16xf32>
    %280 = vector.shape_cast %279 : vector<1x8x16xf32> to vector<8x16xf32>
    %281 = vector.shape_cast %278 : vector<8x16xf32> to vector<1x8x16xf32>
    tpu.vector_store %arg18[%c0_183, %c0_184, %c0_185], %281 {strides = array<i32>} : memref<1x8x16xf32, #tpu.memory_space<vmem>>, vector<1x8x16xf32>,
    return
  }
  func.func @transform_0(%arg0: i32) -> (i32, i32, i32) {
    %c0_i32 = arith.constant 0 : i32
    %c0_i32_0 = arith.constant 0 : i32
    %c0_i32_1 = arith.constant 0 : i32
    return %arg0, %c0_i32, %c0_i32_0 : i32, i32, i32
  }
  func.func @transform_1(%arg0: i32) -> (i32, i32, i32) {
    %c0_i32 = arith.constant 0 : i32
    %c0_i32_0 = arith.constant 0 : i32
    %c0_i32_1 = arith.constant 0 : i32
    return %arg0, %c0_i32, %c0_i32_0 : i32, i32, i32
  }
  func.func @transform_2(%arg0: i32) -> (i32, i32) {
    %c0_i32 = arith.constant 0 : i32
    %c0_i32_0 = arith.constant 0 : i32
    %c0_i32_1 = arith.constant 0 : i32
    return %c0_i32, %c0_i32_0 : i32, i32
  }
  func.func @transform_3(%arg0: i32) -> (i32, i32) {
    %c0_i32 = arith.constant 0 : i32
    %c0_i32_0 = arith.constant 0 : i32
    %c0_i32_1 = arith.constant 0 : i32
    return %c0_i32, %c0_i32_0 : i32, i32
  }
  func.func @transform_4(%arg0: i32) -> (i32, i32) {
    %c0_i32 = arith.constant 0 : i32
    %c0_i32_0 = arith.constant 0 : i32
    %c0_i32_1 = arith.constant 0 : i32
    return %c0_i32, %c0_i32_0 : i32, i32
  }
  func.func @transform_5(%arg0: i32) -> (i32, i32, i32) {
    %c0_i32 = arith.constant 0 : i32
    %c0_i32_0 = arith.constant 0 : i32
    %c0_i32_1 = arith.constant 0 : i32
    %c0_i32_2 = arith.constant 0 : i32
    return %c0_i32, %c0_i32_0, %c0_i32_1 : i32, i32, i32
  }
  func.func @transform_6(%arg0: i32) -> (i32, i32, i32) {
    %c0_i32 = arith.constant 0 : i32
    %c0_i32_0 = arith.constant 0 : i32
    %c0_i32_1 = arith.constant 0 : i32
    %c0_i32_2 = arith.constant 0 : i32
    return %c0_i32, %c0_i32_0, %c0_i32_1 : i32, i32, i32
  }
  func.func @transform_7(%arg0: i32) -> (i32, i32, i32) {
    %c0_i32 = arith.constant 0 : i32
    %c0_i32_0 = arith.constant 0 : i32
    %c0_i32_1 = arith.constant 0 : i32
    %c0_i32_2 = arith.constant 0 : i32
    return %c0_i32, %c0_i32_0, %c0_i32_1 : i32, i32, i32
  }
  func.func @transform_8(%arg0: i32) -> (i32, i32, i32) {
    %c0_i32 = arith.constant 0 : i32
    %c0_i32_0 = arith.constant 0 : i32
    %c0_i32_1 = arith.constant 0 : i32
    %c0_i32_2 = arith.constant 0 : i32
    return %c0_i32, %c0_i32_0, %c0_i32_1 : i32, i32, i32
  }
  func.func @transform_9(%arg0: i32) -> (i32, i32, i32) {
    %c0_i32 = arith.constant 0 : i32
    %c0_i32_0 = arith.constant 0 : i32
    %c0_i32_1 = arith.constant 0 : i32
    %c0_i32_2 = arith.constant 0 : i32
    return %c0_i32, %c0_i32_0, %c0_i32_1 : i32, i32, i32
  }
  func.func @transform_10(%arg0: i32) -> (i32, i32, i32) {
    %c0_i32 = arith.constant 0 : i32
    %c0_i32_0 = arith.constant 0 : i32
    %c0_i32_1 = arith.constant 0 : i32
    %c0_i32_2 = arith.constant 0 : i32
    return %c0_i32, %c0_i32_0, %c0_i32_1 : i32, i32, i32
  }
  func.func @transform_11(%arg0: i32) -> (i32, i32, i32) {
    %c0_i32 = arith.constant 0 : i32
    %c0_i32_0 = arith.constant 0 : i32
    %c0_i32_1 = arith.constant 0 : i32
    %c0_i32_2 = arith.constant 0 : i32
    return %c0_i32, %c0_i32_0, %c0_i32_1 : i32, i32, i32
  }
  func.func @transform_12(%arg0: i32) -> (i32, i32, i32) {
    %c0_i32 = arith.constant 0 : i32
    %c0_i32_0 = arith.constant 0 : i32
    %c0_i32_1 = arith.constant 0 : i32
    %c0_i32_2 = arith.constant 0 : i32
    return %c0_i32, %c0_i32_0, %c0_i32_1 : i32, i32, i32
  }
  func.func @transform_13(%arg0: i32) -> (i32, i32, i32) {
    %c0_i32 = arith.constant 0 : i32
    %c0_i32_0 = arith.constant 0 : i32
    %c0_i32_1 = arith.constant 0 : i32
    %c0_i32_2 = arith.constant 0 : i32
    return %c0_i32, %c0_i32_0, %c0_i32_1 : i32, i32, i32
  }
  func.func @transform_14(%arg0: i32) -> (i32, i32) {
    %c0_i32 = arith.constant 0 : i32
    %c0_i32_0 = arith.constant 0 : i32
    %c0_i32_1 = arith.constant 0 : i32
    return %c0_i32, %c0_i32_0 : i32, i32
  }
  func.func @transform_15(%arg0: i32) -> (i32, i32) {
    %c0_i32 = arith.constant 0 : i32
    %c0_i32_0 = arith.constant 0 : i32
    %c0_i32_1 = arith.constant 0 : i32
    return %c0_i32, %c0_i32_0 : i32, i32
  }
  func.func @transform_16(%arg0: i32) -> (i32, i32, i32) {
    %c0_i32 = arith.constant 0 : i32
    %c0_i32_0 = arith.constant 0 : i32
    %c0_i32_1 = arith.constant 0 : i32
    return %arg0, %c0_i32, %c0_i32_0 : i32, i32, i32
  }
  func.func @transform_17(%arg0: i32) -> (i32, i32, i32) {
    %c0_i32 = arith.constant 0 : i32
    %c0_i32_0 = arith.constant 0 : i32
    %c0_i32_1 = arith.constant 0 : i32
    return %arg0, %c0_i32, %c0_i32_0 : i32, i32, i32
  }
}

</mosaic_0001>

<llo_original>
// kernel: tpu_custom_call.1
$region0: #{tpu_custom_call.1}
  #allocation0 [shape = 'u32[]', space=smem, size = 0x4, offset = 0x4, fixed_abs, tag = 'smem constant byte address 0x4 - core index']
  #allocation1 [shape = 'u32[144,128]{1,0:T(1,128)}', space=vmem, size = 0x12000, scoped, tag = 'internal scratch']
  #allocation2 [shape = 'bf16[24,16]{1,0:T(8,128)(2,1)}', space=vmem, size = 0x1800, scoped, tag = 'scratch operand']
  #allocation3 [shape = 'bf16[24,16]{1,0:T(8,128)(2,1)}', space=vmem, size = 0x1800, scoped, tag = 'scratch operand']
  #allocation4 [shape = 'f32[24,16]{1,0:T(8,128)}', space=vmem, size = 0x3000, scoped, tag = 'scratch operand']
  %s0 = inlined_call_operand.vmem [shape: f32[2,16,16], index: 0, kind: input, shape index: {}]
  %s1 = inlined_call_operand.vmem [shape: f32[2,1,32], index: 1, kind: input, shape index: {}]
  %s2 = inlined_call_operand.vmem [shape: f32[16,8], index: 2, kind: input, shape index: {}]
  %s3 = inlined_call_operand.vmem [shape: f32[8,16], index: 3, kind: input, shape index: {}]
  %s4 = inlined_call_operand.vmem [shape: bf16[32,32], index: 4, kind: input, shape index: {}]
  %s5 = inlined_call_operand.vmem [shape: f32[2,1,16], index: 5, kind: input, shape index: {}]
  %s6 = inlined_call_operand.vmem [shape: bf16[2,80,16], index: 6, kind: input, shape index: {}]
  %s7 = inlined_call_operand.vmem [shape: f32[2,1,16], index: 7, kind: input, shape index: {}]
  %s8 = inlined_call_operand.vmem [shape: f32[2,1,16], index: 8, kind: input, shape index: {}]
  %s9 = inlined_call_operand.vmem [shape: f32[2,1,16], index: 9, kind: input, shape index: {}]
  %s10 = inlined_call_operand.vmem [shape: bf16[2,80,16], index: 10, kind: input, shape index: {}]
  %s11 = inlined_call_operand.vmem [shape: f32[2,1,16], index: 11, kind: input, shape index: {}]
  %s12 = inlined_call_operand.vmem [shape: f32[2,1,16], index: 12, kind: input, shape index: {}]
  %s13 = inlined_call_operand.vmem [shape: f32[2,1,16], index: 13, kind: input, shape index: {}]
  %s14 = inlined_call_operand.vmem [shape: bf16[48,16], index: 14, kind: input, shape index: {}]
  %s15 = inlined_call_operand.vmem [shape: f32[1,16], index: 15, kind: input, shape index: {}]
  %s16 = inlined_call_operand.hbm [shape: f32[2,16,16], index: 16, kind: output, shape index: {0}]
  %s17 = inlined_call_operand.hbm [shape: f32[2,8,16], index: 17, kind: output, shape index: {1}]
  %18 = xla_tuple %s16, %s17
  %s19 = sld [smem:[#allocation0]]
  $region105: #{tpu_custom_call.1} parent=0
    _
  %s21 = ssub.s32 1, %s19
  %s22 = scalar_select 0, %s21, %s19
  $region1: #{tpu_custom_call.1} parent=0
    #allocation5 [shape = 'u8[16384]{0}', space=vmem, size = 0x4000, scoped, tag = 'output window, operand 0']
    #allocation6 [shape = 's32[2]{0}', space=sflag, size = 0x8, scoped, tag = 'scoped memory for tpu_custom_call.1']
    #allocation7 [shape = 'u8[8192]{0}', space=vmem, size = 0x2000, scoped, tag = 'output window, operand 1']
    #allocation8 [shape = 's32[2]{0}', space=sflag, size = 0x8, scoped, tag = 'scoped memory for tpu_custom_call.1']
    %23 = vsyncpa [#allocation6], 0
    %s24 = scalar_lea.sflag [#allocation6], 1
    %25 = vsyncpa %s24, 0
    %26 = vsyncpa [#allocation8], 0
    %s27 = scalar_lea.sflag [#allocation8], 1
    %28 = vsyncpa %s27, 0
    loop: start=0, step=1, limit=4
    $region2: #{tpu_custom_call.1} parent=1 // loop_pre_header
      _
    $region3: #{tpu_custom_call.1} parent=1 // loop_header
      %s30 = sphi 0, %s34
      %p31 = scmp.ge.s32.totalorder %s30, 4
      %s40 = sphi 0, %s42
      %s43 = sphi 0, %s40
      %s44 = sphi 0, %s43
      %s60 = sphi 0, %s44
      %s66 = sphi 0, %s68
      %s69 = sphi 0, %s66
      %s70 = sphi 0, %s69
      %s86 = sphi 0, %s70
      %s90 = sphi 0, %s90
      %s92 = sphi 0, %s90
      %s93 = sphi 0, %s92
      %s107 = sphi 0, %s93
      %s111 = sphi 0, %s111
      %s113 = sphi 0, %s111
      %s114 = sphi 0, %s113
      %s128 = sphi 0, %s114
      %s132 = sphi 0, %s132
      %s134 = sphi 0, %s132
      %s135 = sphi 0, %s134
      %s149 = sphi 0, %s135
      %s153 = sphi 0, %s153
      %s155 = sphi 0, %s153
      %s156 = sphi 0, %s155
      %s170 = sphi 0, %s156
      %s174 = sphi 0, %s174
      %s176 = sphi 0, %s174
      %s177 = sphi 0, %s176
      %s191 = sphi 0, %s177
      %s195 = sphi 0, %s195
      %s197 = sphi 0, %s195
      %s198 = sphi 0, %s197
      %s212 = sphi 0, %s198
      %s216 = sphi 0, %s216
      %s218 = sphi 0, %s216
      %s219 = sphi 0, %s218
      %s233 = sphi 0, %s219
      %s237 = sphi 0, %s237
      %s239 = sphi 0, %s237
      %s240 = sphi 0, %s239
      %s254 = sphi 0, %s240
      %s258 = sphi 0, %s258
      %s260 = sphi 0, %s258
      %s261 = sphi 0, %s260
      %s275 = sphi 0, %s261
      %s279 = sphi 0, %s279
      %s281 = sphi 0, %s279
      %s282 = sphi 0, %s281
      %s296 = sphi 0, %s282
      %s300 = sphi 0, %s300
      %s302 = sphi 0, %s300
      %s303 = sphi 0, %s302
      %s317 = sphi 0, %s303
      %s321 = sphi 0, %s321
      %s323 = sphi 0, %s321
      %s324 = sphi 0, %s323
      %s338 = sphi 0, %s324
      %s342 = sphi 0, %s342
      %s344 = sphi 0, %s342
      %s345 = sphi 0, %s344
      %s359 = sphi 0, %s345
      %s363 = sphi 0, %s363
      %s365 = sphi 0, %s363
      %s366 = sphi 0, %s365
      %s380 = sphi 0, %s366
      %s386 = sphi 0, %s388
      %s389 = sphi 0, %s386
      %s390 = sphi 0, %s389
      %s406 = sphi 0, %s390
      %s412 = sphi 0, %s414
      %s415 = sphi 0, %s412
      %s416 = sphi 0, %s415
      %s432 = sphi 0, %s416
    $region4: #{tpu_custom_call.1} parent=1 // loop_header_branch
      %33 = sbr.rel (%p31) target = $region8
    $region5: #{tpu_custom_call.1} parent=1 // loop_body
      %s35 = ssub.s32 %s30, 1
      %s36 = ssub.s32 %s30, 2
      %s37 = sadd.s32 %s30, 1
      %s38 = ssub.s32 %s30, %s37
      %p39 = scmp.eq.s32.totalorder %s38, 0
      %s41 = sadd.s32 %s40, 1
      %s42 = scalar_select %p39, %s40, %s41
      %p45 = pneg %p39
      %p46 = scmp.eq.s32.totalorder %s30, 1
      %p47 = por %p45, %p46
      %p48 = scmp.ne.s32.totalorder %s40, %s43
      %p49 = scmp.eq.s32.totalorder %s30, 0
      %p50 = por %p48, %p49
      %p51 = scmp.ne.s32.totalorder %s40, %s43
      %p52 = scmp.eq.s32.totalorder %s35, 1
      %p53 = por %p51, %p52
      %p54 = scmp.ne.s32.totalorder %s43, %s44
      %p55 = scmp.eq.s32.totalorder %s35, 0
      %p56 = por %p54, %p55
      %p57 = scmp.ne.s32.totalorder %s43, %s44
      %p58 = scmp.eq.s32.totalorder %s36, 1
      %p59 = por %p57, %p58
      %p61 = scmp.ne.s32.totalorder %s44, %s60
      %p62 = scmp.eq.s32.totalorder %s36, 0
      %p63 = por %p61, %p62
      %s64 = ssub.s32 %s30, %s37
      %p65 = scmp.eq.s32.totalorder %s64, 0
      %s67 = sadd.s32 %s66, 1
      %s68 = scalar_select %p65, %s66, %s67
      %p71 = pneg %p65
      %p72 = scmp.eq.s32.totalorder %s30, 1
      %p73 = por %p71, %p72
      %p74 = scmp.ne.s32.totalorder %s66, %s69
      %p75 = scmp.eq.s32.totalorder %s30, 0
      %p76 = por %p74, %p75
      %p77 = scmp.ne.s32.totalorder %s66, %s69
      %p78 = scmp.eq.s32.totalorder %s35, 1
      %p79 = por %p77, %p78
      %p80 = scmp.ne.s32.totalorder %s69, %s70
      %p81 = scmp.eq.s32.totalorder %s35, 0
      %p82 = por %p80, %p81
      %p83 = scmp.ne.s32.totalorder %s69, %s70
      %p84 = scmp.eq.s32.totalorder %s36, 1
      %p85 = por %p83, %p84
      %p87 = scmp.ne.s32.totalorder %s70, %s86
      %p88 = scmp.eq.s32.totalorder %s36, 0
      %p89 = por %p87, %p88
      %s91 = sadd.s32 %s90, 1
      %p94 = scmp.eq.s32.totalorder %s30, 1
      %p95 = scmp.ne.s32.totalorder %s90, %s92
      %p96 = scmp.eq.s32.totalorder %s30, 0
      %p97 = por %p95, %p96
      %p98 = scmp.ne.s32.totalorder %s90, %s92
      %p99 = scmp.eq.s32.totalorder %s35, 1
      %p100 = por %p98, %p99
      %p101 = scmp.ne.s32.totalorder %s92, %s93
      %p102 = scmp.eq.s32.totalorder %s35, 0
      %p103 = por %p101, %p102
      %p104 = scmp.ne.s32.totalorder %s92, %s93
      %p105 = scmp.eq.s32.totalorder %s36, 1
      %p106 = por %p104, %p105
      %p108 = scmp.ne.s32.totalorder %s93, %s107
      %p109 = scmp.eq.s32.totalorder %s36, 0
      %p110 = por %p108, %p109
      %s112 = sadd.s32 %s111, 1
      %p115 = scmp.eq.s32.totalorder %s30, 1
      %p116 = scmp.ne.s32.totalorder %s111, %s113
      %p117 = scmp.eq.s32.totalorder %s30, 0
      %p118 = por %p116, %p117
      %p119 = scmp.ne.s32.totalorder %s111, %s113
      %p120 = scmp.eq.s32.totalorder %s35, 1
      %p121 = por %p119, %p120
      %p122 = scmp.ne.s32.totalorder %s113, %s114
      %p123 = scmp.eq.s32.totalorder %s35, 0
      %p124 = por %p122, %p123
      %p125 = scmp.ne.s32.totalorder %s113, %s114
      %p126 = scmp.eq.s32.totalorder %s36, 1
      %p127 = por %p125, %p126
      %p129 = scmp.ne.s32.totalorder %s114, %s128
      %p130 = scmp.eq.s32.totalorder %s36, 0
      %p131 = por %p129, %p130
      %s133 = sadd.s32 %s132, 1
      %p136 = scmp.eq.s32.totalorder %s30, 1
      %p137 = scmp.ne.s32.totalorder %s132, %s134
      %p138 = scmp.eq.s32.totalorder %s30, 0
      %p139 = por %p137, %p138
      %p140 = scmp.ne.s32.totalorder %s132, %s134
      %p141 = scmp.eq.s32.totalorder %s35, 1
      %p142 = por %p140, %p141
      %p143 = scmp.ne.s32.totalorder %s134, %s135
      %p144 = scmp.eq.s32.totalorder %s35, 0
      %p145 = por %p143, %p144
      %p146 = scmp.ne.s32.totalorder %s134, %s135
      %p147 = scmp.eq.s32.totalorder %s36, 1
      %p148 = por %p146, %p147
      %p150 = scmp.ne.s32.totalorder %s135, %s149
      %p151 = scmp.eq.s32.totalorder %s36, 0
      %p152 = por %p150, %p151
      %s154 = sadd.s32 %s153, 1
      %p157 = scmp.eq.s32.totalorder %s30, 1
      %p158 = scmp.ne.s32.totalorder %s153, %s155
      %p159 = scmp.eq.s32.totalorder %s30, 0
      %p160 = por %p158, %p159
      %p161 = scmp.ne.s32.totalorder %s153, %s155
      %p162 = scmp.eq.s32.totalorder %s35, 1
      %p163 = por %p161, %p162
      %p164 = scmp.ne.s32.totalorder %s155, %s156
      %p165 = scmp.eq.s32.totalorder %s35, 0
      %p166 = por %p164, %p165
      %p167 = scmp.ne.s32.totalorder %s155, %s156
      %p168 = scmp.eq.s32.totalorder %s36, 1
      %p169 = por %p167, %p168
      %p171 = scmp.ne.s32.totalorder %s156, %s170
      %p172 = scmp.eq.s32.totalorder %s36, 0
      %p173 = por %p171, %p172
      %s175 = sadd.s32 %s174, 1
      %p178 = scmp.eq.s32.totalorder %s30, 1
      %p179 = scmp.ne.s32.totalorder %s174, %s176
      %p180 = scmp.eq.s32.totalorder %s30, 0
      %p181 = por %p179, %p180
      %p182 = scmp.ne.s32.totalorder %s174, %s176
      %p183 = scmp.eq.s32.totalorder %s35, 1
      %p184 = por %p182, %p183
      %p185 = scmp.ne.s32.totalorder %s176, %s177
      %p186 = scmp.eq.s32.totalorder %s35, 0
      %p187 = por %p185, %p186
      %p188 = scmp.ne.s32.totalorder %s176, %s177
      %p189 = scmp.eq.s32.totalorder %s36, 1
      %p190 = por %p188, %p189
      %p192 = scmp.ne.s32.totalorder %s177, %s191
      %p193 = scmp.eq.s32.totalorder %s36, 0
      %p194 = por %p192, %p193
      %s196 = sadd.s32 %s195, 1
      %p199 = scmp.eq.s32.totalorder %s30, 1
      %p200 = scmp.ne.s32.totalorder %s195, %s197
      %p201 = scmp.eq.s32.totalorder %s30, 0
      %p202 = por %p200, %p201
      %p203 = scmp.ne.s32.totalorder %s195, %s197
      %p204 = scmp.eq.s32.totalorder %s35, 1
      %p205 = por %p203, %p204
      %p206 = scmp.ne.s32.totalorder %s197, %s198
      %p207 = scmp.eq.s32.totalorder %s35, 0
      %p208 = por %p206, %p207
      %p209 = scmp.ne.s32.totalorder %s197, %s198
      %p210 = scmp.eq.s32.totalorder %s36, 1
      %p211 = por %p209, %p210
      %p213 = scmp.ne.s32.totalorder %s198, %s212
      %p214 = scmp.eq.s32.totalorder %s36, 0
      %p215 = por %p213, %p214
      %s217 = sadd.s32 %s216, 1
      %p220 = scmp.eq.s32.totalorder %s30, 1
      %p221 = scmp.ne.s32.totalorder %s216, %s218
      %p222 = scmp.eq.s32.totalorder %s30, 0
      %p223 = por %p221, %p222
      %p224 = scmp.ne.s32.totalorder %s216, %s218
      %p225 = scmp.eq.s32.totalorder %s35, 1
      %p226 = por %p224, %p225
      %p227 = scmp.ne.s32.totalorder %s218, %s219
      %p228 = scmp.eq.s32.totalorder %s35, 0
      %p229 = por %p227, %p228
      %p230 = scmp.ne.s32.totalorder %s218, %s219
      %p231 = scmp.eq.s32.totalorder %s36, 1
      %p232 = por %p230, %p231
      %p234 = scmp.ne.s32.totalorder %s219, %s233
      %p235 = scmp.eq.s32.totalorder %s36, 0
      %p236 = por %p234, %p235
      %s238 = sadd.s32 %s237, 1
      %p241 = scmp.eq.s32.totalorder %s30, 1
      %p242 = scmp.ne.s32.totalorder %s237, %s239
      %p243 = scmp.eq.s32.totalorder %s30, 0
      %p244 = por %p242, %p243
      %p245 = scmp.ne.s32.totalorder %s237, %s239
      %p246 = scmp.eq.s32.totalorder %s35, 1
      %p247 = por %p245, %p246
      %p248 = scmp.ne.s32.totalorder %s239, %s240
      %p249 = scmp.eq.s32.totalorder %s35, 0
      %p250 = por %p248, %p249
      %p251 = scmp.ne.s32.totalorder %s239, %s240
      %p252 = scmp.eq.s32.totalorder %s36, 1
      %p253 = por %p251, %p252
      %p255 = scmp.ne.s32.totalorder %s240, %s254
      %p256 = scmp.eq.s32.totalorder %s36, 0
      %p257 = por %p255, %p256
      %s259 = sadd.s32 %s258, 1
      %p262 = scmp.eq.s32.totalorder %s30, 1
      %p263 = scmp.ne.s32.totalorder %s258, %s260
      %p264 = scmp.eq.s32.totalorder %s30, 0
      %p265 = por %p263, %p264
      %p266 = scmp.ne.s32.totalorder %s258, %s260
      %p267 = scmp.eq.s32.totalorder %s35, 1
      %p268 = por %p266, %p267
      %p269 = scmp.ne.s32.totalorder %s260, %s261
      %p270 = scmp.eq.s32.totalorder %s35, 0
      %p271 = por %p269, %p270
      %p272 = scmp.ne.s32.totalorder %s260, %s261
      %p273 = scmp.eq.s32.totalorder %s36, 1
      %p274 = por %p272, %p273
      %p276 = scmp.ne.s32.totalorder %s261, %s275
      %p277 = scmp.eq.s32.totalorder %s36, 0
      %p278 = por %p276, %p277
      %s280 = sadd.s32 %s279, 1
      %p283 = scmp.eq.s32.totalorder %s30, 1
      %p284 = scmp.ne.s32.totalorder %s279, %s281
      %p285 = scmp.eq.s32.totalorder %s30, 0
      %p286 = por %p284, %p285
      %p287 = scmp.ne.s32.totalorder %s279, %s281
      %p288 = scmp.eq.s32.totalorder %s35, 1
      %p289 = por %p287, %p288
      %p290 = scmp.ne.s32.totalorder %s281, %s282
      %p291 = scmp.eq.s32.totalorder %s35, 0
      %p292 = por %p290, %p291
      %p293 = scmp.ne.s32.totalorder %s281, %s282
      %p294 = scmp.eq.s32.totalorder %s36, 1
      %p295 = por %p293, %p294
      %p297 = scmp.ne.s32.totalorder %s282, %s296
      %p298 = scmp.eq.s32.totalorder %s36, 0
      %p299 = por %p297, %p298
      %s301 = sadd.s32 %s300, 1
      %p304 = scmp.eq.s32.totalorder %s30, 1
      %p305 = scmp.ne.s32.totalorder %s300, %s302
      %p306 = scmp.eq.s32.totalorder %s30, 0
      %p307 = por %p305, %p306
      %p308 = scmp.ne.s32.totalorder %s300, %s302
      %p309 = scmp.eq.s32.totalorder %s35, 1
      %p310 = por %p308, %p309
      %p311 = scmp.ne.s32.totalorder %s302, %s303
      %p312 = scmp.eq.s32.totalorder %s35, 0
      %p313 = por %p311, %p312
      %p314 = scmp.ne.s32.totalorder %s302, %s303
      %p315 = scmp.eq.s32.totalorder %s36, 1
      %p316 = por %p314, %p315
      %p318 = scmp.ne.s32.totalorder %s303, %s317
      %p319 = scmp.eq.s32.totalorder %s36, 0
      %p320 = por %p318, %p319
      %s322 = sadd.s32 %s321, 1
      %p325 = scmp.eq.s32.totalorder %s30, 1
      %p326 = scmp.ne.s32.totalorder %s321, %s323
      %p327 = scmp.eq.s32.totalorder %s30, 0
      %p328 = por %p326, %p327
      %p329 = scmp.ne.s32.totalorder %s321, %s323
      %p330 = scmp.eq.s32.totalorder %s35, 1
      %p331 = por %p329, %p330
      %p332 = scmp.ne.s32.totalorder %s323, %s324
      %p333 = scmp.eq.s32.totalorder %s35, 0
      %p334 = por %p332, %p333
      %p335 = scmp.ne.s32.totalorder %s323, %s324
      %p336 = scmp.eq.s32.totalorder %s36, 1
      %p337 = por %p335, %p336
      %p339 = scmp.ne.s32.totalorder %s324, %s338
      %p340 = scmp.eq.s32.totalorder %s36, 0
      %p341 = por %p339, %p340
      %s343 = sadd.s32 %s342, 1
      %p346 = scmp.eq.s32.totalorder %s30, 1
      %p347 = scmp.ne.s32.totalorder %s342, %s344
      %p348 = scmp.eq.s32.totalorder %s30, 0
      %p349 = por %p347, %p348
      %p350 = scmp.ne.s32.totalorder %s342, %s344
      %p351 = scmp.eq.s32.totalorder %s35, 1
      %p352 = por %p350, %p351
      %p353 = scmp.ne.s32.totalorder %s344, %s345
      %p354 = scmp.eq.s32.totalorder %s35, 0
      %p355 = por %p353, %p354
      %p356 = scmp.ne.s32.totalorder %s344, %s345
      %p357 = scmp.eq.s32.totalorder %s36, 1
      %p358 = por %p356, %p357
      %p360 = scmp.ne.s32.totalorder %s345, %s359
      %p361 = scmp.eq.s32.totalorder %s36, 0
      %p362 = por %p360, %p361
      %s364 = sadd.s32 %s363, 1
      %p367 = scmp.eq.s32.totalorder %s30, 1
      %p368 = scmp.ne.s32.totalorder %s363, %s365
      %p369 = scmp.eq.s32.totalorder %s30, 0
      %p370 = por %p368, %p369
      %p371 = scmp.ne.s32.totalorder %s363, %s365
      %p372 = scmp.eq.s32.totalorder %s35, 1
      %p373 = por %p371, %p372
      %p374 = scmp.ne.s32.totalorder %s365, %s366
      %p375 = scmp.eq.s32.totalorder %s35, 0
      %p376 = por %p374, %p375
      %p377 = scmp.ne.s32.totalorder %s365, %s366
      %p378 = scmp.eq.s32.totalorder %s36, 1
      %p379 = por %p377, %p378
      %p381 = scmp.ne.s32.totalorder %s366, %s380
      %p382 = scmp.eq.s32.totalorder %s36, 0
      %p383 = por %p381, %p382
      %s384 = ssub.s32 %s30, %s37
      %p385 = scmp.eq.s32.totalorder %s384, 0
      %s387 = sadd.s32 %s386, 1
      %s388 = scalar_select %p385, %s386, %s387
      %p391 = pneg %p385
      %p392 = scmp.eq.s32.totalorder %s30, 1
      %p393 = por %p391, %p392
      %p394 = scmp.ne.s32.totalorder %s386, %s389
      %p395 = scmp.eq.s32.totalorder %s30, 0
      %p396 = por %p394, %p395
      %p397 = scmp.ne.s32.totalorder %s386, %s389
      %p398 = scmp.eq.s32.totalorder %s35, 1
      %p399 = por %p397, %p398
      %p400 = scmp.ne.s32.totalorder %s389, %s390
      %p401 = scmp.eq.s32.totalorder %s35, 0
      %p402 = por %p400, %p401
      %p403 = scmp.ne.s32.totalorder %s389, %s390
      %p404 = scmp.eq.s32.totalorder %s36, 1
      %p405 = por %p403, %p404
      %p407 = scmp.ne.s32.totalorder %s390, %s406
      %p408 = scmp.eq.s32.totalorder %s36, 0
      %p409 = por %p407, %p408
      %s410 = ssub.s32 %s30, %s37
      %p411 = scmp.eq.s32.totalorder %s410, 0
      %s413 = sadd.s32 %s412, 1
      %s414 = scalar_select %p411, %s412, %s413
      %p417 = pneg %p411
      %p418 = scmp.eq.s32.totalorder %s30, 1
      %p419 = por %p417, %p418
      %p420 = scmp.ne.s32.totalorder %s412, %s415
      %p421 = scmp.eq.s32.totalorder %s30, 0
      %p422 = por %p420, %p421
      %p423 = scmp.ne.s32.totalorder %s412, %s415
      %p424 = scmp.eq.s32.totalorder %s35, 1
      %p425 = por %p423, %p424
      %p426 = scmp.ne.s32.totalorder %s415, %s416
      %p427 = scmp.eq.s32.totalorder %s35, 0
      %p428 = por %p426, %p427
      %p429 = scmp.ne.s32.totalorder %s415, %s416
      %p430 = scmp.eq.s32.totalorder %s36, 1
      %p431 = por %p429, %p430
      %p433 = scmp.ne.s32.totalorder %s416, %s432
      %p434 = scmp.eq.s32.totalorder %s36, 0
      %p435 = por %p433, %p434
      %p436 = scmp.le.s32.totalorder 1, %s30
      %p437 = scmp.lt.s32.totalorder %s30, 3
      %p438 = pnand %p436, %p437
      %p439 = pneg %p438
      // Predicated region
      $region9: #{tpu_custom_call.1} parent=5 // pred_check
        _
      $region10: #{tpu_custom_call.1} parent=5 // pred_check_branch
        %441 = sbr.rel (%p438) target = $region12
      $region11: #{tpu_custom_call.1} parent=5 // pred_region
        %s442 = ssub.s32 %s30, 1
        // Predicated region
        $region13: #{tpu_custom_call.1} parent=11 // pred_check
          %p443 = pneg %p103
        $region14: #{tpu_custom_call.1} parent=11 // pred_check_branch
          %445 = sbr.rel (%p443) target = $region16
        $region15: #{tpu_custom_call.1} parent=11 // pred_region
          _
        $region16: #{tpu_custom_call.1} parent=11 // pred_fallthru
          _
        // Predicated region
        $region17: #{tpu_custom_call.1} parent=11 // pred_check
          %p446 = pneg %p124
        $region18: #{tpu_custom_call.1} parent=11 // pred_check_branch
          %448 = sbr.rel (%p446) target = $region20
        $region19: #{tpu_custom_call.1} parent=11 // pred_region
          _
        $region20: #{tpu_custom_call.1} parent=11 // pred_fallthru
          _
        // Predicated region
        $region21: #{tpu_custom_call.1} parent=11 // pred_check
          %p449 = pneg %p145
        $region22: #{tpu_custom_call.1} parent=11 // pred_check_branch
          %451 = sbr.rel (%p449) target = $region24
        $region23: #{tpu_custom_call.1} parent=11 // pred_region
          _
        $region24: #{tpu_custom_call.1} parent=11 // pred_fallthru
          _
        // Predicated region
        $region25: #{tpu_custom_call.1} parent=11 // pred_check
          %p452 = pneg %p166
        $region26: #{tpu_custom_call.1} parent=11 // pred_check_branch
          %454 = sbr.rel (%p452) target = $region28
        $region27: #{tpu_custom_call.1} parent=11 // pred_region
          _
        $region28: #{tpu_custom_call.1} parent=11 // pred_fallthru
          _
        // Predicated region
        $region29: #{tpu_custom_call.1} parent=11 // pred_check
          %p455 = pneg %p187
        $region30: #{tpu_custom_call.1} parent=11 // pred_check_branch
          %457 = sbr.rel (%p455) target = $region32
        $region31: #{tpu_custom_call.1} parent=11 // pred_region
          _
        $region32: #{tpu_custom_call.1} parent=11 // pred_fallthru
          _
        // Predicated region
        $region33: #{tpu_custom_call.1} parent=11 // pred_check
          %p458 = pneg %p208
        $region34: #{tpu_custom_call.1} parent=11 // pred_check_branch
          %460 = sbr.rel (%p458) target = $region36
        $region35: #{tpu_custom_call.1} parent=11 // pred_region
          _
        $region36: #{tpu_custom_call.1} parent=11 // pred_fallthru
          _
        // Predicated region
        $region37: #{tpu_custom_call.1} parent=11 // pred_check
          %p461 = pneg %p229
        $region38: #{tpu_custom_call.1} parent=11 // pred_check_branch
          %463 = sbr.rel (%p461) target = $region40
        $region39: #{tpu_custom_call.1} parent=11 // pred_region
          _
        $region40: #{tpu_custom_call.1} parent=11 // pred_fallthru
          _
        // Predicated region
        $region41: #{tpu_custom_call.1} parent=11 // pred_check
          %p464 = pneg %p250
        $region42: #{tpu_custom_call.1} parent=11 // pred_check_branch
          %466 = sbr.rel (%p464) target = $region44
        $region43: #{tpu_custom_call.1} parent=11 // pred_region
          _
        $region44: #{tpu_custom_call.1} parent=11 // pred_fallthru
          _
        // Predicated region
        $region45: #{tpu_custom_call.1} parent=11 // pred_check
          %p467 = pneg %p271
        $region46: #{tpu_custom_call.1} parent=11 // pred_check_branch
          %469 = sbr.rel (%p467) target = $region48
        $region47: #{tpu_custom_call.1} parent=11 // pred_region
          _
        $region48: #{tpu_custom_call.1} parent=11 // pred_fallthru
          _
        // Predicated region
        $region49: #{tpu_custom_call.1} parent=11 // pred_check
          %p470 = pneg %p292
        $region50: #{tpu_custom_call.1} parent=11 // pred_check_branch
          %472 = sbr.rel (%p470) target = $region52
        $region51: #{tpu_custom_call.1} parent=11 // pred_region
          _
        $region52: #{tpu_custom_call.1} parent=11 // pred_fallthru
          _
        // Predicated region
        $region53: #{tpu_custom_call.1} parent=11 // pred_check
          %p473 = pneg %p313
        $region54: #{tpu_custom_call.1} parent=11 // pred_check_branch
          %475 = sbr.rel (%p473) target = $region56
        $region55: #{tpu_custom_call.1} parent=11 // pred_region
          _
        $region56: #{tpu_custom_call.1} parent=11 // pred_fallthru
          _
        // Predicated region
        $region57: #{tpu_custom_call.1} parent=11 // pred_check
          %p476 = pneg %p334
        $region58: #{tpu_custom_call.1} parent=11 // pred_check_branch
          %478 = sbr.rel (%p476) target = $region60
        $region59: #{tpu_custom_call.1} parent=11 // pred_region
          _
        $region60: #{tpu_custom_call.1} parent=11 // pred_fallthru
          _
        // Predicated region
        $region61: #{tpu_custom_call.1} parent=11 // pred_check
          %p479 = pneg %p355
        $region62: #{tpu_custom_call.1} parent=11 // pred_check_branch
          %481 = sbr.rel (%p479) target = $region64
        $region63: #{tpu_custom_call.1} parent=11 // pred_region
          _
        $region64: #{tpu_custom_call.1} parent=11 // pred_fallthru
          _
        // Predicated region
        $region65: #{tpu_custom_call.1} parent=11 // pred_check
          %p482 = pneg %p376
        $region66: #{tpu_custom_call.1} parent=11 // pred_check_branch
          %484 = sbr.rel (%p482) target = $region68
        $region67: #{tpu_custom_call.1} parent=11 // pred_region
          _
        $region68: #{tpu_custom_call.1} parent=11 // pred_fallthru
          _
      $region12: #{tpu_custom_call.1} parent=5 // pred_fallthru
        _
      %p485 = scmp.lt.s32.totalorder %s30, 2
      // Predicated region
      $region69: #{tpu_custom_call.1} parent=5 // pred_check
        %p486 = pneg %p485
      $region70: #{tpu_custom_call.1} parent=5 // pred_check_branch
        %488 = sbr.rel (%p486) target = $region72
      $region71: #{tpu_custom_call.1} parent=5 // pred_region
        // Predicated region
        $region73: #{tpu_custom_call.1} parent=71 // pred_check
          %p489 = pneg %p50
        $region74: #{tpu_custom_call.1} parent=71 // pred_check_branch
          %491 = sbr.rel (%p489) target = $region76
        $region75: #{tpu_custom_call.1} parent=71 // pred_region
          %p492 = scmp.lt.s32.totalorder %s30, 1
          %s493 = scalar_select %p492, %s30, 1
          %s494 = smul.addr %s493, 2
          %s495 = smul.addr %s494, 8
          %s496 = scalar_lea.vmem %s0, %s495
        $region76: #{tpu_custom_call.1} parent=71 // pred_fallthru
          _
        // Predicated region
        $region77: #{tpu_custom_call.1} parent=71 // pred_check
          %p497 = pneg %p76
        $region78: #{tpu_custom_call.1} parent=71 // pred_check_branch
          %499 = sbr.rel (%p497) target = $region80
        $region79: #{tpu_custom_call.1} parent=71 // pred_region
          %p500 = scmp.lt.s32.totalorder %s30, 1
          %s501 = scalar_select %p500, %s30, 1
          %s502 = scalar_lea.vmem %s1, %s501
        $region80: #{tpu_custom_call.1} parent=71 // pred_fallthru
          _
      $region72: #{tpu_custom_call.1} parent=5 // pred_fallthru
        _
      %p503 = scmp.le.s32.totalorder 1, %s30
      %p504 = scmp.lt.s32.totalorder %s30, 3
      %p505 = pnand %p503, %p504
      %p506 = pneg %p505
      // Predicated region
      $region81: #{tpu_custom_call.1} parent=5 // pred_check
        _
      $region82: #{tpu_custom_call.1} parent=5 // pred_check_branch
        %508 = sbr.rel (%p505) target = $region84
      $region83: #{tpu_custom_call.1} parent=5 // pred_region
        %s509 = ssub.s32 %s30, 1
        %p510 = scmp.lt.s32.totalorder %s35, 1
        %s511 = scalar_select %p510, %s35, 1
        %s512 = smul.addr %s511, 2
        %s513 = smul.addr %s512, 8
        %s514 = scalar_lea.vmem %s0, %s513
        %p515 = pneg %p56
        %p516 = pneg %p53
        %p517 = scmp.lt.s32.totalorder %s35, 1
        %s518 = scalar_select %p517, %s35, 1
        %s519 = scalar_lea.vmem %s1, %s518
        %p520 = pneg %p82
        %p521 = pneg %p79
        %p522 = pneg %p103
        %p523 = pneg %p100
        %p524 = pneg %p124
        %p525 = pneg %p121
        %p526 = pneg %p145
        %p527 = pneg %p142
        %p528 = pneg %p166
        %p529 = pneg %p163
        %p530 = pneg %p187
        %p531 = pneg %p184
        %p532 = pneg %p208
        %p533 = pneg %p205
        %p534 = pneg %p229
        %p535 = pneg %p226
        %p536 = pneg %p250
        %p537 = pneg %p247
        %p538 = pneg %p271
        %p539 = pneg %p268
        %p540 = pneg %p292
        %p541 = pneg %p289
        %p542 = pneg %p313
        %p543 = pneg %p310
        %p544 = pneg %p334
        %p545 = pneg %p331
        %p546 = pneg %p355
        %p547 = pneg %p352
        %p548 = pneg %p376
        %p549 = pneg %p373
        %p550 = pneg %p402
        %p551 = pneg %p399
        %s552 = sand.u32 %s389, 1
        %s553 = scalar_lea.sflag [#allocation6], %s552
        %s554 = sand.u32 %s389, 1
        %s555 = smul.addr %s554, 16
        %s556 = scalar_lea.vmem [#allocation5], %s555
        %p557 = pneg %p428
        %p558 = pneg %p425
        %s559 = sand.u32 %s415, 1
        %s560 = scalar_lea.sflag [#allocation8], %s559
        %s561 = sand.u32 %s415, 1
        %s562 = smul.addr %s561, 8
        %s563 = scalar_lea.vmem [#allocation7], %s562
        %p564 = scmp.lt.s32.totalorder %s35, 1
        %s565 = scalar_select %p564, %s35, 1
        %s566 = smul.addr %s565, 2
        %s567 = smul.addr %s566, 8
        %s568 = scalar_lea.vmem %s0, %s567
        %p569 = scmp.lt.s32.totalorder %s35, 1
        %s570 = scalar_select %p569, %s35, 1
        %s571 = scalar_lea.vmem %s1, %s570
        %v573 = vld [vmem:[%s568] sm:$0xff]
        %v574 = vld [vmem:[%s568 + $0x8] sm:$0xff]
        %v575 = vld [vmem:[%s2] sm:$0xff]
        %v576 = vld [vmem:[%s2 + $0x8] sm:$0xff]
        %v577 = vld [vmem:[%s3] sm:$0xff]
        %vm578 = vcmask 122880
        %579 = vst.msk [vmem:[#allocation2] sm:$0x1] %vm578, 0
        %vm580 = vcmask 123905
        %581 = vst.msk [vmem:[#allocation2 + $0x8] sm:$0x2] %vm580, 0
        %582 = vst.msk [vmem:[#allocation3] sm:$0x1] %vm578, 0
        %583 = vst.msk [vmem:[#allocation3 + $0x8] sm:$0x2] %vm580, 0
        %vm584 = vcmask 123904
        %585 = vst.msk [vmem:[#allocation4] sm:$0x3] %vm584, 0.0
        %v586 = vld [vmem:[%s571] sm:$0x1]
        %v587 = vmin.f32 %v586, 20.0
        %v588 = vmul.f32 %v587, 1.442695
        %v589 = vpow.pop %v588
        %v590 = vadd.f32 %v589, 2.0
        %v591 = vmul.f32 %v589, %v590
        %v592 = vmul.f32 %v586, %v591
        %v593 = vadd.f32 %v591, 2.0
        %v594 = vrcp.pop %v593
        %v595 = vmul.f32 %v592, %v594
        %v596 = vpack.c.bf16 %v595, %v595
        %v597 = vld [vmem:[%s4] sm:$0xf]
        %v598 = vld [vmem:[%s4 + $0x4] sm:$0xf]
        %v599 = vld [vmem:[%s4 + $0x8] sm:$0xf]
        %v600 = vld [vmem:[%s4 + $0xc] sm:$0xf]
        %v605 = vunpack.c.l.b16 %v597
        %v606 = vunpack.c.l.b16 %v598
        %v607 = vunpack.c.l.b16 %v599
        %v608 = vunpack.c.l.b16 %v600
        %v609 = vpack.c.b16 %v606, %v605
        %v610 = vpack.c.b16 %v608, %v607
        %vm613 = vcmask 261120
        %v615 = vsel %vm613, %v596, 0
        %617 = vmatprep.subr.bf16.mxu0 0
        %618 = vmatpush1.bf16.msra.mxu0 %v609
        %619 = vmatprep.subr.bf16.mxu0 0
        %620 = vmatpush1.bf16.msra.mxu0 %v610
        %621 = vmatprep.subr.bf16.mxu0 0
        %622 = vmatpush1.bf16.msra.mxu0 0
        %623 = vmatprep.subr.bf16.mxu0 0
        %624 = vmatpush1.bf16.msra.mxu0 0
        %625 = vmatprep.subr.bf16.mxu0 0
        %626 = vmatpush1.bf16.msra.mxu0 0
        %627 = vmatprep.subr.bf16.mxu0 0
        %628 = vmatpush1.bf16.msra.mxu0 0
        %629 = vmatprep.subr.bf16.mxu0 0
        %630 = vmatpush1.bf16.msra.mxu0 0
        %631 = vmatprep.subr.bf16.mxu0 0
        %632 = vmatpush1.bf16.msra.mxu0 0
        %633 = vmatprep.subr.bf16.mxu0 0
        %634 = vmatpush1.bf16.msra.mxu0 0
        %635 = vmatprep.subr.bf16.mxu0 0
        %636 = vmatpush1.bf16.msra.mxu0 0
        %637 = vmatprep.subr.bf16.mxu0 0
        %638 = vmatpush1.bf16.msra.mxu0 0
        %639 = vmatprep.subr.bf16.mxu0 0
        %640 = vmatpush1.bf16.msra.mxu0 0
        %641 = vmatprep.subr.bf16.mxu0 0
        %642 = vmatpush1.bf16.msra.mxu0 0
        %643 = vmatprep.subr.bf16.mxu0 0
        %644 = vmatpush1.bf16.msra.mxu0 0
        %645 = vmatprep.subr.bf16.mxu0 0
        %646 = vmatpush1.bf16.msra.mxu0 0
        %647 = vmatprep.subr.bf16.mxu0 0
        %648 = vmatpush1.bf16.msra.mxu0 0
        %649 = vmatprep.mubr.bf16.mxu0 0
        %650 = vmatmul.mubr.bf16.gmra.mrb[0].mxu0 %v615
        %v651 = vpop.f32.mrb[0].mxu0
        %v652 = vadd.f32 0.0, %v651
        %v653 = vpop.f32.mrb[0].mxu0
        %v654 = vpop.f32.mrb[0].mxu0
        %v655 = vpop.f32.mrb[0].mxu0
        %656 = vdwg.mxu0
        %v657 = vpack.c.bf16 %v574, %v573
        %v659 = vunpack.c.l.b16 %v657
        %v660 = vunpack.c.h.b16 %v657
        %v661 = vpack.c.b16 %v659, %v659
        %v662 = vpack.c.b16 %v660, %v660
        %vm663 = vcmask 1040384
        %vm664 = vcmask 1044484
        %vm665 = vmor %vm663, %vm664
        %v666 = vrot.slane %v661, 7
        %v667 = vrot.slane %v666, 4
        %v668 = vrot.slane %v662, 7
        %v669 = vsel %vm665, %v667, %v668
        %v670 = vrot.slane %v668, 4
        %vm674 = vcmask 125953
        %675 = vst.msk [vmem:[#allocation2] sm:$0xe] %vm674, %v666
        %vm676 = vcmask 125952
        %677 = vst.msk [vmem:[#allocation2 + $0x4] sm:$0xf] %vm676, %v669
        %678 = vst.msk [vmem:[#allocation2 + $0x8] sm:$0x1] %vm578, %v670
        %v679 = vld [vmem:[%s5] sm:$0x1]
        %v680 = vadd.f32 %v652, %v679
        %v681 = vld [vmem:[%s6] sm:$0xf]
        %v682 = vld [vmem:[%s6 + $0x4] sm:$0xf]
        %v683 = vld [vmem:[%s6 + $0x8] sm:$0xf]
        %v684 = vld [vmem:[%s6 + $0xc] sm:$0xf]
        %v685 = vld [vmem:[%s6 + $0x10] sm:$0xf]
        %v686 = vld [vmem:[%s6 + $0x14] sm:$0xf]
        %v687 = vld [vmem:[%s6 + $0x18] sm:$0xf]
        %v688 = vld [vmem:[%s6 + $0x1c] sm:$0xf]
        %v689 = vld [vmem:[%s6 + $0x20] sm:$0xf]
        %v690 = vld [vmem:[%s6 + $0x24] sm:$0xf]
        %v691 = vld [vmem:[%s7] sm:$0x1]
        %v692 = vld [vmem:[#allocation2] sm:$0xf]
        %v693 = vld [vmem:[#allocation2 + $0x4] sm:$0xf]
        %v694 = vld [vmem:[#allocation2 + $0x8] sm:$0x1]
        %v695 = vld [vmem:[#allocation2] sm:$0xe]
        %v696 = vld [vmem:[#allocation2 + $0x8] sm:$0x3]
        %v697 = vld [vmem:[#allocation2] sm:$0xc]
        %v700 = vunpack.c.l.b16 %v692
        %v701 = vunpack.c.l.b16 %v693
        %v702 = vpack.c.b16 %v701, %v700
        %v704 = vunpack.c.l.b16 %v694
        %v705 = vpack.c.b16 %v704, %v704
        %vm706 = vsmask.f32 7424
        %v708 = vshrl.u32 %v702, 16
        %v710 = vshll.u32 %v702, 16
        %v712 = vrot.slane %v710, 1
        %v713 = vor.u32 %v708, %v712
        %v715 = vshll.u32 %v705, 16
        %v717 = vrot.slane %v715, 1
        %v718 = vsel %vm706, %v713, %v717
        %719 = vrot.lane.b32.xlu0 %v718, 16
        %v720 = vpop.permute.xlu0 %719
        %v722 = vunpack.c.l.b16 %v695
        %v723 = vpack.c.b16 %v701, %v722
        %vm724 = vcmask 1046528
        %v725 = vrot.slane %v723, 1
        %v726 = vrot.slane %v705, 1
        %v727 = vsel %vm724, %v725, %v726
        %728 = vrot.lane.b32.xlu0 %v727, 32
        %v729 = vpop.permute.xlu0 %728
        %v731 = vunpack.c.l.b16 %v696
        %v732 = vpack.c.b16 %v731, %v731
        %vm733 = vsmask.f32 6400
        %v735 = vshrl.u32 %v723, 16
        %v737 = vrot.slane %v735, 1
        %v738 = vshll.u32 %v723, 16
        %v740 = vrot.slane %v738, 2
        %v741 = vor.u32 %v737, %v740
        %v743 = vshrl.u32 %v732, 16
        %v745 = vrot.slane %v743, 1
        %v746 = vshll.u32 %v732, 16
        %v748 = vrot.slane %v746, 2
        %v749 = vor.u32 %v745, %v748
        %v750 = vsel %vm733, %v741, %v749
        %751 = vrot.lane.b32.xlu0 %v750, 48
        %v752 = vpop.permute.xlu0 %751
        %v754 = vunpack.c.l.b16 %v697
        %v755 = vpack.c.b16 %v701, %v754
        %vm756 = vcmask 1045504
        %v757 = vrot.slane %v755, 2
        %v758 = vrot.slane %v732, 2
        %v759 = vsel %vm756, %v757, %v758
        %760 = vrot.lane.b32.xlu0 %v759, 64
        %v761 = vpop.permute.xlu0 %760
        %vm762 = vcmask 130048
        %v764 = vsel %vm762, %v702, %v720
        %v766 = vsel %vm613, %v764, %v729
        %vm767 = vcmask 392192
        %v769 = vsel %vm767, %v766, %v752
        %vm770 = vcmask 523264
        %v772 = vsel %vm770, %v769, %v761
        %v774 = vlaneseq
        %v775 = vshrl.u32 %v774, 7
        %v776 = vsub.s32 0, %v775
        %v777 = vrot.slane %v691, %v776
        %v789 = vunpack.c.l.b16 %v681
        %v790 = vunpack.c.l.b16 %v682
        %v791 = vunpack.c.l.b16 %v683
        %v792 = vunpack.c.l.b16 %v684
        %v793 = vunpack.c.l.b16 %v685
        %v794 = vunpack.c.l.b16 %v686
        %v795 = vunpack.c.l.b16 %v687
        %v796 = vunpack.c.l.b16 %v688
        %v797 = vunpack.c.l.b16 %v689
        %v798 = vunpack.c.l.b16 %v690
        %v799 = vpack.c.b16 %v790, %v789
        %v800 = vpack.c.b16 %v792, %v791
        %v801 = vpack.c.b16 %v794, %v793
        %v802 = vpack.c.b16 %v796, %v795
        %v803 = vpack.c.b16 %v798, %v797
        %vm809 = vcmask 654336
        %v810 = vsel %vm809, %v772, 0
        %812 = vmatprep.subr.bf16.mxu0 0
        %813 = vmatpush1.bf16.msra.mxu0 %v799
        %814 = vmatprep.subr.bf16.mxu0 0
        %815 = vmatpush1.bf16.msra.mxu0 %v800
        %816 = vmatprep.subr.bf16.mxu0 0
        %817 = vmatpush1.bf16.msra.mxu0 %v801
        %818 = vmatprep.subr.bf16.mxu0 0
        %819 = vmatpush1.bf16.msra.mxu0 %v802
        %820 = vmatprep.subr.bf16.mxu0 0
        %821 = vmatpush1.bf16.msra.mxu0 %v803
        %822 = vmatprep.subr.bf16.mxu0 0
        %823 = vmatpush1.bf16.msra.mxu0 0
        %824 = vmatprep.subr.bf16.mxu0 0
        %825 = vmatpush1.bf16.msra.mxu0 0
        %826 = vmatprep.subr.bf16.mxu0 0
        %827 = vmatpush1.bf16.msra.mxu0 0
        %828 = vmatprep.subr.bf16.mxu0 0
        %829 = vmatpush1.bf16.msra.mxu0 0
        %830 = vmatprep.subr.bf16.mxu0 0
        %831 = vmatpush1.bf16.msra.mxu0 0
        %832 = vmatprep.subr.bf16.mxu0 0
        %833 = vmatpush1.bf16.msra.mxu0 0
        %834 = vmatprep.subr.bf16.mxu0 0
        %835 = vmatpush1.bf16.msra.mxu0 0
        %836 = vmatprep.subr.bf16.mxu0 0
        %837 = vmatpush1.bf16.msra.mxu0 0
        %838 = vmatprep.subr.bf16.mxu0 0
        %839 = vmatpush1.bf16.msra.mxu0 0
        %840 = vmatprep.subr.bf16.mxu0 0
        %841 = vmatpush1.bf16.msra.mxu0 0
        %842 = vmatprep.subr.bf16.mxu0 0
        %843 = vmatpush1.bf16.msra.mxu0 0
        %844 = vmatprep.mubr.bf16.mxu0 0
        %845 = vmatmul.mubr.bf16.gmra.mrb[0].mxu0 %v810
        %v846 = vpop.f32.mrb[0].mxu0
        %v847 = vadd.f32 %v777, %v846
        %v848 = vpop.f32.mrb[0].mxu0
        %v849 = vpop.f32.mrb[0].mxu0
        %v850 = vadd.f32 %v777, %v849
        %v851 = vpop.f32.mrb[0].mxu0
        %852 = vdwg.mxu0
        %v853 = vld [vmem:[%s8] sm:$0x1]
        %v854 = vld [vmem:[%s9] sm:$0x1]
        %v855 = vsel %vm762, %v847, 0.0
        %v856 = vsel %vm762, %v850, 0.0
        %v857 = vadd.f32 %v855, %v856
        %v858 = vrot.slane %v857, 4
        %v859 = vadd.f32 %v857, %v858
        %v860 = vrot.slane %v859, 2
        %v861 = vadd.f32 %v859, %v860
        %v862 = vrot.slane %v861, 1
        %v863 = vadd.f32 %v861, %v862
        %v864 = vmul.f32 %v847, %v847
        %v865 = vmul.f32 %v850, %v850
        %v866 = vsel %vm762, %v864, 0.0
        %v867 = vsel %vm762, %v865, 0.0
        %v868 = vadd.f32 %v866, %v867
        %v869 = vrot.slane %v868, 4
        %v870 = vadd.f32 %v868, %v869
        %v871 = vrot.slane %v870, 2
        %v872 = vadd.f32 %v870, %v871
        %v873 = vrot.slane %v872, 1
        %v874 = vadd.f32 %v872, %v873
        %vm875 = vcmask 1040384
        %v876 = vsel %vm875, %v863, %v874
        %v878 = vsel %vm762, %v876, 0
        %880 = vmatprep.subr.mxu0 0.0
        %881 = vmatpush1.msra.mxu0 %v575
        %882 = vmatprep.subr.mxu0 0.0
        %883 = vmatpush1.msra.mxu0 %v576
        %884 = vmatprep.subr.mxu0 0.0
        %885 = vmatpush1.msra.mxu0 0.0
        %886 = vmatprep.subr.mxu0 0.0
        %887 = vmatpush1.msra.mxu0 0.0
        %888 = vmatprep.subr.mxu0 0.0
        %889 = vmatpush1.msra.mxu0 0.0
        %890 = vmatprep.subr.mxu0 0.0
        %891 = vmatpush1.msra.mxu0 0.0
        %892 = vmatprep.subr.mxu0 0.0
        %893 = vmatpush1.msra.mxu0 0.0
        %894 = vmatprep.subr.mxu0 0.0
        %895 = vmatpush1.msra.mxu0 0.0
        %896 = vmatprep.subr.mxu0 0.0
        %897 = vmatpush1.msra.mxu0 0.0
        %898 = vmatprep.subr.mxu0 0.0
        %899 = vmatpush1.msra.mxu0 0.0
        %900 = vmatprep.subr.mxu0 0.0
        %901 = vmatpush1.msra.mxu0 0.0
        %902 = vmatprep.subr.mxu0 0.0
        %903 = vmatpush1.msra.mxu0 0.0
        %904 = vmatprep.subr.mxu0 0.0
        %905 = vmatpush1.msra.mxu0 0.0
        %906 = vmatprep.subr.mxu0 0.0
        %907 = vmatpush1.msra.mxu0 0.0
        %908 = vmatprep.subr.mxu0 0.0
        %909 = vmatpush1.msra.mxu0 0.0
        %910 = vmatprep.subr.mxu0 0.0
        %911 = vmatpush1.msra.mxu0 0.0
        %912 = vmatprep.subr.mxu0 0.0
        %913 = vmatpush1.msra.mxu0 0.0
        %914 = vmatprep.subr.mxu0 0.0
        %915 = vmatpush1.msra.mxu0 0.0
        %916 = vmatprep.subr.mxu0 0.0
        %917 = vmatpush1.msra.mxu0 0.0
        %918 = vmatprep.subr.mxu0 0.0
        %919 = vmatpush1.msra.mxu0 0.0
        %920 = vmatprep.subr.mxu0 0.0
        %921 = vmatpush1.msra.mxu0 0.0
        %922 = vmatprep.subr.mxu0 0.0
        %923 = vmatpush1.msra.mxu0 0.0
        %924 = vmatprep.subr.mxu0 0.0
        %925 = vmatpush1.msra.mxu0 0.0
        %926 = vmatprep.subr.mxu0 0.0
        %927 = vmatpush1.msra.mxu0 0.0
        %928 = vmatprep.subr.mxu0 0.0
        %929 = vmatpush1.msra.mxu0 0.0
        %930 = vmatprep.subr.mxu0 0.0
        %931 = vmatpush1.msra.mxu0 0.0
        %932 = vmatprep.subr.mxu0 0.0
        %933 = vmatpush1.msra.mxu0 0.0
        %934 = vmatprep.subr.mxu0 0.0
        %935 = vmatpush1.msra.mxu0 0.0
        %936 = vmatprep.subr.mxu0 0.0
        %937 = vmatpush1.msra.mxu0 0.0
        %938 = vmatprep.subr.mxu0 0.0
        %939 = vmatpush1.msra.mxu0 0.0
        %940 = vmatprep.subr.mxu0 0.0
        %941 = vmatpush1.msra.mxu0 0.0
        %942 = vmatprep.subr.mxu0 0.0
        %943 = vmatpush1.msra.mxu0 0.0
        %944 = vmatprep.mubr.f32.mxu0 0.0
        %945 = vmatmul.mubr.f32.gmra.mrb[0].mxu0 %v878
        %v946 = vpop.f32.mrb[0].mxu0
        %v947 = vadd.f32 0.0, %v946
        %v948 = vpop.f32.mrb[0].mxu0
        %949 = vdwg.mxu0
        %v950 = vmul.f32 %v947, 0.03125
        %vm951 = vcmask 64512
        %v953 = vsel %vm951, %v950, 0
        %955 = vmatprep.subr.mxu0 0.0
        %956 = vmatpush1.msra.mxu0 %v577
        %957 = vmatprep.subr.mxu0 0.0
        %958 = vmatpush1.msra.mxu0 0.0
        %959 = vmatprep.subr.mxu0 0.0
        %960 = vmatpush1.msra.mxu0 0.0
        %961 = vmatprep.subr.mxu0 0.0
        %962 = vmatpush1.msra.mxu0 0.0
        %963 = vmatprep.subr.mxu0 0.0
        %964 = vmatpush1.msra.mxu0 0.0
        %965 = vmatprep.subr.mxu0 0.0
        %966 = vmatpush1.msra.mxu0 0.0
        %967 = vmatprep.subr.mxu0 0.0
        %968 = vmatpush1.msra.mxu0 0.0
        %969 = vmatprep.subr.mxu0 0.0
        %970 = vmatpush1.msra.mxu0 0.0
        %971 = vmatprep.subr.mxu0 0.0
        %972 = vmatpush1.msra.mxu0 0.0
        %973 = vmatprep.subr.mxu0 0.0
        %974 = vmatpush1.msra.mxu0 0.0
        %975 = vmatprep.subr.mxu0 0.0
        %976 = vmatpush1.msra.mxu0 0.0
        %977 = vmatprep.subr.mxu0 0.0
        %978 = vmatpush1.msra.mxu0 0.0
        %979 = vmatprep.subr.mxu0 0.0
        %980 = vmatpush1.msra.mxu0 0.0
        %981 = vmatprep.subr.mxu0 0.0
        %982 = vmatpush1.msra.mxu0 0.0
        %983 = vmatprep.subr.mxu0 0.0
        %984 = vmatpush1.msra.mxu0 0.0
        %985 = vmatprep.subr.mxu0 0.0
        %986 = vmatpush1.msra.mxu0 0.0
        %987 = vmatprep.subr.mxu0 0.0
        %988 = vmatpush1.msra.mxu0 0.0
        %989 = vmatprep.subr.mxu0 0.0
        %990 = vmatpush1.msra.mxu0 0.0
        %991 = vmatprep.subr.mxu0 0.0
        %992 = vmatpush1.msra.mxu0 0.0
        %993 = vmatprep.subr.mxu0 0.0
        %994 = vmatpush1.msra.mxu0 0.0
        %995 = vmatprep.subr.mxu0 0.0
        %996 = vmatpush1.msra.mxu0 0.0
        %997 = vmatprep.subr.mxu0 0.0
        %998 = vmatpush1.msra.mxu0 0.0
        %999 = vmatprep.subr.mxu0 0.0
        %1000 = vmatpush1.msra.mxu0 0.0
        %1001 = vmatprep.subr.mxu0 0.0
        %1002 = vmatpush1.msra.mxu0 0.0
        %1003 = vmatprep.subr.mxu0 0.0
        %1004 = vmatpush1.msra.mxu0 0.0
        %1005 = vmatprep.subr.mxu0 0.0
        %1006 = vmatpush1.msra.mxu0 0.0
        %1007 = vmatprep.subr.mxu0 0.0
        %1008 = vmatpush1.msra.mxu0 0.0
        %1009 = vmatprep.subr.mxu0 0.0
        %1010 = vmatpush1.msra.mxu0 0.0
        %1011 = vmatprep.subr.mxu0 0.0
        %1012 = vmatpush1.msra.mxu0 0.0
        %1013 = vmatprep.subr.mxu0 0.0
        %1014 = vmatpush1.msra.mxu0 0.0
        %1015 = vmatprep.subr.mxu0 0.0
        %1016 = vmatpush1.msra.mxu0 0.0
        %1017 = vmatprep.subr.mxu0 0.0
        %1018 = vmatpush1.msra.mxu0 0.0
        %1019 = vmatprep.mubr.f32.mxu0 0.0
        %1020 = vmatmul.mubr.f32.gmra.mrb[0].mxu0 %v953
        %v1021 = vpop.f32.mrb[0].mxu0
        %v1022 = vadd.f32 0.0, %v1021
        %v1023 = vpop.f32.mrb[0].mxu0
        %1024 = vdwg.mxu0
        %v1025 = vmul.f32 %v1022, %v1022
        %v1027 = vrot.slane %v1025, 7
        %v1029 = vsub.f32 %v1022, %v1027
        %v1030 = vmax.f32 %v1029, 0.0
        %v1031 = vadd.f32 %v1030, 1e-05
        %v1032 = vrsqrt.pop %v1031
        %v1034 = vlaneseq
        %v1035 = vshrl.u32 %v1034, 7
        %v1036 = vsub.s32 0, %v1035
        %v1037 = vrot.slane %v853, %v1036
        %v1039 = vmul.f32 %v1032, %v1037
        %v1040 = vlaneseq
        %v1041 = vshrl.u32 %v1040, 7
        %v1042 = vsub.s32 1, %v1041
        %v1043 = vrot.slane %v1039, %v1042
        %v1044 = vmul.f32 %v847, %v1043
        %v1045 = vmul.f32 %v850, %v1043
        %v1047 = vrot.slane %v1039, 1
        %v1049 = vmul.f32 %v1022, %v1047
        %v1050 = vsub.f32 %v854, %v1049
        %v1052 = vlaneseq
        %v1053 = vshrl.u32 %v1052, 7
        %v1054 = vsub.s32 0, %v1053
        %v1055 = vrot.slane %v1050, %v1054
        %v1057 = vadd.f32 %v1044, %v1055
        %v1058 = vadd.f32 %v1045, %v1055
        %v1059 = vmin.f32 %v1057, 20.0
        %v1060 = vmin.f32 %v1058, 20.0
        %v1061 = vmul.f32 %v1059, 1.442695
        %v1062 = vpow.pop %v1061
        %v1063 = vmul.f32 %v1060, 1.442695
        %v1064 = vpow.pop %v1063
        %v1065 = vadd.f32 %v1062, 2.0
        %v1066 = vadd.f32 %v1064, 2.0
        %v1067 = vmul.f32 %v1062, %v1065
        %v1068 = vmul.f32 %v1064, %v1066
        %v1069 = vmul.f32 %v1057, %v1067
        %v1070 = vmul.f32 %v1058, %v1068
        %v1071 = vadd.f32 %v1067, 2.0
        %v1072 = vadd.f32 %v1068, 2.0
        %v1073 = vrcp.pop %v1071
        %v1074 = vrcp.pop %v1072
        %v1075 = vmul.f32 %v1069, %v1073
        %v1076 = vmul.f32 %v1070, %v1074
        %v1077 = vlaneseq
        %v1078 = vshrl.u32 %v1077, 7
        %v1079 = vsub.s32 0, %v1078
        %v1080 = vrot.slane %v680, %v1079
        %v1081 = vadd.f32 %v1075, %v1080
        %v1082 = vadd.f32 %v1076, %v1080
        %v1083 = vpack.c.bf16 %v1082, %v1081
        %v1085 = vunpack.c.l.b16 %v1083
        %v1086 = vunpack.c.h.b16 %v1083
        %v1087 = vpack.c.b16 %v1085, %v1085
        %v1088 = vpack.c.b16 %v1086, %v1086
        %v1089 = vrot.slane %v1087, 7
        %v1090 = vrot.slane %v1089, 4
        %v1091 = vrot.slane %v1088, 7
        %v1092 = vsel %vm665, %v1090, %v1091
        %v1093 = vrot.slane %v1091, 4
        %1097 = vst.msk [vmem:[#allocation3] sm:$0xe] %vm674, %v1089
        %1098 = vst.msk [vmem:[#allocation3 + $0x4] sm:$0xf] %vm676, %v1092
        %1099 = vst.msk [vmem:[#allocation3 + $0x8] sm:$0x1] %vm578, %v1093
        %v1100 = vld [vmem:[%s10] sm:$0xf]
        %v1101 = vld [vmem:[%s10 + $0x4] sm:$0xf]
        %v1102 = vld [vmem:[%s10 + $0x8] sm:$0xf]
        %v1103 = vld [vmem:[%s10 + $0xc] sm:$0xf]
        %v1104 = vld [vmem:[%s10 + $0x10] sm:$0xf]
        %v1105 = vld [vmem:[%s10 + $0x14] sm:$0xf]
        %v1106 = vld [vmem:[%s10 + $0x18] sm:$0xf]
        %v1107 = vld [vmem:[%s10 + $0x1c] sm:$0xf]
        %v1108 = vld [vmem:[%s10 + $0x20] sm:$0xf]
        %v1109 = vld [vmem:[%s10 + $0x24] sm:$0xf]
        %v1110 = vld [vmem:[%s11] sm:$0x1]
        %v1111 = vld [vmem:[#allocation3] sm:$0xf]
        %v1112 = vld [vmem:[#allocation3 + $0x4] sm:$0xf]
        %v1113 = vld [vmem:[#allocation3 + $0x8] sm:$0x1]
        %v1114 = vld [vmem:[#allocation3] sm:$0xe]
        %v1115 = vld [vmem:[#allocation3 + $0x8] sm:$0x3]
        %v1116 = vld [vmem:[#allocation3] sm:$0xc]
        %v1119 = vunpack.c.l.b16 %v1111
        %v1120 = vunpack.c.l.b16 %v1112
        %v1121 = vpack.c.b16 %v1120, %v1119
        %v1123 = vunpack.c.l.b16 %v1113
        %v1124 = vpack.c.b16 %v1123, %v1123
        %v1126 = vshrl.u32 %v1121, 16
        %v1128 = vshll.u32 %v1121, 16
        %v1130 = vrot.slane %v1128, 1
        %v1131 = vor.u32 %v1126, %v1130
        %v1133 = vshll.u32 %v1124, 16
        %v1135 = vrot.slane %v1133, 1
        %v1136 = vsel %vm706, %v1131, %v1135
        %1137 = vrot.lane.b32.xlu0 %v1136, 16
        %v1138 = vpop.permute.xlu0 %1137
        %v1140 = vunpack.c.l.b16 %v1114
        %v1141 = vpack.c.b16 %v1120, %v1140
        %v1142 = vrot.slane %v1141, 1
        %v1143 = vrot.slane %v1124, 1
        %v1144 = vsel %vm724, %v1142, %v1143
        %1145 = vrot.lane.b32.xlu0 %v1144, 32
        %v1146 = vpop.permute.xlu0 %1145
        %v1148 = vunpack.c.l.b16 %v1115
        %v1149 = vpack.c.b16 %v1148, %v1148
        %v1151 = vshrl.u32 %v1141, 16
        %v1153 = vrot.slane %v1151, 1
        %v1154 = vshll.u32 %v1141, 16
        %v1156 = vrot.slane %v1154, 2
        %v1157 = vor.u32 %v1153, %v1156
        %v1159 = vshrl.u32 %v1149, 16
        %v1161 = vrot.slane %v1159, 1
        %v1162 = vshll.u32 %v1149, 16
        %v1164 = vrot.slane %v1162, 2
        %v1165 = vor.u32 %v1161, %v1164
        %v1166 = vsel %vm733, %v1157, %v1165
        %1167 = vrot.lane.b32.xlu0 %v1166, 48
        %v1168 = vpop.permute.xlu0 %1167
        %v1170 = vunpack.c.l.b16 %v1116
        %v1171 = vpack.c.b16 %v1120, %v1170
        %v1172 = vrot.slane %v1171, 2
        %v1173 = vrot.slane %v1149, 2
        %v1174 = vsel %vm756, %v1172, %v1173
        %1175 = vrot.lane.b32.xlu0 %v1174, 64
        %v1176 = vpop.permute.xlu0 %1175
        %v1178 = vsel %vm762, %v1121, %v1138
        %v1180 = vsel %vm613, %v1178, %v1146
        %v1182 = vsel %vm767, %v1180, %v1168
        %v1184 = vsel %vm770, %v1182, %v1176
        %v1186 = vlaneseq
        %v1187 = vshrl.u32 %v1186, 7
        %v1188 = vsub.s32 0, %v1187
        %v1189 = vrot.slane %v1110, %v1188
        %v1201 = vunpack.c.l.b16 %v1100
        %v1202 = vunpack.c.l.b16 %v1101
        %v1203 = vunpack.c.l.b16 %v1102
        %v1204 = vunpack.c.l.b16 %v1103
        %v1205 = vunpack.c.l.b16 %v1104
        %v1206 = vunpack.c.l.b16 %v1105
        %v1207 = vunpack.c.l.b16 %v1106
        %v1208 = vunpack.c.l.b16 %v1107
        %v1209 = vunpack.c.l.b16 %v1108
        %v1210 = vunpack.c.l.b16 %v1109
        %v1211 = vpack.c.b16 %v1202, %v1201
        %v1212 = vpack.c.b16 %v1204, %v1203
        %v1213 = vpack.c.b16 %v1206, %v1205
        %v1214 = vpack.c.b16 %v1208, %v1207
        %v1215 = vpack.c.b16 %v1210, %v1209
        %v1221 = vsel %vm809, %v1184, 0
        %1223 = vmatprep.subr.bf16.mxu0 0
        %1224 = vmatpush1.bf16.msra.mxu0 %v1211
        %1225 = vmatprep.subr.bf16.mxu0 0
        %1226 = vmatpush1.bf16.msra.mxu0 %v1212
        %1227 = vmatprep.subr.bf16.mxu0 0
        %1228 = vmatpush1.bf16.msra.mxu0 %v1213
        %1229 = vmatprep.subr.bf16.mxu0 0
        %1230 = vmatpush1.bf16.msra.mxu0 %v1214
        %1231 = vmatprep.subr.bf16.mxu0 0
        %1232 = vmatpush1.bf16.msra.mxu0 %v1215
        %1233 = vmatprep.subr.bf16.mxu0 0
        %1234 = vmatpush1.bf16.msra.mxu0 0
        %1235 = vmatprep.subr.bf16.mxu0 0
        %1236 = vmatpush1.bf16.msra.mxu0 0
        %1237 = vmatprep.subr.bf16.mxu0 0
        %1238 = vmatpush1.bf16.msra.mxu0 0
        %1239 = vmatprep.subr.bf16.mxu0 0
        %1240 = vmatpush1.bf16.msra.mxu0 0
        %1241 = vmatprep.subr.bf16.mxu0 0
        %1242 = vmatpush1.bf16.msra.mxu0 0
        %1243 = vmatprep.subr.bf16.mxu0 0
        %1244 = vmatpush1.bf16.msra.mxu0 0
        %1245 = vmatprep.subr.bf16.mxu0 0
        %1246 = vmatpush1.bf16.msra.mxu0 0
        %1247 = vmatprep.subr.bf16.mxu0 0
        %1248 = vmatpush1.bf16.msra.mxu0 0
        %1249 = vmatprep.subr.bf16.mxu0 0
        %1250 = vmatpush1.bf16.msra.mxu0 0
        %1251 = vmatprep.subr.bf16.mxu0 0
        %1252 = vmatpush1.bf16.msra.mxu0 0
        %1253 = vmatprep.subr.bf16.mxu0 0
        %1254 = vmatpush1.bf16.msra.mxu0 0
        %1255 = vmatprep.mubr.bf16.mxu0 0
        %1256 = vmatmul.mubr.bf16.gmra.mrb[0].mxu0 %v1221
        %v1257 = vpop.f32.mrb[0].mxu0
        %v1258 = vadd.f32 %v1189, %v1257
        %v1259 = vpop.f32.mrb[0].mxu0
        %v1260 = vpop.f32.mrb[0].mxu0
        %v1261 = vadd.f32 %v1189, %v1260
        %v1262 = vpop.f32.mrb[0].mxu0
        %1263 = vdwg.mxu0
        %v1264 = vld [vmem:[%s12] sm:$0x1]
        %v1265 = vld [vmem:[%s13] sm:$0x1]
        %v1266 = vsel %vm762, %v1258, 0.0
        %v1267 = vsel %vm762, %v1261, 0.0
        %v1268 = vadd.f32 %v1266, %v1267
        %v1269 = vrot.slane %v1268, 4
        %v1270 = vadd.f32 %v1268, %v1269
        %v1271 = vrot.slane %v1270, 2
        %v1272 = vadd.f32 %v1270, %v1271
        %v1273 = vrot.slane %v1272, 1
        %v1274 = vadd.f32 %v1272, %v1273
        %v1275 = vmul.f32 %v1258, %v1258
        %v1276 = vmul.f32 %v1261, %v1261
        %v1277 = vsel %vm762, %v1275, 0.0
        %v1278 = vsel %vm762, %v1276, 0.0
        %v1279 = vadd.f32 %v1277, %v1278
        %v1280 = vrot.slane %v1279, 4
        %v1281 = vadd.f32 %v1279, %v1280
        %v1282 = vrot.slane %v1281, 2
        %v1283 = vadd.f32 %v1281, %v1282
        %v1284 = vrot.slane %v1283, 1
        %v1285 = vadd.f32 %v1283, %v1284
        %v1286 = vsel %vm875, %v1274, %v1285
        %v1288 = vsel %vm762, %v1286, 0
        %1290 = vmatprep.subr.mxu0 0.0
        %1291 = vmatpush1.msra.mxu0 %v575
        %1292 = vmatprep.subr.mxu0 0.0
        %1293 = vmatpush1.msra.mxu0 %v576
        %1294 = vmatprep.subr.mxu0 0.0
        %1295 = vmatpush1.msra.mxu0 0.0
        %1296 = vmatprep.subr.mxu0 0.0
        %1297 = vmatpush1.msra.mxu0 0.0
        %1298 = vmatprep.subr.mxu0 0.0
        %1299 = vmatpush1.msra.mxu0 0.0
        %1300 = vmatprep.subr.mxu0 0.0
        %1301 = vmatpush1.msra.mxu0 0.0
        %1302 = vmatprep.subr.mxu0 0.0
        %1303 = vmatpush1.msra.mxu0 0.0
        %1304 = vmatprep.subr.mxu0 0.0
        %1305 = vmatpush1.msra.mxu0 0.0
        %1306 = vmatprep.subr.mxu0 0.0
        %1307 = vmatpush1.msra.mxu0 0.0
        %1308 = vmatprep.subr.mxu0 0.0
        %1309 = vmatpush1.msra.mxu0 0.0
        %1310 = vmatprep.subr.mxu0 0.0
        %1311 = vmatpush1.msra.mxu0 0.0
        %1312 = vmatprep.subr.mxu0 0.0
        %1313 = vmatpush1.msra.mxu0 0.0
        %1314 = vmatprep.subr.mxu0 0.0
        %1315 = vmatpush1.msra.mxu0 0.0
        %1316 = vmatprep.subr.mxu0 0.0
        %1317 = vmatpush1.msra.mxu0 0.0
        %1318 = vmatprep.subr.mxu0 0.0
        %1319 = vmatpush1.msra.mxu0 0.0
        %1320 = vmatprep.subr.mxu0 0.0
        %1321 = vmatpush1.msra.mxu0 0.0
        %1322 = vmatprep.subr.mxu0 0.0
        %1323 = vmatpush1.msra.mxu0 0.0
        %1324 = vmatprep.subr.mxu0 0.0
        %1325 = vmatpush1.msra.mxu0 0.0
        %1326 = vmatprep.subr.mxu0 0.0
        %1327 = vmatpush1.msra.mxu0 0.0
        %1328 = vmatprep.subr.mxu0 0.0
        %1329 = vmatpush1.msra.mxu0 0.0
        %1330 = vmatprep.subr.mxu0 0.0
        %1331 = vmatpush1.msra.mxu0 0.0
        %1332 = vmatprep.subr.mxu0 0.0
        %1333 = vmatpush1.msra.mxu0 0.0
        %1334 = vmatprep.subr.mxu0 0.0
        %1335 = vmatpush1.msra.mxu0 0.0
        %1336 = vmatprep.subr.mxu0 0.0
        %1337 = vmatpush1.msra.mxu0 0.0
        %1338 = vmatprep.subr.mxu0 0.0
        %1339 = vmatpush1.msra.mxu0 0.0
        %1340 = vmatprep.subr.mxu0 0.0
        %1341 = vmatpush1.msra.mxu0 0.0
        %1342 = vmatprep.subr.mxu0 0.0
        %1343 = vmatpush1.msra.mxu0 0.0
        %1344 = vmatprep.subr.mxu0 0.0
        %1345 = vmatpush1.msra.mxu0 0.0
        %1346 = vmatprep.subr.mxu0 0.0
        %1347 = vmatpush1.msra.mxu0 0.0
        %1348 = vmatprep.subr.mxu0 0.0
        %1349 = vmatpush1.msra.mxu0 0.0
        %1350 = vmatprep.subr.mxu0 0.0
        %1351 = vmatpush1.msra.mxu0 0.0
        %1352 = vmatprep.subr.mxu0 0.0
        %1353 = vmatpush1.msra.mxu0 0.0
        %1354 = vmatprep.mubr.f32.mxu0 0.0
        %1355 = vmatmul.mubr.f32.gmra.mrb[0].mxu0 %v1288
        %v1356 = vpop.f32.mrb[0].mxu0
        %v1357 = vadd.f32 0.0, %v1356
        %v1358 = vpop.f32.mrb[0].mxu0
        %1359 = vdwg.mxu0
        %v1360 = vmul.f32 %v1357, 0.03125
        %v1362 = vsel %vm951, %v1360, 0
        %1364 = vmatprep.subr.mxu0 0.0
        %1365 = vmatpush1.msra.mxu0 %v577
        %1366 = vmatprep.subr.mxu0 0.0
        %1367 = vmatpush1.msra.mxu0 0.0
        %1368 = vmatprep.subr.mxu0 0.0
        %1369 = vmatpush1.msra.mxu0 0.0
        %1370 = vmatprep.subr.mxu0 0.0
        %1371 = vmatpush1.msra.mxu0 0.0
        %1372 = vmatprep.subr.mxu0 0.0
        %1373 = vmatpush1.msra.mxu0 0.0
        %1374 = vmatprep.subr.mxu0 0.0
        %1375 = vmatpush1.msra.mxu0 0.0
        %1376 = vmatprep.subr.mxu0 0.0
        %1377 = vmatpush1.msra.mxu0 0.0
        %1378 = vmatprep.subr.mxu0 0.0
        %1379 = vmatpush1.msra.mxu0 0.0
        %1380 = vmatprep.subr.mxu0 0.0
        %1381 = vmatpush1.msra.mxu0 0.0
        %1382 = vmatprep.subr.mxu0 0.0
        %1383 = vmatpush1.msra.mxu0 0.0
        %1384 = vmatprep.subr.mxu0 0.0
        %1385 = vmatpush1.msra.mxu0 0.0
        %1386 = vmatprep.subr.mxu0 0.0
        %1387 = vmatpush1.msra.mxu0 0.0
        %1388 = vmatprep.subr.mxu0 0.0
        %1389 = vmatpush1.msra.mxu0 0.0
        %1390 = vmatprep.subr.mxu0 0.0
        %1391 = vmatpush1.msra.mxu0 0.0
        %1392 = vmatprep.subr.mxu0 0.0
        %1393 = vmatpush1.msra.mxu0 0.0
        %1394 = vmatprep.subr.mxu0 0.0
        %1395 = vmatpush1.msra.mxu0 0.0
        %1396 = vmatprep.subr.mxu0 0.0
        %1397 = vmatpush1.msra.mxu0 0.0
        %1398 = vmatprep.subr.mxu0 0.0
        %1399 = vmatpush1.msra.mxu0 0.0
        %1400 = vmatprep.subr.mxu0 0.0
        %1401 = vmatpush1.msra.mxu0 0.0
        %1402 = vmatprep.subr.mxu0 0.0
        %1403 = vmatpush1.msra.mxu0 0.0
        %1404 = vmatprep.subr.mxu0 0.0
        %1405 = vmatpush1.msra.mxu0 0.0
        %1406 = vmatprep.subr.mxu0 0.0
        %1407 = vmatpush1.msra.mxu0 0.0
        %1408 = vmatprep.subr.mxu0 0.0
        %1409 = vmatpush1.msra.mxu0 0.0
        %1410 = vmatprep.subr.mxu0 0.0
        %1411 = vmatpush1.msra.mxu0 0.0
        %1412 = vmatprep.subr.mxu0 0.0
        %1413 = vmatpush1.msra.mxu0 0.0
        %1414 = vmatprep.subr.mxu0 0.0
        %1415 = vmatpush1.msra.mxu0 0.0
        %1416 = vmatprep.subr.mxu0 0.0
        %1417 = vmatpush1.msra.mxu0 0.0
        %1418 = vmatprep.subr.mxu0 0.0
        %1419 = vmatpush1.msra.mxu0 0.0
        %1420 = vmatprep.subr.mxu0 0.0
        %1421 = vmatpush1.msra.mxu0 0.0
        %1422 = vmatprep.subr.mxu0 0.0
        %1423 = vmatpush1.msra.mxu0 0.0
        %1424 = vmatprep.subr.mxu0 0.0
        %1425 = vmatpush1.msra.mxu0 0.0
        %1426 = vmatprep.subr.mxu0 0.0
        %1427 = vmatpush1.msra.mxu0 0.0
        %1428 = vmatprep.mubr.f32.mxu0 0.0
        %1429 = vmatmul.mubr.f32.gmra.mrb[0].mxu0 %v1362
        %v1430 = vpop.f32.mrb[0].mxu0
        %v1431 = vadd.f32 0.0, %v1430
        %v1432 = vpop.f32.mrb[0].mxu0
        %1433 = vdwg.mxu0
        %v1434 = vmul.f32 %v1431, %v1431
        %v1436 = vrot.slane %v1434, 7
        %v1438 = vsub.f32 %v1431, %v1436
        %v1439 = vmax.f32 %v1438, 0.0
        %v1440 = vadd.f32 %v1439, 1e-05
        %v1441 = vrsqrt.pop %v1440
        %v1443 = vlaneseq
        %v1444 = vshrl.u32 %v1443, 7
        %v1445 = vsub.s32 0, %v1444
        %v1446 = vrot.slane %v1264, %v1445
        %v1448 = vmul.f32 %v1441, %v1446
        %v1449 = vlaneseq
        %v1450 = vshrl.u32 %v1449, 7
        %v1451 = vsub.s32 1, %v1450
        %v1452 = vrot.slane %v1448, %v1451
        %v1453 = vmul.f32 %v1258, %v1452
        %v1454 = vmul.f32 %v1261, %v1452
        %v1456 = vrot.slane %v1448, 1
        %v1458 = vmul.f32 %v1431, %v1456
        %v1459 = vsub.f32 %v1265, %v1458
        %v1461 = vlaneseq
        %v1462 = vshrl.u32 %v1461, 7
        %v1463 = vsub.s32 0, %v1462
        %v1464 = vrot.slane %v1459, %v1463
        %v1466 = vadd.f32 %v1453, %v1464
        %v1467 = vadd.f32 %v1454, %v1464
        %v1468 = vmin.f32 %v1466, 20.0
        %v1469 = vmin.f32 %v1467, 20.0
        %v1470 = vmul.f32 %v1468, 1.442695
        %v1471 = vpow.pop %v1470
        %v1472 = vmul.f32 %v1469, 1.442695
        %v1473 = vpow.pop %v1472
        %v1474 = vadd.f32 %v1471, 2.0
        %v1475 = vadd.f32 %v1473, 2.0
        %v1476 = vmul.f32 %v1471, %v1474
        %v1477 = vmul.f32 %v1473, %v1475
        %v1478 = vmul.f32 %v1466, %v1476
        %v1479 = vmul.f32 %v1467, %v1477
        %v1480 = vadd.f32 %v1476, 2.0
        %v1481 = vadd.f32 %v1477, 2.0
        %v1482 = vrcp.pop %v1480
        %v1483 = vrcp.pop %v1481
        %v1484 = vmul.f32 %v1478, %v1482
        %v1485 = vmul.f32 %v1479, %v1483
        %v1486 = vadd.f32 %v1484, %v573
        %v1487 = vadd.f32 %v1485, %v574
        %v1488 = vpack.c.bf16 %v1487, %v1486
        %v1490 = vunpack.c.l.b16 %v1488
        %v1491 = vunpack.c.h.b16 %v1488
        %v1492 = vpack.c.b16 %v1490, %v1490
        %v1493 = vpack.c.b16 %v1491, %v1491
        %v1494 = vrot.slane %v1492, 7
        %v1495 = vrot.slane %v1494, 4
        %v1496 = vrot.slane %v1493, 7
        %v1497 = vsel %vm665, %v1495, %v1496
        %v1498 = vrot.slane %v1496, 4
        %1502 = vst.msk [vmem:[#allocation2] sm:$0xe] %vm674, %v1494
        %1503 = vst.msk [vmem:[#allocation2 + $0x4] sm:$0xf] %vm676, %v1497
        %1504 = vst.msk [vmem:[#allocation2 + $0x8] sm:$0x1] %vm578, %v1498
        %s1505 = scalar_lea.vmem %s5, 1
        %v1506 = vld [vmem:[%s1505] sm:$0x1]
        %v1508 = vlaneseq
        %v1509 = vshrl.u32 %v1508, 7
        %v1510 = vsub.s32 0, %v1509
        %v1511 = vrot.slane %v1506, %v1510
        %1512 = vrot.lane.b32.xlu0 %v1511, 16
        %v1513 = vpop.permute.xlu0 %1512
        %v1515 = vadd.f32 %v652, %v1513
        %s1516 = scalar_lea.vmem %s6, 40
        %v1517 = vld [vmem:[%s1516] sm:$0xf]
        %v1518 = vld [vmem:[%s1516 + $0x4] sm:$0xf]
        %v1519 = vld [vmem:[%s1516 + $0x8] sm:$0xf]
        %v1520 = vld [vmem:[%s1516 + $0xc] sm:$0xf]
        %v1521 = vld [vmem:[%s1516 + $0x10] sm:$0xf]
        %v1522 = vld [vmem:[%s1516 + $0x14] sm:$0xf]
        %v1523 = vld [vmem:[%s1516 + $0x18] sm:$0xf]
        %v1524 = vld [vmem:[%s1516 + $0x1c] sm:$0xf]
        %v1525 = vld [vmem:[%s1516 + $0x20] sm:$0xf]
        %v1526 = vld [vmem:[%s1516 + $0x24] sm:$0xf]
        %s1527 = scalar_lea.vmem %s7, 1
        %v1528 = vld [vmem:[%s1527] sm:$0x1]
        %v1529 = vld [vmem:[#allocation2] sm:$0xf]
        %v1530 = vld [vmem:[#allocation2 + $0x4] sm:$0xf]
        %v1531 = vld [vmem:[#allocation2 + $0x8] sm:$0x1]
        %v1532 = vld [vmem:[#allocation2] sm:$0xe]
        %v1533 = vld [vmem:[#allocation2 + $0x8] sm:$0x3]
        %v1534 = vld [vmem:[#allocation2] sm:$0xc]
        %v1537 = vunpack.c.l.b16 %v1529
        %v1538 = vunpack.c.l.b16 %v1530
        %v1539 = vpack.c.b16 %v1538, %v1537
        %v1541 = vunpack.c.l.b16 %v1531
        %v1542 = vpack.c.b16 %v1541, %v1541
        %v1544 = vshrl.u32 %v1539, 16
        %v1546 = vshll.u32 %v1539, 16
        %v1548 = vrot.slane %v1546, 1
        %v1549 = vor.u32 %v1544, %v1548
        %v1551 = vshll.u32 %v1542, 16
        %v1553 = vrot.slane %v1551, 1
        %v1554 = vsel %vm706, %v1549, %v1553
        %1555 = vrot.lane.b32.xlu0 %v1554, 16
        %v1556 = vpop.permute.xlu0 %1555
        %v1558 = vunpack.c.l.b16 %v1532
        %v1559 = vpack.c.b16 %v1538, %v1558
        %v1560 = vrot.slane %v1559, 1
        %v1561 = vrot.slane %v1542, 1
        %v1562 = vsel %vm724, %v1560, %v1561
        %1563 = vrot.lane.b32.xlu0 %v1562, 32
        %v1564 = vpop.permute.xlu0 %1563
        %v1566 = vunpack.c.l.b16 %v1533
        %v1567 = vpack.c.b16 %v1566, %v1566
        %v1569 = vshrl.u32 %v1559, 16
        %v1571 = vrot.slane %v1569, 1
        %v1572 = vshll.u32 %v1559, 16
        %v1574 = vrot.slane %v1572, 2
        %v1575 = vor.u32 %v1571, %v1574
        %v1577 = vshrl.u32 %v1567, 16
        %v1579 = vrot.slane %v1577, 1
        %v1580 = vshll.u32 %v1567, 16
        %v1582 = vrot.slane %v1580, 2
        %v1583 = vor.u32 %v1579, %v1582
        %v1584 = vsel %vm733, %v1575, %v1583
        %1585 = vrot.lane.b32.xlu0 %v1584, 48
        %v1586 = vpop.permute.xlu0 %1585
        %v1588 = vunpack.c.l.b16 %v1534
        %v1589 = vpack.c.b16 %v1538, %v1588
        %v1590 = vrot.slane %v1589, 2
        %v1591 = vrot.slane %v1567, 2
        %v1592 = vsel %vm756, %v1590, %v1591
        %1593 = vrot.lane.b32.xlu0 %v1592, 64
        %v1594 = vpop.permute.xlu0 %1593
        %v1596 = vsel %vm762, %v1539, %v1556
        %v1598 = vsel %vm613, %v1596, %v1564
        %v1600 = vsel %vm767, %v1598, %v1586
        %v1602 = vsel %vm770, %v1600, %v1594
        %v1604 = vlaneseq
        %v1605 = vshrl.u32 %v1604, 7
        %v1606 = vsub.s32 0, %v1605
        %v1607 = vrot.slane %v1528, %v1606
        %v1619 = vunpack.c.l.b16 %v1517
        %v1620 = vunpack.c.l.b16 %v1518
        %v1621 = vunpack.c.l.b16 %v1519
        %v1622 = vunpack.c.l.b16 %v1520
        %v1623 = vunpack.c.l.b16 %v1521
        %v1624 = vunpack.c.l.b16 %v1522
        %v1625 = vunpack.c.l.b16 %v1523
        %v1626 = vunpack.c.l.b16 %v1524
        %v1627 = vunpack.c.l.b16 %v1525
        %v1628 = vunpack.c.l.b16 %v1526
        %v1629 = vpack.c.b16 %v1620, %v1619
        %v1630 = vpack.c.b16 %v1622, %v1621
        %v1631 = vpack.c.b16 %v1624, %v1623
        %v1632 = vpack.c.b16 %v1626, %v1625
        %v1633 = vpack.c.b16 %v1628, %v1627
        %v1639 = vsel %vm809, %v1602, 0
        %1641 = vmatprep.subr.bf16.mxu0 0
        %1642 = vmatpush1.bf16.msra.mxu0 %v1629
        %1643 = vmatprep.subr.bf16.mxu0 0
        %1644 = vmatpush1.bf16.msra.mxu0 %v1630
        %1645 = vmatprep.subr.bf16.mxu0 0
        %1646 = vmatpush1.bf16.msra.mxu0 %v1631
        %1647 = vmatprep.subr.bf16.mxu0 0
        %1648 = vmatpush1.bf16.msra.mxu0 %v1632
        %1649 = vmatprep.subr.bf16.mxu0 0
        %1650 = vmatpush1.bf16.msra.mxu0 %v1633
        %1651 = vmatprep.subr.bf16.mxu0 0
        %1652 = vmatpush1.bf16.msra.mxu0 0
        %1653 = vmatprep.subr.bf16.mxu0 0
        %1654 = vmatpush1.bf16.msra.mxu0 0
        %1655 = vmatprep.subr.bf16.mxu0 0
        %1656 = vmatpush1.bf16.msra.mxu0 0
        %1657 = vmatprep.subr.bf16.mxu0 0
        %1658 = vmatpush1.bf16.msra.mxu0 0
        %1659 = vmatprep.subr.bf16.mxu0 0
        %1660 = vmatpush1.bf16.msra.mxu0 0
        %1661 = vmatprep.subr.bf16.mxu0 0
        %1662 = vmatpush1.bf16.msra.mxu0 0
        %1663 = vmatprep.subr.bf16.mxu0 0
        %1664 = vmatpush1.bf16.msra.mxu0 0
        %1665 = vmatprep.subr.bf16.mxu0 0
        %1666 = vmatpush1.bf16.msra.mxu0 0
        %1667 = vmatprep.subr.bf16.mxu0 0
        %1668 = vmatpush1.bf16.msra.mxu0 0
        %1669 = vmatprep.subr.bf16.mxu0 0
        %1670 = vmatpush1.bf16.msra.mxu0 0
        %1671 = vmatprep.subr.bf16.mxu0 0
        %1672 = vmatpush1.bf16.msra.mxu0 0
        %1673 = vmatprep.mubr.bf16.mxu0 0
        %1674 = vmatmul.mubr.bf16.gmra.mrb[0].mxu0 %v1639
        %v1675 = vpop.f32.mrb[0].mxu0
        %v1676 = vadd.f32 %v1607, %v1675
        %v1677 = vpop.f32.mrb[0].mxu0
        %v1678 = vpop.f32.mrb[0].mxu0
        %v1679 = vadd.f32 %v1607, %v1678
        %v1680 = vpop.f32.mrb[0].mxu0
        %1681 = vdwg.mxu0
        %s1682 = scalar_lea.vmem %s8, 1
        %v1683 = vld [vmem:[%s1682] sm:$0x1]
        %s1684 = scalar_lea.vmem %s9, 1
        %v1685 = vld [vmem:[%s1684] sm:$0x1]
        %v1686 = vsel %vm762, %v1676, 0.0
        %v1687 = vsel %vm762, %v1679, 0.0
        %v1688 = vadd.f32 %v1686, %v1687
        %v1689 = vrot.slane %v1688, 4
        %v1690 = vadd.f32 %v1688, %v1689
        %v1691 = vrot.slane %v1690, 2
        %v1692 = vadd.f32 %v1690, %v1691
        %v1693 = vrot.slane %v1692, 1
        %v1694 = vadd.f32 %v1692, %v1693
        %v1695 = vmul.f32 %v1676, %v1676
        %v1696 = vmul.f32 %v1679, %v1679
        %v1697 = vsel %vm762, %v1695, 0.0
        %v1698 = vsel %vm762, %v1696, 0.0
        %v1699 = vadd.f32 %v1697, %v1698
        %v1700 = vrot.slane %v1699, 4
        %v1701 = vadd.f32 %v1699, %v1700
        %v1702 = vrot.slane %v1701, 2
        %v1703 = vadd.f32 %v1701, %v1702
        %v1704 = vrot.slane %v1703, 1
        %v1705 = vadd.f32 %v1703, %v1704
        %v1706 = vsel %vm875, %v1694, %v1705
        %v1708 = vsel %vm762, %v1706, 0
        %1710 = vmatprep.subr.mxu0 0.0
        %1711 = vmatpush1.msra.mxu0 %v575
        %1712 = vmatprep.subr.mxu0 0.0
        %1713 = vmatpush1.msra.mxu0 %v576
        %1714 = vmatprep.subr.mxu0 0.0
        %1715 = vmatpush1.msra.mxu0 0.0
        %1716 = vmatprep.subr.mxu0 0.0
        %1717 = vmatpush1.msra.mxu0 0.0
        %1718 = vmatprep.subr.mxu0 0.0
        %1719 = vmatpush1.msra.mxu0 0.0
        %1720 = vmatprep.subr.mxu0 0.0
        %1721 = vmatpush1.msra.mxu0 0.0
        %1722 = vmatprep.subr.mxu0 0.0
        %1723 = vmatpush1.msra.mxu0 0.0
        %1724 = vmatprep.subr.mxu0 0.0
        %1725 = vmatpush1.msra.mxu0 0.0
        %1726 = vmatprep.subr.mxu0 0.0
        %1727 = vmatpush1.msra.mxu0 0.0
        %1728 = vmatprep.subr.mxu0 0.0
        %1729 = vmatpush1.msra.mxu0 0.0
        %1730 = vmatprep.subr.mxu0 0.0
        %1731 = vmatpush1.msra.mxu0 0.0
        %1732 = vmatprep.subr.mxu0 0.0
        %1733 = vmatpush1.msra.mxu0 0.0
        %1734 = vmatprep.subr.mxu0 0.0
        %1735 = vmatpush1.msra.mxu0 0.0
        %1736 = vmatprep.subr.mxu0 0.0
        %1737 = vmatpush1.msra.mxu0 0.0
        %1738 = vmatprep.subr.mxu0 0.0
        %1739 = vmatpush1.msra.mxu0 0.0
        %1740 = vmatprep.subr.mxu0 0.0
        %1741 = vmatpush1.msra.mxu0 0.0
        %1742 = vmatprep.subr.mxu0 0.0
        %1743 = vmatpush1.msra.mxu0 0.0
        %1744 = vmatprep.subr.mxu0 0.0
        %1745 = vmatpush1.msra.mxu0 0.0
        %1746 = vmatprep.subr.mxu0 0.0
        %1747 = vmatpush1.msra.mxu0 0.0
        %1748 = vmatprep.subr.mxu0 0.0
        %1749 = vmatpush1.msra.mxu0 0.0
        %1750 = vmatprep.subr.mxu0 0.0
        %1751 = vmatpush1.msra.mxu0 0.0
        %1752 = vmatprep.subr.mxu0 0.0
        %1753 = vmatpush1.msra.mxu0 0.0
        %1754 = vmatprep.subr.mxu0 0.0
        %1755 = vmatpush1.msra.mxu0 0.0
        %1756 = vmatprep.subr.mxu0 0.0
        %1757 = vmatpush1.msra.mxu0 0.0
        %1758 = vmatprep.subr.mxu0 0.0
        %1759 = vmatpush1.msra.mxu0 0.0
        %1760 = vmatprep.subr.mxu0 0.0
        %1761 = vmatpush1.msra.mxu0 0.0
        %1762 = vmatprep.subr.mxu0 0.0
        %1763 = vmatpush1.msra.mxu0 0.0
        %1764 = vmatprep.subr.mxu0 0.0
        %1765 = vmatpush1.msra.mxu0 0.0
        %1766 = vmatprep.subr.mxu0 0.0
        %1767 = vmatpush1.msra.mxu0 0.0
        %1768 = vmatprep.subr.mxu0 0.0
        %1769 = vmatpush1.msra.mxu0 0.0
        %1770 = vmatprep.subr.mxu0 0.0
        %1771 = vmatpush1.msra.mxu0 0.0
        %1772 = vmatprep.subr.mxu0 0.0
        %1773 = vmatpush1.msra.mxu0 0.0
        %1774 = vmatprep.mubr.f32.mxu0 0.0
        %1775 = vmatmul.mubr.f32.gmra.mrb[0].mxu0 %v1708
        %v1776 = vpop.f32.mrb[0].mxu0
        %v1777 = vadd.f32 0.0, %v1776
        %v1778 = vpop.f32.mrb[0].mxu0
        %1779 = vdwg.mxu0
        %v1780 = vmul.f32 %v1777, 0.03125
        %v1782 = vsel %vm951, %v1780, 0
        %1784 = vmatprep.subr.mxu0 0.0
        %1785 = vmatpush1.msra.mxu0 %v577
        %1786 = vmatprep.subr.mxu0 0.0
        %1787 = vmatpush1.msra.mxu0 0.0
        %1788 = vmatprep.subr.mxu0 0.0
        %1789 = vmatpush1.msra.mxu0 0.0
        %1790 = vmatprep.subr.mxu0 0.0
        %1791 = vmatpush1.msra.mxu0 0.0
        %1792 = vmatprep.subr.mxu0 0.0
        %1793 = vmatpush1.msra.mxu0 0.0
        %1794 = vmatprep.subr.mxu0 0.0
        %1795 = vmatpush1.msra.mxu0 0.0
        %1796 = vmatprep.subr.mxu0 0.0
        %1797 = vmatpush1.msra.mxu0 0.0
        %1798 = vmatprep.subr.mxu0 0.0
        %1799 = vmatpush1.msra.mxu0 0.0
        %1800 = vmatprep.subr.mxu0 0.0
        %1801 = vmatpush1.msra.mxu0 0.0
        %1802 = vmatprep.subr.mxu0 0.0
        %1803 = vmatpush1.msra.mxu0 0.0
        %1804 = vmatprep.subr.mxu0 0.0
        %1805 = vmatpush1.msra.mxu0 0.0
        %1806 = vmatprep.subr.mxu0 0.0
        %1807 = vmatpush1.msra.mxu0 0.0
        %1808 = vmatprep.subr.mxu0 0.0
        %1809 = vmatpush1.msra.mxu0 0.0
        %1810 = vmatprep.subr.mxu0 0.0
        %1811 = vmatpush1.msra.mxu0 0.0
        %1812 = vmatprep.subr.mxu0 0.0
        %1813 = vmatpush1.msra.mxu0 0.0
        %1814 = vmatprep.subr.mxu0 0.0
        %1815 = vmatpush1.msra.mxu0 0.0
        %1816 = vmatprep.subr.mxu0 0.0
        %1817 = vmatpush1.msra.mxu0 0.0
        %1818 = vmatprep.subr.mxu0 0.0
        %1819 = vmatpush1.msra.mxu0 0.0
        %1820 = vmatprep.subr.mxu0 0.0
        %1821 = vmatpush1.msra.mxu0 0.0
        %1822 = vmatprep.subr.mxu0 0.0
        %1823 = vmatpush1.msra.mxu0 0.0
        %1824 = vmatprep.subr.mxu0 0.0
        %1825 = vmatpush1.msra.mxu0 0.0
        %1826 = vmatprep.subr.mxu0 0.0
        %1827 = vmatpush1.msra.mxu0 0.0
        %1828 = vmatprep.subr.mxu0 0.0
        %1829 = vmatpush1.msra.mxu0 0.0
        %1830 = vmatprep.subr.mxu0 0.0
        %1831 = vmatpush1.msra.mxu0 0.0
        %1832 = vmatprep.subr.mxu0 0.0
        %1833 = vmatpush1.msra.mxu0 0.0
        %1834 = vmatprep.subr.mxu0 0.0
        %1835 = vmatpush1.msra.mxu0 0.0
        %1836 = vmatprep.subr.mxu0 0.0
        %1837 = vmatpush1.msra.mxu0 0.0
        %1838 = vmatprep.subr.mxu0 0.0
        %1839 = vmatpush1.msra.mxu0 0.0
        %1840 = vmatprep.subr.mxu0 0.0
        %1841 = vmatpush1.msra.mxu0 0.0
        %1842 = vmatprep.subr.mxu0 0.0
        %1843 = vmatpush1.msra.mxu0 0.0
        %1844 = vmatprep.subr.mxu0 0.0
        %1845 = vmatpush1.msra.mxu0 0.0
        %1846 = vmatprep.subr.mxu0 0.0
        %1847 = vmatpush1.msra.mxu0 0.0
        %1848 = vmatprep.mubr.f32.mxu0 0.0
        %1849 = vmatmul.mubr.f32.gmra.mrb[0].mxu0 %v1782
        %v1850 = vpop.f32.mrb[0].mxu0
        %v1851 = vadd.f32 0.0, %v1850
        %v1852 = vpop.f32.mrb[0].mxu0
        %1853 = vdwg.mxu0
        %v1854 = vmul.f32 %v1851, %v1851
        %v1856 = vrot.slane %v1854, 7
        %v1858 = vsub.f32 %v1851, %v1856
        %v1859 = vmax.f32 %v1858, 0.0
        %v1860 = vadd.f32 %v1859, 1e-05
        %v1861 = vrsqrt.pop %v1860
        %v1863 = vlaneseq
        %v1864 = vshrl.u32 %v1863, 7
        %v1865 = vsub.s32 0, %v1864
        %v1866 = vrot.slane %v1683, %v1865
        %v1868 = vmul.f32 %v1861, %v1866
        %v1869 = vlaneseq
        %v1870 = vshrl.u32 %v1869, 7
        %v1871 = vsub.s32 1, %v1870
        %v1872 = vrot.slane %v1868, %v1871
        %v1873 = vmul.f32 %v1676, %v1872
        %v1874 = vmul.f32 %v1679, %v1872
        %v1876 = vrot.slane %v1868, 1
        %v1878 = vmul.f32 %v1851, %v1876
        %v1879 = vsub.f32 %v1685, %v1878
        %v1881 = vlaneseq
        %v1882 = vshrl.u32 %v1881, 7
        %v1883 = vsub.s32 0, %v1882
        %v1884 = vrot.slane %v1879, %v1883
        %v1886 = vadd.f32 %v1873, %v1884
        %v1887 = vadd.f32 %v1874, %v1884
        %v1888 = vmin.f32 %v1886, 20.0
        %v1889 = vmin.f32 %v1887, 20.0
        %v1890 = vmul.f32 %v1888, 1.442695
        %v1891 = vpow.pop %v1890
        %v1892 = vmul.f32 %v1889, 1.442695
        %v1893 = vpow.pop %v1892
        %v1894 = vadd.f32 %v1891, 2.0
        %v1895 = vadd.f32 %v1893, 2.0
        %v1896 = vmul.f32 %v1891, %v1894
        %v1897 = vmul.f32 %v1893, %v1895
        %v1898 = vmul.f32 %v1886, %v1896
        %v1899 = vmul.f32 %v1887, %v1897
        %v1900 = vadd.f32 %v1896, 2.0
        %v1901 = vadd.f32 %v1897, 2.0
        %v1902 = vrcp.pop %v1900
        %v1903 = vrcp.pop %v1901
        %v1904 = vmul.f32 %v1898, %v1902
        %v1905 = vmul.f32 %v1899, %v1903
        %v1906 = vlaneseq
        %v1907 = vshrl.u32 %v1906, 7
        %v1908 = vsub.s32 0, %v1907
        %v1909 = vrot.slane %v1515, %v1908
        %1911 = vrot.lane.b32.xlu0 %v1909, 112
        %v1912 = vpop.permute.xlu0 %1911
        %v1914 = vadd.f32 %v1904, %v1912
        %v1915 = vadd.f32 %v1905, %v1912
        %v1916 = vpack.c.bf16 %v1915, %v1914
        %v1918 = vunpack.c.l.b16 %v1916
        %v1919 = vunpack.c.h.b16 %v1916
        %v1920 = vpack.c.b16 %v1918, %v1918
        %v1921 = vpack.c.b16 %v1919, %v1919
        %v1922 = vrot.slane %v1920, 7
        %v1923 = vrot.slane %v1922, 4
        %v1924 = vrot.slane %v1921, 7
        %v1925 = vsel %vm665, %v1923, %v1924
        %v1926 = vrot.slane %v1924, 4
        %1930 = vst.msk [vmem:[#allocation3] sm:$0xe] %vm674, %v1922
        %1931 = vst.msk [vmem:[#allocation3 + $0x4] sm:$0xf] %vm676, %v1925
        %1932 = vst.msk [vmem:[#allocation3 + $0x8] sm:$0x1] %vm578, %v1926
        %s1933 = scalar_lea.vmem %s10, 40
        %v1934 = vld [vmem:[%s1933] sm:$0xf]
        %v1935 = vld [vmem:[%s1933 + $0x4] sm:$0xf]
        %v1936 = vld [vmem:[%s1933 + $0x8] sm:$0xf]
        %v1937 = vld [vmem:[%s1933 + $0xc] sm:$0xf]
        %v1938 = vld [vmem:[%s1933 + $0x10] sm:$0xf]
        %v1939 = vld [vmem:[%s1933 + $0x14] sm:$0xf]
        %v1940 = vld [vmem:[%s1933 + $0x18] sm:$0xf]
        %v1941 = vld [vmem:[%s1933 + $0x1c] sm:$0xf]
        %v1942 = vld [vmem:[%s1933 + $0x20] sm:$0xf]
        %v1943 = vld [vmem:[%s1933 + $0x24] sm:$0xf]
        %s1944 = scalar_lea.vmem %s11, 1
        %v1945 = vld [vmem:[%s1944] sm:$0x1]
        %v1946 = vld [vmem:[#allocation3] sm:$0xf]
        %v1947 = vld [vmem:[#allocation3 + $0x4] sm:$0xf]
        %v1948 = vld [vmem:[#allocation3 + $0x8] sm:$0x1]
        %v1949 = vld [vmem:[#allocation3] sm:$0xe]
        %v1950 = vld [vmem:[#allocation3 + $0x8] sm:$0x3]
        %v1951 = vld [vmem:[#allocation3] sm:$0xc]
        %v1954 = vunpack.c.l.b16 %v1946
        %v1955 = vunpack.c.l.b16 %v1947
        %v1956 = vpack.c.b16 %v1955, %v1954
        %v1958 = vunpack.c.l.b16 %v1948
        %v1959 = vpack.c.b16 %v1958, %v1958
        %v1961 = vshrl.u32 %v1956, 16
        %v1963 = vshll.u32 %v1956, 16
        %v1965 = vrot.slane %v1963, 1
        %v1966 = vor.u32 %v1961, %v1965
        %v1968 = vshll.u32 %v1959, 16
        %v1970 = vrot.slane %v1968, 1
        %v1971 = vsel %vm706, %v1966, %v1970
        %1972 = vrot.lane.b32.xlu0 %v1971, 16
        %v1973 = vpop.permute.xlu0 %1972
        %v1975 = vunpack.c.l.b16 %v1949
        %v1976 = vpack.c.b16 %v1955, %v1975
        %v1977 = vrot.slane %v1976, 1
        %v1978 = vrot.slane %v1959, 1
        %v1979 = vsel %vm724, %v1977, %v1978
        %1980 = vrot.lane.b32.xlu0 %v1979, 32
        %v1981 = vpop.permute.xlu0 %1980
        %v1983 = vunpack.c.l.b16 %v1950
        %v1984 = vpack.c.b16 %v1983, %v1983
        %v1986 = vshrl.u32 %v1976, 16
        %v1988 = vrot.slane %v1986, 1
        %v1989 = vshll.u32 %v1976, 16
        %v1991 = vrot.slane %v1989, 2
        %v1992 = vor.u32 %v1988, %v1991
        %v1994 = vshrl.u32 %v1984, 16
        %v1996 = vrot.slane %v1994, 1
        %v1997 = vshll.u32 %v1984, 16
        %v1999 = vrot.slane %v1997, 2
        %v2000 = vor.u32 %v1996, %v1999
        %v2001 = vsel %vm733, %v1992, %v2000
        %2002 = vrot.lane.b32.xlu0 %v2001, 48
        %v2003 = vpop.permute.xlu0 %2002
        %v2005 = vunpack.c.l.b16 %v1951
        %v2006 = vpack.c.b16 %v1955, %v2005
        %v2007 = vrot.slane %v2006, 2
        %v2008 = vrot.slane %v1984, 2
        %v2009 = vsel %vm756, %v2007, %v2008
        %2010 = vrot.lane.b32.xlu0 %v2009, 64
        %v2011 = vpop.permute.xlu0 %2010
        %v2013 = vsel %vm762, %v1956, %v1973
        %v2015 = vsel %vm613, %v2013, %v1981
        %v2017 = vsel %vm767, %v2015, %v2003
        %v2019 = vsel %vm770, %v2017, %v2011
        %v2021 = vlaneseq
        %v2022 = vshrl.u32 %v2021, 7
        %v2023 = vsub.s32 0, %v2022
        %v2024 = vrot.slane %v1945, %v2023
        %v2036 = vunpack.c.l.b16 %v1934
        %v2037 = vunpack.c.l.b16 %v1935
        %v2038 = vunpack.c.l.b16 %v1936
        %v2039 = vunpack.c.l.b16 %v1937
        %v2040 = vunpack.c.l.b16 %v1938
        %v2041 = vunpack.c.l.b16 %v1939
        %v2042 = vunpack.c.l.b16 %v1940
        %v2043 = vunpack.c.l.b16 %v1941
        %v2044 = vunpack.c.l.b16 %v1942
        %v2045 = vunpack.c.l.b16 %v1943
        %v2046 = vpack.c.b16 %v2037, %v2036
        %v2047 = vpack.c.b16 %v2039, %v2038
        %v2048 = vpack.c.b16 %v2041, %v2040
        %v2049 = vpack.c.b16 %v2043, %v2042
        %v2050 = vpack.c.b16 %v2045, %v2044
        %v2056 = vsel %vm809, %v2019, 0
        %2058 = vmatprep.subr.bf16.mxu0 0
        %2059 = vmatpush1.bf16.msra.mxu0 %v2046
        %2060 = vmatprep.subr.bf16.mxu0 0
        %2061 = vmatpush1.bf16.msra.mxu0 %v2047
        %2062 = vmatprep.subr.bf16.mxu0 0
        %2063 = vmatpush1.bf16.msra.mxu0 %v2048
        %2064 = vmatprep.subr.bf16.mxu0 0
        %2065 = vmatpush1.bf16.msra.mxu0 %v2049
        %2066 = vmatprep.subr.bf16.mxu0 0
        %2067 = vmatpush1.bf16.msra.mxu0 %v2050
        %2068 = vmatprep.subr.bf16.mxu0 0
        %2069 = vmatpush1.bf16.msra.mxu0 0
        %2070 = vmatprep.subr.bf16.mxu0 0
        %2071 = vmatpush1.bf16.msra.mxu0 0
        %2072 = vmatprep.subr.bf16.mxu0 0
        %2073 = vmatpush1.bf16.msra.mxu0 0
        %2074 = vmatprep.subr.bf16.mxu0 0
        %2075 = vmatpush1.bf16.msra.mxu0 0
        %2076 = vmatprep.subr.bf16.mxu0 0
        %2077 = vmatpush1.bf16.msra.mxu0 0
        %2078 = vmatprep.subr.bf16.mxu0 0
        %2079 = vmatpush1.bf16.msra.mxu0 0
        %2080 = vmatprep.subr.bf16.mxu0 0
        %2081 = vmatpush1.bf16.msra.mxu0 0
        %2082 = vmatprep.subr.bf16.mxu0 0
        %2083 = vmatpush1.bf16.msra.mxu0 0
        %2084 = vmatprep.subr.bf16.mxu0 0
        %2085 = vmatpush1.bf16.msra.mxu0 0
        %2086 = vmatprep.subr.bf16.mxu0 0
        %2087 = vmatpush1.bf16.msra.mxu0 0
        %2088 = vmatprep.subr.bf16.mxu0 0
        %2089 = vmatpush1.bf16.msra.mxu0 0
        %2090 = vmatprep.mubr.bf16.mxu0 0
        %2091 = vmatmul.mubr.bf16.gmra.mrb[0].mxu0 %v2056
        %v2092 = vpop.f32.mrb[0].mxu0
        %v2093 = vadd.f32 %v2024, %v2092
        %v2094 = vpop.f32.mrb[0].mxu0
        %v2095 = vpop.f32.mrb[0].mxu0
        %v2096 = vadd.f32 %v2024, %v2095
        %v2097 = vpop.f32.mrb[0].mxu0
        %2098 = vdwg.mxu0
        %s2099 = scalar_lea.vmem %s12, 1
        %v2100 = vld [vmem:[%s2099] sm:$0x1]
        %s2101 = scalar_lea.vmem %s13, 1
        %v2102 = vld [vmem:[%s2101] sm:$0x1]
        %v2103 = vsel %vm762, %v2093, 0.0
        %v2104 = vsel %vm762, %v2096, 0.0
        %v2105 = vadd.f32 %v2103, %v2104
        %v2106 = vrot.slane %v2105, 4
        %v2107 = vadd.f32 %v2105, %v2106
        %v2108 = vrot.slane %v2107, 2
        %v2109 = vadd.f32 %v2107, %v2108
        %v2110 = vrot.slane %v2109, 1
        %v2111 = vadd.f32 %v2109, %v2110
        %v2112 = vmul.f32 %v2093, %v2093
        %v2113 = vmul.f32 %v2096, %v2096
        %v2114 = vsel %vm762, %v2112, 0.0
        %v2115 = vsel %vm762, %v2113, 0.0
        %v2116 = vadd.f32 %v2114, %v2115
        %v2117 = vrot.slane %v2116, 4
        %v2118 = vadd.f32 %v2116, %v2117
        %v2119 = vrot.slane %v2118, 2
        %v2120 = vadd.f32 %v2118, %v2119
        %v2121 = vrot.slane %v2120, 1
        %v2122 = vadd.f32 %v2120, %v2121
        %v2123 = vsel %vm875, %v2111, %v2122
        %v2125 = vsel %vm762, %v2123, 0
        %2127 = vmatprep.subr.mxu0 0.0
        %2128 = vmatpush1.msra.mxu0 %v575
        %2129 = vmatprep.subr.mxu0 0.0
        %2130 = vmatpush1.msra.mxu0 %v576
        %2131 = vmatprep.subr.mxu0 0.0
        %2132 = vmatpush1.msra.mxu0 0.0
        %2133 = vmatprep.subr.mxu0 0.0
        %2134 = vmatpush1.msra.mxu0 0.0
        %2135 = vmatprep.subr.mxu0 0.0
        %2136 = vmatpush1.msra.mxu0 0.0
        %2137 = vmatprep.subr.mxu0 0.0
        %2138 = vmatpush1.msra.mxu0 0.0
        %2139 = vmatprep.subr.mxu0 0.0
        %2140 = vmatpush1.msra.mxu0 0.0
        %2141 = vmatprep.subr.mxu0 0.0
        %2142 = vmatpush1.msra.mxu0 0.0
        %2143 = vmatprep.subr.mxu0 0.0
        %2144 = vmatpush1.msra.mxu0 0.0
        %2145 = vmatprep.subr.mxu0 0.0
        %2146 = vmatpush1.msra.mxu0 0.0
        %2147 = vmatprep.subr.mxu0 0.0
        %2148 = vmatpush1.msra.mxu0 0.0
        %2149 = vmatprep.subr.mxu0 0.0
        %2150 = vmatpush1.msra.mxu0 0.0
        %2151 = vmatprep.subr.mxu0 0.0
        %2152 = vmatpush1.msra.mxu0 0.0
        %2153 = vmatprep.subr.mxu0 0.0
        %2154 = vmatpush1.msra.mxu0 0.0
        %2155 = vmatprep.subr.mxu0 0.0
        %2156 = vmatpush1.msra.mxu0 0.0
        %2157 = vmatprep.subr.mxu0 0.0
        %2158 = vmatpush1.msra.mxu0 0.0
        %2159 = vmatprep.subr.mxu0 0.0
        %2160 = vmatpush1.msra.mxu0 0.0
        %2161 = vmatprep.subr.mxu0 0.0
        %2162 = vmatpush1.msra.mxu0 0.0
        %2163 = vmatprep.subr.mxu0 0.0
        %2164 = vmatpush1.msra.mxu0 0.0
        %2165 = vmatprep.subr.mxu0 0.0
        %2166 = vmatpush1.msra.mxu0 0.0
        %2167 = vmatprep.subr.mxu0 0.0
        %2168 = vmatpush1.msra.mxu0 0.0
        %2169 = vmatprep.subr.mxu0 0.0
        %2170 = vmatpush1.msra.mxu0 0.0
        %2171 = vmatprep.subr.mxu0 0.0
        %2172 = vmatpush1.msra.mxu0 0.0
        %2173 = vmatprep.subr.mxu0 0.0
        %2174 = vmatpush1.msra.mxu0 0.0
        %2175 = vmatprep.subr.mxu0 0.0
        %2176 = vmatpush1.msra.mxu0 0.0
        %2177 = vmatprep.subr.mxu0 0.0
        %2178 = vmatpush1.msra.mxu0 0.0
        %2179 = vmatprep.subr.mxu0 0.0
        %2180 = vmatpush1.msra.mxu0 0.0
        %2181 = vmatprep.subr.mxu0 0.0
        %2182 = vmatpush1.msra.mxu0 0.0
        %2183 = vmatprep.subr.mxu0 0.0
        %2184 = vmatpush1.msra.mxu0 0.0
        %2185 = vmatprep.subr.mxu0 0.0
        %2186 = vmatpush1.msra.mxu0 0.0
        %2187 = vmatprep.subr.mxu0 0.0
        %2188 = vmatpush1.msra.mxu0 0.0
        %2189 = vmatprep.subr.mxu0 0.0
        %2190 = vmatpush1.msra.mxu0 0.0
        %2191 = vmatprep.mubr.f32.mxu0 0.0
        %2192 = vmatmul.mubr.f32.gmra.mrb[0].mxu0 %v2125
        %v2193 = vpop.f32.mrb[0].mxu0
        %v2194 = vadd.f32 0.0, %v2193
        %v2195 = vpop.f32.mrb[0].mxu0
        %2196 = vdwg.mxu0
        %v2197 = vmul.f32 %v2194, 0.03125
        %v2199 = vsel %vm951, %v2197, 0
        %2201 = vmatprep.subr.mxu0 0.0
        %2202 = vmatpush1.msra.mxu0 %v577
        %2203 = vmatprep.subr.mxu0 0.0
        %2204 = vmatpush1.msra.mxu0 0.0
        %2205 = vmatprep.subr.mxu0 0.0
        %2206 = vmatpush1.msra.mxu0 0.0
        %2207 = vmatprep.subr.mxu0 0.0
        %2208 = vmatpush1.msra.mxu0 0.0
        %2209 = vmatprep.subr.mxu0 0.0
        %2210 = vmatpush1.msra.mxu0 0.0
        %2211 = vmatprep.subr.mxu0 0.0
        %2212 = vmatpush1.msra.mxu0 0.0
        %2213 = vmatprep.subr.mxu0 0.0
        %2214 = vmatpush1.msra.mxu0 0.0
        %2215 = vmatprep.subr.mxu0 0.0
        %2216 = vmatpush1.msra.mxu0 0.0
        %2217 = vmatprep.subr.mxu0 0.0
        %2218 = vmatpush1.msra.mxu0 0.0
        %2219 = vmatprep.subr.mxu0 0.0
        %2220 = vmatpush1.msra.mxu0 0.0
        %2221 = vmatprep.subr.mxu0 0.0
        %2222 = vmatpush1.msra.mxu0 0.0
        %2223 = vmatprep.subr.mxu0 0.0
        %2224 = vmatpush1.msra.mxu0 0.0
        %2225 = vmatprep.subr.mxu0 0.0
        %2226 = vmatpush1.msra.mxu0 0.0
        %2227 = vmatprep.subr.mxu0 0.0
        %2228 = vmatpush1.msra.mxu0 0.0
        %2229 = vmatprep.subr.mxu0 0.0
        %2230 = vmatpush1.msra.mxu0 0.0
        %2231 = vmatprep.subr.mxu0 0.0
        %2232 = vmatpush1.msra.mxu0 0.0
        %2233 = vmatprep.subr.mxu0 0.0
        %2234 = vmatpush1.msra.mxu0 0.0
        %2235 = vmatprep.subr.mxu0 0.0
        %2236 = vmatpush1.msra.mxu0 0.0
        %2237 = vmatprep.subr.mxu0 0.0
        %2238 = vmatpush1.msra.mxu0 0.0
        %2239 = vmatprep.subr.mxu0 0.0
        %2240 = vmatpush1.msra.mxu0 0.0
        %2241 = vmatprep.subr.mxu0 0.0
        %2242 = vmatpush1.msra.mxu0 0.0
        %2243 = vmatprep.subr.mxu0 0.0
        %2244 = vmatpush1.msra.mxu0 0.0
        %2245 = vmatprep.subr.mxu0 0.0
        %2246 = vmatpush1.msra.mxu0 0.0
        %2247 = vmatprep.subr.mxu0 0.0
        %2248 = vmatpush1.msra.mxu0 0.0
        %2249 = vmatprep.subr.mxu0 0.0
        %2250 = vmatpush1.msra.mxu0 0.0
        %2251 = vmatprep.subr.mxu0 0.0
        %2252 = vmatpush1.msra.mxu0 0.0
        %2253 = vmatprep.subr.mxu0 0.0
        %2254 = vmatpush1.msra.mxu0 0.0
        %2255 = vmatprep.subr.mxu0 0.0
        %2256 = vmatpush1.msra.mxu0 0.0
        %2257 = vmatprep.subr.mxu0 0.0
        %2258 = vmatpush1.msra.mxu0 0.0
        %2259 = vmatprep.subr.mxu0 0.0
        %2260 = vmatpush1.msra.mxu0 0.0
        %2261 = vmatprep.subr.mxu0 0.0
        %2262 = vmatpush1.msra.mxu0 0.0
        %2263 = vmatprep.subr.mxu0 0.0
        %2264 = vmatpush1.msra.mxu0 0.0
        %2265 = vmatprep.mubr.f32.mxu0 0.0
        %2266 = vmatmul.mubr.f32.gmra.mrb[0].mxu0 %v2199
        %v2267 = vpop.f32.mrb[0].mxu0
        %v2268 = vadd.f32 0.0, %v2267
        %v2269 = vpop.f32.mrb[0].mxu0
        %2270 = vdwg.mxu0
        %v2271 = vmul.f32 %v2268, %v2268
        %v2273 = vrot.slane %v2271, 7
        %v2275 = vsub.f32 %v2268, %v2273
        %v2276 = vmax.f32 %v2275, 0.0
        %v2277 = vadd.f32 %v2276, 1e-05
        %v2278 = vrsqrt.pop %v2277
        %v2280 = vlaneseq
        %v2281 = vshrl.u32 %v2280, 7
        %v2282 = vsub.s32 0, %v2281
        %v2283 = vrot.slane %v2100, %v2282
        %v2285 = vmul.f32 %v2278, %v2283
        %v2286 = vlaneseq
        %v2287 = vshrl.u32 %v2286, 7
        %v2288 = vsub.s32 1, %v2287
        %v2289 = vrot.slane %v2285, %v2288
        %v2290 = vmul.f32 %v2093, %v2289
        %v2291 = vmul.f32 %v2096, %v2289
        %v2293 = vrot.slane %v2285, 1
        %v2295 = vmul.f32 %v2268, %v2293
        %v2296 = vsub.f32 %v2102, %v2295
        %v2298 = vlaneseq
        %v2299 = vshrl.u32 %v2298, 7
        %v2300 = vsub.s32 0, %v2299
        %v2301 = vrot.slane %v2296, %v2300
        %v2303 = vadd.f32 %v2290, %v2301
        %v2304 = vadd.f32 %v2291, %v2301
        %v2305 = vmin.f32 %v2303, 20.0
        %v2306 = vmin.f32 %v2304, 20.0
        %v2307 = vmul.f32 %v2305, 1.442695
        %v2308 = vpow.pop %v2307
        %v2309 = vmul.f32 %v2306, 1.442695
        %v2310 = vpow.pop %v2309
        %v2311 = vadd.f32 %v2308, 2.0
        %v2312 = vadd.f32 %v2310, 2.0
        %v2313 = vmul.f32 %v2308, %v2311
        %v2314 = vmul.f32 %v2310, %v2312
        %v2315 = vmul.f32 %v2303, %v2313
        %v2316 = vmul.f32 %v2304, %v2314
        %v2317 = vadd.f32 %v2313, 2.0
        %v2318 = vadd.f32 %v2314, 2.0
        %v2319 = vrcp.pop %v2317
        %v2320 = vrcp.pop %v2318
        %v2321 = vmul.f32 %v2315, %v2319
        %v2322 = vmul.f32 %v2316, %v2320
        %v2323 = vadd.f32 %v2321, %v1486
        %v2324 = vadd.f32 %v2322, %v1487
        %2325 = vst.msk [vmem:[%s556] sm:$0xff] %vm762, %v2323
        %2326 = vst.msk [vmem:[%s556 + $0x8] sm:$0xff] %vm762, %v2324
        %2327 = vst.msk [vmem:[#allocation4 + $0x2] sm:$0xff] %vm762, %v2323
        %2328 = vst.msk [vmem:[#allocation4 + $0xa] sm:$0xff] %vm762, %v2324
        %s2329 = scalar_lea.vmem [#allocation4], 1
        %v2330 = vld [vmem:[%s2329] ss:$2 sm:$0xff]
        %s2331 = scalar_lea.vmem [#allocation4], 2
        %v2332 = vld [vmem:[%s2331] ss:$2 sm:$0xff]
        %s2333 = scalar_lea.vmem [#allocation4], 3
        %v2334 = vld [vmem:[%s2333] ss:$2 sm:$0xff]
        %2336 = vrot.lane.b32.xlu0 %v2332, 16
        %v2337 = vpop.permute.xlu0 %2336
        %2340 = vrot.lane.b32.xlu0 %v2334, 32
        %v2341 = vpop.permute.xlu0 %2340
        %v2343 = vsel %vm762, %v2330, %v2337
        %v2344 = vsel %vm613, %v2343, %v2341
        %v2345 = vpack.c.bf16 %v2344, %v2344
        %v2346 = vld [vmem:[%s14] sm:$0xf]
        %v2347 = vld [vmem:[%s14 + $0x4] sm:$0xf]
        %v2348 = vld [vmem:[%s14 + $0x8] sm:$0xf]
        %v2349 = vld [vmem:[%s14 + $0xc] sm:$0xf]
        %v2350 = vld [vmem:[%s14 + $0x10] sm:$0xf]
        %v2351 = vld [vmem:[%s14 + $0x14] sm:$0xf]
        %v2352 = vld [vmem:[%s15] sm:$0x1]
        %v2354 = vlaneseq
        %v2355 = vshrl.u32 %v2354, 7
        %v2356 = vsub.s32 0, %v2355
        %v2357 = vrot.slane %v2352, %v2356
        %v2365 = vunpack.c.l.b16 %v2346
        %v2366 = vunpack.c.l.b16 %v2347
        %v2367 = vunpack.c.l.b16 %v2348
        %v2368 = vunpack.c.l.b16 %v2349
        %v2369 = vunpack.c.l.b16 %v2350
        %v2370 = vunpack.c.l.b16 %v2351
        %v2371 = vpack.c.b16 %v2366, %v2365
        %v2372 = vpack.c.b16 %v2368, %v2367
        %v2373 = vpack.c.b16 %v2370, %v2369
        %v2378 = vsel %vm767, %v2345, 0
        %2380 = vmatprep.subr.bf16.mxu0 0
        %2381 = vmatpush1.bf16.msra.mxu0 %v2371
        %2382 = vmatprep.subr.bf16.mxu0 0
        %2383 = vmatpush1.bf16.msra.mxu0 %v2372
        %2384 = vmatprep.subr.bf16.mxu0 0
        %2385 = vmatpush1.bf16.msra.mxu0 %v2373
        %2386 = vmatprep.subr.bf16.mxu0 0
        %2387 = vmatpush1.bf16.msra.mxu0 0
        %2388 = vmatprep.subr.bf16.mxu0 0
        %2389 = vmatpush1.bf16.msra.mxu0 0
        %2390 = vmatprep.subr.bf16.mxu0 0
        %2391 = vmatpush1.bf16.msra.mxu0 0
        %2392 = vmatprep.subr.bf16.mxu0 0
        %2393 = vmatpush1.bf16.msra.mxu0 0
        %2394 = vmatprep.subr.bf16.mxu0 0
        %2395 = vmatpush1.bf16.msra.mxu0 0
        %2396 = vmatprep.subr.bf16.mxu0 0
        %2397 = vmatpush1.bf16.msra.mxu0 0
        %2398 = vmatprep.subr.bf16.mxu0 0
        %2399 = vmatpush1.bf16.msra.mxu0 0
        %2400 = vmatprep.subr.bf16.mxu0 0
        %2401 = vmatpush1.bf16.msra.mxu0 0
        %2402 = vmatprep.subr.bf16.mxu0 0
        %2403 = vmatpush1.bf16.msra.mxu0 0
        %2404 = vmatprep.subr.bf16.mxu0 0
        %2405 = vmatpush1.bf16.msra.mxu0 0
        %2406 = vmatprep.subr.bf16.mxu0 0
        %2407 = vmatpush1.bf16.msra.mxu0 0
        %2408 = vmatprep.subr.bf16.mxu0 0
        %2409 = vmatpush1.bf16.msra.mxu0 0
        %2410 = vmatprep.subr.bf16.mxu0 0
        %2411 = vmatpush1.bf16.msra.mxu0 0
        %2412 = vmatprep.mubr.bf16.mxu0 0
        %2413 = vmatmul.mubr.bf16.gmra.mrb[0].mxu0 %v2378
        %v2414 = vpop.f32.mrb[0].mxu0
        %v2415 = vadd.f32 %v2357, %v2414
        %v2416 = vpop.f32.mrb[0].mxu0
        %v2417 = vpop.f32.mrb[0].mxu0
        %v2418 = vpop.f32.mrb[0].mxu0
        %2419 = vdwg.mxu0
        %2420 = vst.msk [vmem:[%s563] sm:$0xff] %vm762, %v2415
        %s2421 = sand.u32 %s389, 1
        %s2422 = scalar_lea.sflag [#allocation6], %s2421
        %s2423 = sand.u32 %s389, 1
        %s2424 = smul.addr %s2423, 16
        %s2425 = scalar_lea.vmem [#allocation5], %s2424
        %s2426 = sand.u32 %s415, 1
        %s2427 = scalar_lea.sflag [#allocation8], %s2426
        %s2428 = sand.u32 %s415, 1
        %s2429 = smul.addr %s2428, 8
        %s2430 = scalar_lea.vmem [#allocation7], %s2429
        // Predicated region
        $region85: #{tpu_custom_call.1} parent=83 // pred_check
          %p2431 = pneg %p399
        $region86: #{tpu_custom_call.1} parent=83 // pred_check_branch
          %2433 = sbr.rel (%p2431) target = $region88
        $region87: #{tpu_custom_call.1} parent=83 // pred_region
          %s2435 = ssub.s32 256, 256
          %2436 = vsyncadd %s2422, %s2435
          %s2437 = smul.addr %s35, 2
          %s2438 = smul.addr %s2437, 128
          %s2439 = scalar_lea.hbm %s16, %s2438
          %s2440 = sshll.u32 %s2425, 4
          %s2441 = int_to_ptr.vmem [resolvable:$true] %s2440
          %2446 = dma.vmem_to_hbm [thread:$0]  %s2441, 256, %s2439, %s2422, 128, 128, 8
        $region88: #{tpu_custom_call.1} parent=83 // pred_fallthru
          _
        // Predicated region
        $region89: #{tpu_custom_call.1} parent=83 // pred_check
          %p2447 = pneg %p425
        $region90: #{tpu_custom_call.1} parent=83 // pred_check_branch
          %2449 = sbr.rel (%p2447) target = $region92
        $region91: #{tpu_custom_call.1} parent=83 // pred_region
          %s2451 = ssub.s32 128, 128
          %2452 = vsyncadd %s2427, %s2451
          %s2453 = smul.addr %s35, 128
          %s2454 = scalar_lea.hbm %s17, %s2453
          %s2456 = sshll.u32 %s2430, 4
          %s2457 = int_to_ptr.vmem [resolvable:$true] %s2456
          %2459 = dma.vmem_to_hbm [thread:$0]  %s2457, 128, %s2454, %s2427
        $region92: #{tpu_custom_call.1} parent=83 // pred_fallthru
          _
      $region84: #{tpu_custom_call.1} parent=5 // pred_fallthru
        _
      %p2460 = scmp.le.s32.totalorder 2, %s30
      // Predicated region
      $region93: #{tpu_custom_call.1} parent=5 // pred_check
        %p2461 = pneg %p2460
      $region94: #{tpu_custom_call.1} parent=5 // pred_check_branch
        %2463 = sbr.rel (%p2461) target = $region96
      $region95: #{tpu_custom_call.1} parent=5 // pred_region
        %s2464 = ssub.s32 %s30, 2
        // Predicated region
        $region97: #{tpu_custom_call.1} parent=95 // pred_check
          %p2465 = pneg %p405
        $region98: #{tpu_custom_call.1} parent=95 // pred_check_branch
          %2467 = sbr.rel (%p2465) target = $region100
        $region99: #{tpu_custom_call.1} parent=95 // pred_region
          %s2468 = sand.u32 %s390, 1
          %s2469 = scalar_lea.sflag [#allocation6], %s2468
          %s2470 = sand.u32 %s390, 1
          %s2471 = smul.addr %s2470, 16
          %s2472 = scalar_lea.vmem [#allocation5], %s2471
          %2473 = dma.done %s2469, 256
        $region100: #{tpu_custom_call.1} parent=95 // pred_fallthru
          _
        // Predicated region
        $region101: #{tpu_custom_call.1} parent=95 // pred_check
          %p2474 = pneg %p431
        $region102: #{tpu_custom_call.1} parent=95 // pred_check_branch
          %2476 = sbr.rel (%p2474) target = $region104
        $region103: #{tpu_custom_call.1} parent=95 // pred_region
          %s2477 = sand.u32 %s416, 1
          %s2478 = scalar_lea.sflag [#allocation8], %s2477
          %s2479 = sand.u32 %s416, 1
          %s2480 = smul.addr %s2479, 8
          %s2481 = scalar_lea.vmem [#allocation7], %s2480
          %2482 = dma.done %s2478, 128
        $region104: #{tpu_custom_call.1} parent=95 // pred_fallthru
          _
      $region96: #{tpu_custom_call.1} parent=5 // pred_fallthru
        _
    $region6: #{tpu_custom_call.1} parent=1 // loop_footer
      %s34 = sadd.s32 1, %s30
    $region7: #{tpu_custom_call.1} parent=1 // loop_footer_branch
      %29 = sbr.rel target = $region3
    $region8: #{tpu_custom_call.1} parent=1 // loop_exit
      _
    %2483 = vsyncpa [#allocation6], 1
    %s2484 = scalar_lea.sflag [#allocation6], 1
    %2485 = vsyncpa %s2484, 1
    %2486 = vsyncpa [#allocation8], 1
    %s2487 = scalar_lea.sflag [#allocation8], 1
    %2488 = vsyncpa %s2487, 1

</llo_original>
